<compile_context>
chip_gen: v7x
topology: tpu7x:2x2x1
jax: 0.10.0
libtpu: 0.0.40
codegen_flags: <defaults>
</compile_context>

<pallas_src>
import functools
from dataclasses import dataclass
from typing import List, Optional

import jax
import jax.numpy as jnp
from jax import lax
from jax.experimental import pallas as pl
from jax.experimental.pallas import tpu as pltpu


# ----------------------------- config / dataclasses -----------------------------

@dataclass
class ObjectConfigSet:
    n_labels: int
    n_keypoints: int
    train_keypoints: bool
    train_yaw: bool
    train_pitch: bool
    train_roll: bool
    train_depth: bool


@dataclass
class Prediction:
    heatmap: jnp.ndarray
    keypoint_heatmap: Optional[jnp.ndarray]
    keypoint_affinity: Optional[jnp.ndarray]
    size: jnp.ndarray
    offset: jnp.ndarray
    roll_bin: Optional[jnp.ndarray]
    roll_offset: Optional[jnp.ndarray]
    pitch_bin: Optional[jnp.ndarray]
    pitch_offset: Optional[jnp.ndarray]
    yaw_bin: Optional[jnp.ndarray]
    yaw_offset: Optional[jnp.ndarray]
    depth: Optional[jnp.ndarray]


def get_head_channels(object_config: ObjectConfigSet) -> List[int]:
    n_heatmaps = object_config.n_labels
    n_keypoints = object_config.n_keypoints
    n_keypoint_affinity = 2 * n_keypoints
    head_channels = [n_heatmaps]
    if object_config.train_keypoints:
        head_channels.extend((n_keypoints, n_keypoint_affinity))
    n_size = 2
    n_offset = 2
    head_channels.extend((n_size, n_offset))
    n_angle_bin = 4
    n_angle_offset = 4
    n_depth = 1
    if object_config.train_yaw:
        head_channels.extend((n_angle_bin, n_angle_offset))
    if object_config.train_pitch:
        head_channels.extend((n_angle_bin, n_angle_offset))
    if object_config.train_roll:
        head_channels.extend((n_angle_bin, n_angle_offset))
    if object_config.train_depth:
        head_channels.append(n_depth)
    return head_channels


def _round_up(x: int, m: int) -> int:
    return ((x + m - 1) // m) * m


# ----------------------------- fused Pallas kernel -----------------------------

def _centernet_fused_kernel(x_ref, wbb_ref, bbb_ref, wh3_ref, bh3_ref,
                            w1_ref, b1_ref, o_ref, bb_im_ref, h_im_ref, *, H):
    """One (batch, row-tile) step: backbone conv (with halo recompute) + all heads.

    x_ref:     (H+4, W+10, Cin)   whole padded bf16 image of this batch element (resident)
    wbb_ref:   (9*Cin, C)         backbone 3x3 weight with taps folded into K, bf16
    bbb_ref:   (1, C)             backbone bias, f32
    wh3_ref:   (9*C, Cmid_pad)    all head 3x3 weights (taps folded into K, heads on N), bf16
    bh3_ref:   (1, Cmid_pad)      concatenated head 3x3 biases (zero in padding), f32
    w1_ref:    (Cmid_pad, Cout)   block-diagonal 1x1 weights, bf16
    b1_ref:    (1, Cout)          concatenated 1x1 biases (zero in padding), f32
    o_ref:     (TH, W, Cout)      lane-dense output row tile, f32
    bb_im_ref: VMEM ((TH+2)*Wf, 9*Cin)  backbone im2col LHS, bf16
    h_im_ref:  VMEM (TH*W, 9*C)         head im2col LHS, bf16
    """
    TH, W, Cout = o_ref.shape
    WI = x_ref.shape[1]
    Cin = x_ref.shape[2]
    Wf = WI - 2                      # feature-tile width; local col j <-> global col j-1
    C = wbb_ref.shape[1]

    r = pl.program_id(1)
    row0 = pl.multiple_of(r * TH, TH)

    # Input row band for this tile (2-row / 2-col halo already present in the padded image).
    xin = x_ref[pl.ds(row0, TH + 4)]                       # (TH+4, WI, Cin) bf16

    # ---- backbone: Conv2d(Cin -> C, 3x3, pad=1) + LeakyReLU as ONE matmul (K = 9*Cin) ----
    # TODO(synk): the reference backbone is an arbitrary external nn.Module; modeled here as
    # a single Conv2d(3, C, 3, pad=1) + LeakyReLU stand-in.
    for ky in range(3):
        for kx in range(3):
            t = ky * 3 + kx
            patch = xin[ky:ky + TH + 2, kx:kx + Wf, :].reshape((TH + 2) * Wf, Cin)
            bb_im_ref[:, t * Cin:(t + 1) * Cin] = patch
    fb = jnp.dot(bb_im_ref[...], wbb_ref[...], preferred_element_type=jnp.float32)
    fb = fb + bbb_ref[...]
    fb = jnp.where(fb > 0, fb, 0.01 * fb)                  # LeakyReLU (default slope 0.01)

    # Zero the feature halo (positions outside the real image) with an iota mask so the head
    # convs see exactly zero-padded features (no scratch zeroing / misaligned halo stores).
    feat3 = fb.reshape(TH + 2, Wf, C)
    frow = lax.broadcasted_iota(jnp.int32, (TH + 2, Wf, 1), 0) + (row0 - 1)
    fcol = lax.broadcasted_iota(jnp.int32, (TH + 2, Wf, 1), 1)
    valid = (frow >= 0) & (frow < H) & (fcol >= 1) & (fcol <= W)
    feat3 = jnp.where(valid, feat3, 0.0).astype(h_im_ref.dtype)   # bf16 feature tile

    # ---- ALL head 3x3 convs fused as ONE matmul (K = 9*C) + LeakyReLU ----
    # TODO(synk): for real channel counts, pad C to 128 so these tap writes are lane-dense.
    for ky in range(3):
        for kx in range(3):
            t = ky * 3 + kx
            fpatch = feat3[ky:ky + TH, kx:kx + W, :].reshape(TH * W, C)
            h_im_ref[:, t * C:(t + 1) * C] = fpatch
    hmid = jnp.dot(h_im_ref[...], wh3_ref[...], preferred_element_type=jnp.float32)
    hmid = hmid + bh3_ref[...]
    hmid = jnp.where(hmid > 0, hmid, 0.01 * hmid)

    # ---- block-diagonal 1x1 projection onto the lane-dense output slab ----
    out = jnp.dot(hmid.astype(w1_ref.dtype), w1_ref[...],
                  preferred_element_type=jnp.float32) + b1_ref[...]
    o_ref[...] = out.reshape(TH, W, Cout).astype(o_ref.dtype)


def centernet_fused_call(img_nchw, fused):
    """Run the fused backbone+heads kernel; returns the (N, H, W, Cout_pad) f32 slab."""
    x = jnp.transpose(img_nchw, (0, 2, 3, 1)).astype(jnp.bfloat16)   # NCHW -> NHWC, bf16 DMA
    N, H, W, Cin = x.shape
    # TODO(synk): generalize to W not a multiple of 8 (pad W and mask the extra columns).
    assert W % 8 == 0, "kernel assumes W is a multiple of 8"
    TILE_H = 8 if H % 8 == 0 else H
    assert H % TILE_H == 0
    R = H // TILE_H

    Wf = W + 8                       # feature tile width (8-aligned; covers cols [-1, W+7))
    WI = Wf + 2                      # padded image width (covers input cols [-2, W+8))
    HI = H + 4
    x_pad = jnp.pad(x, ((0, 0), (2, 2), (2, 8), (0, 0)))             # single small bf16 pad

    wbb = fused["backbone_w2d"]      # (9*Cin, C)
    bbb = fused["backbone_b"]        # (C,)
    wh3 = fused["head_w3_2d"]        # (9*C, Cmid_pad)
    bh3 = fused["head_b3"]           # (Cmid_pad,)
    w1 = fused["head_w1"]            # (Cmid_pad, Cout_pad)
    b1 = fused["head_b1"]            # (Cout_pad,)
    C = wbb.shape[1]
    Cmid = wh3.shape[1]
    Cout = w1.shape[1]

    return pl.pallas_call(
        functools.partial(_centernet_fused_kernel, H=H),
        out_shape=jax.ShapeDtypeStruct((N, H, W, Cout), jnp.float32),
        grid=(N, R),
        in_specs=[
            # whole padded image per batch element; constant over the row axis -> no re-DMA
            pl.BlockSpec((None, HI, WI, Cin), lambda n, r: (n, 0, 0, 0)),
            pl.BlockSpec((9 * Cin, C), lambda n, r: (0, 0)),
            pl.BlockSpec((1, C), lambda n, r: (0, 0)),
            pl.BlockSpec((9 * C, Cmid), lambda n, r: (0, 0)),
            pl.BlockSpec((1, Cmid), lambda n, r: (0, 0)),
            pl.BlockSpec((Cmid, Cout), lambda n, r: (0, 0)),
            pl.BlockSpec((1, Cout), lambda n, r: (0, 0)),
        ],
        out_specs=pl.BlockSpec((None, TILE_H, W, Cout), lambda n, r: (n, r, 0, 0)),
        scratch_shapes=[
            pltpu.VMEM(((TILE_H + 2) * Wf, 9 * Cin), jnp.bfloat16),   # backbone im2col LHS
            pltpu.VMEM((TILE_H * W, 9 * C), jnp.bfloat16),            # head im2col LHS
        ],
        compiler_params=pltpu.CompilerParams(
            dimension_semantics=("parallel", "parallel"),
            vmem_limit_bytes=48 * 1024 * 1024,
        ),
    )(x_pad, wbb, bbb.reshape(1, C), wh3, bh3.reshape(1, Cmid), w1, b1.reshape(1, Cout))


# ----------------------------- parameters -----------------------------

def init_params(key, img_channels, backbone_channels, head_out_channels):
    """Deterministic synthetic parameters; shapes mirror the nn.Module __init__ (per-head)."""
    C = backbone_channels
    k_bb_w, k_bb_b, k_heads = jax.random.split(key, 3)
    params = {
        "backbone_w": 0.1 * jax.random.normal(k_bb_w, (3, 3, img_channels, C), jnp.float32),
        "backbone_b": 0.1 * jax.random.normal(k_bb_b, (C,), jnp.float32),
        "heads": [],
    }
    head_keys = jax.random.split(k_heads, len(head_out_channels))
    for cout, hk in zip(head_out_channels, head_keys):
        k1, k2, k3, k4 = jax.random.split(hk, 4)
        params["heads"].append((
            0.1 * jax.random.normal(k1, (3, 3, C, 2 * C), jnp.float32),   # conv3x3 weight (HWIO)
            0.1 * jax.random.normal(k2, (2 * C,), jnp.float32),           # conv3x3 bias
            0.1 * jax.random.normal(k3, (2 * C, cout), jnp.float32),      # conv1x1 weight (IO)
            0.1 * jax.random.normal(k4, (cout,), jnp.float32),            # conv1x1 bias
        ))
    return params


def fuse_params(params, head_channels, matmul_dtype=jnp.bfloat16):
    """Repack per-head params into fused, lane-padded, tap-folded tensors (one-time, off hot path)."""
    wbb = params["backbone_w"]                       # (3, 3, Cin, C)
    Cin, C = wbb.shape[2], wbb.shape[3]
    cmid = 2 * C
    n_heads = len(params["heads"])
    cmid_pad = _round_up(n_heads * cmid, 128)
    cout_total = sum(head_channels)
    cout_pad = _round_up(cout_total, 128)

    wh3 = jnp.zeros((3, 3, C, cmid_pad), jnp.float32)
    bh3 = jnp.zeros((cmid_pad,), jnp.float32)
    w1 = jnp.zeros((cmid_pad, cout_pad), jnp.float32)   # block-diagonal
    b1 = jnp.zeros((cout_pad,), jnp.float32)

    off_out = 0
    for h, (w3_h, b3_h, w1_h, b1_h) in enumerate(params["heads"]):
        cm = h * cmid
        co = head_channels[h]
        wh3 = wh3.at[:, :, :, cm:cm + cmid].set(w3_h)
        bh3 = bh3.at[cm:cm + cmid].set(b3_h)
        w1 = w1.at[cm:cm + cmid, off_out:off_out + co].set(w1_h)
        b1 = b1.at[off_out:off_out + co].set(b1_h)
        off_out += co

    return {
        # taps folded into the contraction dim: row index = (ky*3 + kx) * Cin_or_C + channel
        "backbone_w2d": wbb.reshape(9 * Cin, C).astype(matmul_dtype),
        "backbone_b": params["backbone_b"].astype(jnp.float32),
        "head_w3_2d": wh3.reshape(9 * C, cmid_pad).astype(matmul_dtype),
        "head_b3": bh3,
        "head_w1": w1.astype(matmul_dtype),
        "head_b1": b1,
        "head_channels": tuple(int(c) for c in head_channels),
    }


# ----------------------------- pure-JAX reference (same casts as the kernel) -----------------------------

def centernet_reference_slab(img_nchw, fused):
    x = jnp.transpose(img_nchw, (0, 2, 3, 1)).astype(jnp.bfloat16)
    N, H, W, Cin = x.shape
    xp = jnp.pad(x, ((0, 0), (1, 1), (1, 1), (0, 0)))
    taps = [xp[:, ky:ky + H, kx:kx + W, :] for ky in range(3) for kx in range(3)]
    lhs = jnp.concatenate(taps, axis=-1).reshape(N * H * W, 9 * Cin)
    fb = jnp.dot(lhs, fused["backbone_w2d"], preferred_element_type=jnp.float32)
    fb = fb + fused["backbone_b"][None, :]
    fb = jnp.where(fb > 0, fb, 0.01 * fb)
    C = fused["backbone_w2d"].shape[1]
    feat = fb.reshape(N, H, W, C).astype(jnp.bfloat16)
    fp = jnp.pad(feat, ((0, 0), (1, 1), (1, 1), (0, 0)))
    taps = [fp[:, ky:ky + H, kx:kx + W, :] for ky in range(3) for kx in range(3)]
    lhs = jnp.concatenate(taps, axis=-1).reshape(N * H * W, 9 * C)
    hmid = jnp.dot(lhs, fused["head_w3_2d"], preferred_element_type=jnp.float32)
    hmid = hmid + fused["head_b3"][None, :]
    hmid = jnp.where(hmid > 0, hmid, 0.01 * hmid)
    out = jnp.dot(hmid.astype(jnp.bfloat16), fused["head_w1"],
                  preferred_element_type=jnp.float32) + fused["head_b1"][None, :]
    return out.reshape(N, H, W, -1)


# ----------------------------- Centernet forward -----------------------------

def centernet_forward(img_nchw, fused, cfg: ObjectConfigSet) -> Prediction:
    slab = centernet_fused_call(img_nchw, fused)            # (N, H, W, Cout_pad) f32

    outs = []
    off = 0
    for co in fused["head_channels"]:
        outs.append(slab[..., off:off + co])
        off += co

    def to_nchw(t):
        return jnp.transpose(t, (0, 3, 1, 2))

    def reshape_keypoint_affinity(t_nhwc):
        t = to_nchw(t_nhwc)                                 # (N, 2K, H, W)
        return t.reshape(t.shape[0], t.shape[1] // 2, 2, t.shape[2], t.shape[3])

    # NOTE: pop order intentionally mirrors the original PyTorch forward (roll is popped
    # before pitch before yaw even though heads were built yaw, pitch, roll).
    heatmap = to_nchw(outs.pop(0))
    keypoint_heatmap = to_nchw(outs.pop(0)) if cfg.train_keypoints else None
    keypoint_affinity = reshape_keypoint_affinity(outs.pop(0)) if cfg.train_keypoints else None
    size = outs.pop(0)          # NHWC == permute(0, 2, 3, 1)
    offset = outs.pop(0)
    roll_bin = outs.pop(0) if cfg.train_roll else None
    roll_offset = outs.pop(0) if cfg.train_roll else None
    pitch_bin = outs.pop(0) if cfg.train_pitch else None
    pitch_offset = outs.pop(0) if cfg.train_pitch else None
    yaw_bin = outs.pop(0) if cfg.train_yaw else None
    yaw_offset = outs.pop(0) if cfg.train_yaw else None
    depth = outs.pop(0) if cfg.train_depth else None

    return Prediction(
        heatmap=heatmap,
        keypoint_heatmap=keypoint_heatmap,
        keypoint_affinity=keypoint_affinity,
        size=size,
        offset=offset,
        roll_bin=roll_bin,
        roll_offset=roll_offset,
        pitch_bin=pitch_bin,
        pitch_offset=pitch_offset,
        yaw_bin=yaw_bin,
        yaw_offset=yaw_offset,
        depth=depth,
    )


# ----------------------------- main -----------------------------

if __name__ == "__main__":
    cfg = ObjectConfigSet(
        n_labels=3,
        n_keypoints=2,
        train_keypoints=True,
        train_yaw=True,
        train_pitch=True,
        train_roll=True,
        train_depth=True,
    )
    head_channels = get_head_channels(cfg)        # [3, 2, 4, 2, 2, 4, 4, 4, 4, 4, 4, 1]

    N, C_IMG, H, W = 2, 3, 16, 16
    C_BACKBONE = 8

    key = jax.random.PRNGKey(0)
    k_img, k_params = jax.random.split(key)
    img = jax.random.normal(k_img, (N, C_IMG, H, W), jnp.float32)   # NCHW (PyTorch convention)

    params = init_params(k_params, C_IMG, C_BACKBONE, head_channels)
    fused = fuse_params(params, head_channels)     # one-time repack into fused/padded tensors

    # kernel vs. pure-JAX reference (same bf16 cast points -> only sum-order differences)
    slab = centernet_fused_call(img, fused)
    jax.block_until_ready(slab)
    ref_slab = centernet_reference_slab(img, fused)
    max_err = float(jnp.max(jnp.abs(slab - ref_slab)))
    assert max_err < 1e-2, f"kernel/reference mismatch: max abs err {max_err}"

    pred = centernet_forward(img, fused, cfg)
    leaves = [l for l in jax.tree_util.tree_leaves(pred.__dict__) if l is not None]
    for leaf in leaves:
        jax.block_until_ready(leaf)

    # sanity checks on output shapes vs. the PyTorch module
    assert pred.heatmap.shape == (N, cfg.n_labels, H, W)
    assert pred.keypoint_heatmap.shape == (N, cfg.n_keypoints, H, W)
    assert pred.keypoint_affinity.shape == (N, cfg.n_keypoints, 2, H, W)
    assert pred.size.shape == (N, H, W, 2)
    assert pred.offset.shape == (N, H, W, 2)
    assert pred.roll_bin.shape == (N, H, W, 4)
    assert pred.yaw_offset.shape == (N, H, W, 4)
    assert pred.depth.shape == (N, H, W, 1)

    print("KERNEL_OK")
</pallas_src>

<mosaic_0001>
module attributes {stable_mosaic.version = 11 : i64} {
  func.func @_centernet_fused_kernel(%arg0: i32, %arg1: i32, %arg2: memref<1x20x26x3xbf16, #tpu.memory_space<vmem>>, %arg3: memref<27x8xbf16, #tpu.memory_space<vmem>>, %arg4: memref<1x8xf32, #tpu.memory_space<vmem>>, %arg5: memref<72x256xbf16, #tpu.memory_space<vmem>>, %arg6: memref<1x256xf32, #tpu.memory_space<vmem>>, %arg7: memref<256x128xbf16, #tpu.memory_space<vmem>>, %arg8: memref<1x128xf32, #tpu.memory_space<vmem>>, %arg9: memref<1x8x16x128xf32, #tpu.memory_space<vmem>>, %arg10: memref<240x27xbf16, #tpu.memory_space<vmem>>, %arg11: memref<128x72xbf16, #tpu.memory_space<vmem>>) attributes {dimension_semantics = [#tpu.dimension_semantics<parallel>, #tpu.dimension_semantics<parallel>], iteration_bounds = array<i64: 2, 2>, scalar_prefetch = 0 : i64, scratch_operands = 2 : i64, tpu.core_type = #tpu.core_type<tc>, window_params = [{transform_indices = @transform_0, window_bounds = array<i64: 1, 20, 26, 3>}, {pipeline_mode = #tpu.pipeline_mode<synchronous>, transform_indices = @transform_1, window_bounds = array<i64: 27, 8>}, {pipeline_mode = #tpu.pipeline_mode<synchronous>, transform_indices = @transform_2, window_bounds = array<i64: 1, 8>}, {pipeline_mode = #tpu.pipeline_mode<synchronous>, transform_indices = @transform_3, window_bounds = array<i64: 72, 256>}, {pipeline_mode = #tpu.pipeline_mode<synchronous>, transform_indices = @transform_4, window_bounds = array<i64: 1, 256>}, {pipeline_mode = #tpu.pipeline_mode<synchronous>, transform_indices = @transform_5, window_bounds = array<i64: 256, 128>}, {pipeline_mode = #tpu.pipeline_mode<synchronous>, transform_indices = @transform_6, window_bounds = array<i64: 1, 128>}, {transform_indices = @transform_7, window_bounds = array<i64: 1, 8, 16, 128>}]} {
    %c8_i32 = arith.constant 8 : i32
    %0 = arith.muli %arg1, %c8_i32 : i32
    %1 = tpu.assume_multiple %0, 8 : i32
    %c0 = arith.constant 0 : index
    %2 = arith.index_cast %1 : i32 to index
    %c0_0 = arith.constant 0 : index
    %c0_1 = arith.constant 0 : index
    %3 = vector.load %arg2[%c0, %2, %c0_0, %c0_1] : memref<1x20x26x3xbf16, #tpu.memory_space<vmem>>, vector<1x12x26x3xbf16>
    %4 = vector.shape_cast %3 : vector<1x12x26x3xbf16> to vector<12x26x3xbf16>
    %5 = vector.extract_strided_slice %4 {offsets = [0, 0, 0], sizes = [10, 24, 3], strides = [1, 1, 1]} : vector<12x26x3xbf16> to vector<10x24x3xbf16>
    %6 = vector.shape_cast %5 : vector<10x24x3xbf16> to vector<240x3xbf16>
    %c0_2 = arith.constant 0 : index
    %c0_3 = arith.constant 0 : index
    %7 = vector.load %arg10[%c0_2, %c0_3] : memref<240x27xbf16, #tpu.memory_space<vmem>>, vector<240x3xbf16>
    tpu.vector_store %arg10[%c0_2, %c0_3], %6 {strides = array<i32>} : memref<240x27xbf16, #tpu.memory_space<vmem>>, vector<240x3xbf16>,
    %8 = vector.extract_strided_slice %4 {offsets = [0, 1, 0], sizes = [10, 24, 3], strides = [1, 1, 1]} : vector<12x26x3xbf16> to vector<10x24x3xbf16>
    %9 = vector.shape_cast %8 : vector<10x24x3xbf16> to vector<240x3xbf16>
    %c0_4 = arith.constant 0 : index
    %c3 = arith.constant 3 : index
    %10 = vector.load %arg10[%c0_4, %c3] : memref<240x27xbf16, #tpu.memory_space<vmem>>, vector<240x3xbf16>
    tpu.vector_store %arg10[%c0_4, %c3], %9 {strides = array<i32>} : memref<240x27xbf16, #tpu.memory_space<vmem>>, vector<240x3xbf16>,
    %11 = vector.extract_strided_slice %4 {offsets = [0, 2, 0], sizes = [10, 24, 3], strides = [1, 1, 1]} : vector<12x26x3xbf16> to vector<10x24x3xbf16>
    %12 = vector.shape_cast %11 : vector<10x24x3xbf16> to vector<240x3xbf16>
    %c0_5 = arith.constant 0 : index
    %c6 = arith.constant 6 : index
    %13 = vector.load %arg10[%c0_5, %c6] : memref<240x27xbf16, #tpu.memory_space<vmem>>, vector<240x3xbf16>
    tpu.vector_store %arg10[%c0_5, %c6], %12 {strides = array<i32>} : memref<240x27xbf16, #tpu.memory_space<vmem>>, vector<240x3xbf16>,
    %14 = vector.extract_strided_slice %4 {offsets = [1, 0, 0], sizes = [10, 24, 3], strides = [1, 1, 1]} : vector<12x26x3xbf16> to vector<10x24x3xbf16>
    %15 = vector.shape_cast %14 : vector<10x24x3xbf16> to vector<240x3xbf16>
    %c0_6 = arith.constant 0 : index
    %c9 = arith.constant 9 : index
    %16 = vector.load %arg10[%c0_6, %c9] : memref<240x27xbf16, #tpu.memory_space<vmem>>, vector<240x3xbf16>
    tpu.vector_store %arg10[%c0_6, %c9], %15 {strides = array<i32>} : memref<240x27xbf16, #tpu.memory_space<vmem>>, vector<240x3xbf16>,
    %17 = vector.extract_strided_slice %4 {offsets = [1, 1, 0], sizes = [10, 24, 3], strides = [1, 1, 1]} : vector<12x26x3xbf16> to vector<10x24x3xbf16>
    %18 = vector.shape_cast %17 : vector<10x24x3xbf16> to vector<240x3xbf16>
    %c0_7 = arith.constant 0 : index
    %c12 = arith.constant 12 : index
    %19 = vector.load %arg10[%c0_7, %c12] : memref<240x27xbf16, #tpu.memory_space<vmem>>, vector<240x3xbf16>
    tpu.vector_store %arg10[%c0_7, %c12], %18 {strides = array<i32>} : memref<240x27xbf16, #tpu.memory_space<vmem>>, vector<240x3xbf16>,
    %20 = vector.extract_strided_slice %4 {offsets = [1, 2, 0], sizes = [10, 24, 3], strides = [1, 1, 1]} : vector<12x26x3xbf16> to vector<10x24x3xbf16>
    %21 = vector.shape_cast %20 : vector<10x24x3xbf16> to vector<240x3xbf16>
    %c0_8 = arith.constant 0 : index
    %c15 = arith.constant 15 : index
    %22 = vector.load %arg10[%c0_8, %c15] : memref<240x27xbf16, #tpu.memory_space<vmem>>, vector<240x3xbf16>
    tpu.vector_store %arg10[%c0_8, %c15], %21 {strides = array<i32>} : memref<240x27xbf16, #tpu.memory_space<vmem>>, vector<240x3xbf16>,
    %23 = vector.extract_strided_slice %4 {offsets = [2, 0, 0], sizes = [10, 24, 3], strides = [1, 1, 1]} : vector<12x26x3xbf16> to vector<10x24x3xbf16>
    %24 = vector.shape_cast %23 : vector<10x24x3xbf16> to vector<240x3xbf16>
    %c0_9 = arith.constant 0 : index
    %c18 = arith.constant 18 : index
    %25 = vector.load %arg10[%c0_9, %c18] : memref<240x27xbf16, #tpu.memory_space<vmem>>, vector<240x3xbf16>
    tpu.vector_store %arg10[%c0_9, %c18], %24 {strides = array<i32>} : memref<240x27xbf16, #tpu.memory_space<vmem>>, vector<240x3xbf16>,
    %26 = vector.extract_strided_slice %4 {offsets = [2, 1, 0], sizes = [10, 24, 3], strides = [1, 1, 1]} : vector<12x26x3xbf16> to vector<10x24x3xbf16>
    %27 = vector.shape_cast %26 : vector<10x24x3xbf16> to vector<240x3xbf16>
    %c0_10 = arith.constant 0 : index
    %c21 = arith.constant 21 : index
    %28 = vector.load %arg10[%c0_10, %c21] : memref<240x27xbf16, #tpu.memory_space<vmem>>, vector<240x3xbf16>
    tpu.vector_store %arg10[%c0_10, %c21], %27 {strides = array<i32>} : memref<240x27xbf16, #tpu.memory_space<vmem>>, vector<240x3xbf16>,
    %29 = vector.extract_strided_slice %4 {offsets = [2, 2, 0], sizes = [10, 24, 3], strides = [1, 1, 1]} : vector<12x26x3xbf16> to vector<10x24x3xbf16>
    %30 = vector.shape_cast %29 : vector<10x24x3xbf16> to vector<240x3xbf16>
    %c0_11 = arith.constant 0 : index
    %c24 = arith.constant 24 : index
    %31 = vector.load %arg10[%c0_11, %c24] : memref<240x27xbf16, #tpu.memory_space<vmem>>, vector<240x3xbf16>
    tpu.vector_store %arg10[%c0_11, %c24], %30 {strides = array<i32>} : memref<240x27xbf16, #tpu.memory_space<vmem>>, vector<240x3xbf16>,
    %c0_12 = arith.constant 0 : index
    %c0_13 = arith.constant 0 : index
    %32 = vector.load %arg10[%c0_12, %c0_13] : memref<240x27xbf16, #tpu.memory_space<vmem>>, vector<240x27xbf16>
    %c0_14 = arith.constant 0 : index
    %c0_15 = arith.constant 0 : index
    %33 = vector.load %arg3[%c0_14, %c0_15] : memref<27x8xbf16, #tpu.memory_space<vmem>>, vector<27x8xbf16>
    %cst = arith.constant dense<0.000000e+00> : vector<240x8xf32>
    %34 = tpu.matmul %32, %33, %cst {dimension_numbers = #tpu.dot_dimension_numbers<[1], [0], [0], [1], [0, 0, 1, 1], [], []>} : vector<240x27xbf16>, vector<27x8xbf16>, vector<240x8xf32> -> vector<240x8xf32>
    %c0_16 = arith.constant 0 : index
    %c0_17 = arith.constant 0 : index
    %35 = vector.load %arg4[%c0_16, %c0_17] : memref<1x8xf32, #tpu.memory_space<vmem>>, vector<1x8xf32>
    %36 = vector.broadcast %35 : vector<1x8xf32> to vector<240x8xf32>
    %37 = arith.addf %34, %36 : vector<240x8xf32>
    %cst_18 = arith.constant 0.000000e+00 : f32
    %38 = vector.broadcast %cst_18 : f32 to vector<240x8xf32>
    %39 = arith.cmpf ogt, %37, %38 : vector<240x8xf32>
    %cst_19 = arith.constant 0.00999999977 : f32
    %40 = vector.broadcast %cst_19 : f32 to vector<240x8xf32>
    %41 = arith.mulf %40, %37 : vector<240x8xf32>
    %42 = arith.select %39, %37, %41 : vector<240x8xi1>, vector<240x8xf32>
    %43 = vector.shape_cast %42 : vector<240x8xf32> to vector<10x24x8xf32>
    %44 = tpu.iota {dimensions = array<i32: 0>} : vector<10x24x1xi32>
    %c1_i32 = arith.constant 1 : i32
    %45 = arith.subi %1, %c1_i32 : i32
    %46 = vector.broadcast %45 : i32 to vector<10x24x1xi32>
    %47 = arith.addi %44, %46 : vector<10x24x1xi32>
    %48 = tpu.iota {dimensions = array<i32: 1>} : vector<10x24x1xi32>
    %c0_i32 = arith.constant 0 : i32
    %49 = vector.broadcast %c0_i32 : i32 to vector<10x24x1xi32>
    %50 = arith.cmpi sge, %47, %49 : vector<10x24x1xi32>
    %c16_i32 = arith.constant 16 : i32
    %51 = vector.broadcast %c16_i32 : i32 to vector<10x24x1xi32>
    %52 = arith.cmpi slt, %47, %51 : vector<10x24x1xi32>
    %53 = arith.andi %50, %52 : vector<10x24x1xi1>
    %c1_i32_20 = arith.constant 1 : i32
    %54 = vector.broadcast %c1_i32_20 : i32 to vector<10x24x1xi32>
    %55 = arith.cmpi sge, %48, %54 : vector<10x24x1xi32>
    %56 = arith.andi %53, %55 : vector<10x24x1xi1>
    %c16_i32_21 = arith.constant 16 : i32
    %57 = vector.broadcast %c16_i32_21 : i32 to vector<10x24x1xi32>
    %58 = arith.cmpi sle, %48, %57 : vector<10x24x1xi32>
    %59 = arith.andi %56, %58 : vector<10x24x1xi1>
    %cst_22 = arith.constant 0.000000e+00 : f32
    %60 = vector.shape_cast %59 : vector<10x24x1xi1> to vector<10x24x1xi1>
    %61 = vector.broadcast %60 : vector<10x24x1xi1> to vector<10x24x8xi1>
    %62 = vector.broadcast %cst_22 : f32 to vector<10x24x8xf32>
    %63 = arith.select %61, %43, %62 : vector<10x24x8xi1>, vector<10x24x8xf32>
    %64 = arith.truncf %63 : vector<10x24x8xf32> to vector<10x24x8xbf16>
    %65 = vector.extract_strided_slice %64 {offsets = [0, 0, 0], sizes = [8, 16, 8], strides = [1, 1, 1]} : vector<10x24x8xbf16> to vector<8x16x8xbf16>
    %66 = vector.shape_cast %65 : vector<8x16x8xbf16> to vector<128x8xbf16>
    %c0_23 = arith.constant 0 : index
    %c0_24 = arith.constant 0 : index
    %67 = vector.load %arg11[%c0_23, %c0_24] : memref<128x72xbf16, #tpu.memory_space<vmem>>, vector<128x8xbf16>
    tpu.vector_store %arg11[%c0_23, %c0_24], %66 {strides = array<i32>} : memref<128x72xbf16, #tpu.memory_space<vmem>>, vector<128x8xbf16>,
    %68 = vector.extract_strided_slice %64 {offsets = [0, 1, 0], sizes = [8, 16, 8], strides = [1, 1, 1]} : vector<10x24x8xbf16> to vector<8x16x8xbf16>
    %69 = vector.shape_cast %68 : vector<8x16x8xbf16> to vector<128x8xbf16>
    %c0_25 = arith.constant 0 : index
    %c8 = arith.constant 8 : index
    %70 = vector.load %arg11[%c0_25, %c8] : memref<128x72xbf16, #tpu.memory_space<vmem>>, vector<128x8xbf16>
    tpu.vector_store %arg11[%c0_25, %c8], %69 {strides = array<i32>} : memref<128x72xbf16, #tpu.memory_space<vmem>>, vector<128x8xbf16>,
    %71 = vector.extract_strided_slice %64 {offsets = [0, 2, 0], sizes = [8, 16, 8], strides = [1, 1, 1]} : vector<10x24x8xbf16> to vector<8x16x8xbf16>
    %72 = vector.shape_cast %71 : vector<8x16x8xbf16> to vector<128x8xbf16>
    %c0_26 = arith.constant 0 : index
    %c16 = arith.constant 16 : index
    %73 = vector.load %arg11[%c0_26, %c16] : memref<128x72xbf16, #tpu.memory_space<vmem>>, vector<128x8xbf16>
    tpu.vector_store %arg11[%c0_26, %c16], %72 {strides = array<i32>} : memref<128x72xbf16, #tpu.memory_space<vmem>>, vector<128x8xbf16>,
    %74 = vector.extract_strided_slice %64 {offsets = [1, 0, 0], sizes = [8, 16, 8], strides = [1, 1, 1]} : vector<10x24x8xbf16> to vector<8x16x8xbf16>
    %75 = vector.shape_cast %74 : vector<8x16x8xbf16> to vector<128x8xbf16>
    %c0_27 = arith.constant 0 : index
    %c24_28 = arith.constant 24 : index
    %76 = vector.load %arg11[%c0_27, %c24_28] : memref<128x72xbf16, #tpu.memory_space<vmem>>, vector<128x8xbf16>
    tpu.vector_store %arg11[%c0_27, %c24_28], %75 {strides = array<i32>} : memref<128x72xbf16, #tpu.memory_space<vmem>>, vector<128x8xbf16>,
    %77 = vector.extract_strided_slice %64 {offsets = [1, 1, 0], sizes = [8, 16, 8], strides = [1, 1, 1]} : vector<10x24x8xbf16> to vector<8x16x8xbf16>
    %78 = vector.shape_cast %77 : vector<8x16x8xbf16> to vector<128x8xbf16>
    %c0_29 = arith.constant 0 : index
    %c32 = arith.constant 32 : index
    %79 = vector.load %arg11[%c0_29, %c32] : memref<128x72xbf16, #tpu.memory_space<vmem>>, vector<128x8xbf16>
    tpu.vector_store %arg11[%c0_29, %c32], %78 {strides = array<i32>} : memref<128x72xbf16, #tpu.memory_space<vmem>>, vector<128x8xbf16>,
    %80 = vector.extract_strided_slice %64 {offsets = [1, 2, 0], sizes = [8, 16, 8], strides = [1, 1, 1]} : vector<10x24x8xbf16> to vector<8x16x8xbf16>
    %81 = vector.shape_cast %80 : vector<8x16x8xbf16> to vector<128x8xbf16>
    %c0_30 = arith.constant 0 : index
    %c40 = arith.constant 40 : index
    %82 = vector.load %arg11[%c0_30, %c40] : memref<128x72xbf16, #tpu.memory_space<vmem>>, vector<128x8xbf16>
    tpu.vector_store %arg11[%c0_30, %c40], %81 {strides = array<i32>} : memref<128x72xbf16, #tpu.memory_space<vmem>>, vector<128x8xbf16>,
    %83 = vector.extract_strided_slice %64 {offsets = [2, 0, 0], sizes = [8, 16, 8], strides = [1, 1, 1]} : vector<10x24x8xbf16> to vector<8x16x8xbf16>
    %84 = vector.shape_cast %83 : vector<8x16x8xbf16> to vector<128x8xbf16>
    %c0_31 = arith.constant 0 : index
    %c48 = arith.constant 48 : index
    %85 = vector.load %arg11[%c0_31, %c48] : memref<128x72xbf16, #tpu.memory_space<vmem>>, vector<128x8xbf16>
    tpu.vector_store %arg11[%c0_31, %c48], %84 {strides = array<i32>} : memref<128x72xbf16, #tpu.memory_space<vmem>>, vector<128x8xbf16>,
    %86 = vector.extract_strided_slice %64 {offsets = [2, 1, 0], sizes = [8, 16, 8], strides = [1, 1, 1]} : vector<10x24x8xbf16> to vector<8x16x8xbf16>
    %87 = vector.shape_cast %86 : vector<8x16x8xbf16> to vector<128x8xbf16>
    %c0_32 = arith.constant 0 : index
    %c56 = arith.constant 56 : index
    %88 = vector.load %arg11[%c0_32, %c56] : memref<128x72xbf16, #tpu.memory_space<vmem>>, vector<128x8xbf16>
    tpu.vector_store %arg11[%c0_32, %c56], %87 {strides = array<i32>} : memref<128x72xbf16, #tpu.memory_space<vmem>>, vector<128x8xbf16>,
    %89 = vector.extract_strided_slice %64 {offsets = [2, 2, 0], sizes = [8, 16, 8], strides = [1, 1, 1]} : vector<10x24x8xbf16> to vector<8x16x8xbf16>
    %90 = vector.shape_cast %89 : vector<8x16x8xbf16> to vector<128x8xbf16>
    %c0_33 = arith.constant 0 : index
    %c64 = arith.constant 64 : index
    %91 = vector.load %arg11[%c0_33, %c64] : memref<128x72xbf16, #tpu.memory_space<vmem>>, vector<128x8xbf16>
    tpu.vector_store %arg11[%c0_33, %c64], %90 {strides = array<i32>} : memref<128x72xbf16, #tpu.memory_space<vmem>>, vector<128x8xbf16>,
    %c0_34 = arith.constant 0 : index
    %c0_35 = arith.constant 0 : index
    %92 = vector.load %arg11[%c0_34, %c0_35] : memref<128x72xbf16, #tpu.memory_space<vmem>>, vector<128x72xbf16>
    %c0_36 = arith.constant 0 : index
    %c0_37 = arith.constant 0 : index
    %93 = vector.load %arg5[%c0_36, %c0_37] : memref<72x256xbf16, #tpu.memory_space<vmem>>, vector<72x256xbf16>
    %cst_38 = arith.constant dense<0.000000e+00> : vector<128x256xf32>
    %94 = tpu.matmul %92, %93, %cst_38 {dimension_numbers = #tpu.dot_dimension_numbers<[1], [0], [0], [1], [0, 0, 1, 1], [], []>} : vector<128x72xbf16>, vector<72x256xbf16>, vector<128x256xf32> -> vector<128x256xf32>
    %c0_39 = arith.constant 0 : index
    %c0_40 = arith.constant 0 : index
    %95 = vector.load %arg6[%c0_39, %c0_40] : memref<1x256xf32, #tpu.memory_space<vmem>>, vector<1x256xf32>
    %96 = vector.broadcast %95 : vector<1x256xf32> to vector<128x256xf32>
    %97 = arith.addf %94, %96 : vector<128x256xf32>
    %cst_41 = arith.constant 0.000000e+00 : f32
    %98 = vector.broadcast %cst_41 : f32 to vector<128x256xf32>
    %99 = arith.cmpf ogt, %97, %98 : vector<128x256xf32>
    %cst_42 = arith.constant 0.00999999977 : f32
    %100 = vector.broadcast %cst_42 : f32 to vector<128x256xf32>
    %101 = arith.mulf %100, %97 : vector<128x256xf32>
    %102 = arith.select %99, %97, %101 : vector<128x256xi1>, vector<128x256xf32>
    %103 = arith.truncf %102 : vector<128x256xf32> to vector<128x256xbf16>
    %c0_43 = arith.constant 0 : index
    %c0_44 = arith.constant 0 : index
    %104 = vector.load %arg7[%c0_43, %c0_44] : memref<256x128xbf16, #tpu.memory_space<vmem>>, vector<256x128xbf16>
    %cst_45 = arith.constant dense<0.000000e+00> : vector<128x128xf32>
    %105 = tpu.matmul %103, %104, %cst_45 {dimension_numbers = #tpu.dot_dimension_numbers<[1], [0], [0], [1], [0, 0, 1, 1], [], []>} : vector<128x256xbf16>, vector<256x128xbf16>, vector<128x128xf32> -> vector<128x128xf32>
    %c0_46 = arith.constant 0 : index
    %c0_47 = arith.constant 0 : index
    %106 = vector.load %arg8[%c0_46, %c0_47] : memref<1x128xf32, #tpu.memory_space<vmem>>, vector<1x128xf32>
    %107 = vector.broadcast %106 : vector<1x128xf32> to vector<128x128xf32>
    %108 = arith.addf %105, %107 : vector<128x128xf32>
    %109 = vector.shape_cast %108 : vector<128x128xf32> to vector<8x16x128xf32>
    %c0_48 = arith.constant 0 : index
    %c0_49 = arith.constant 0 : index
    %c0_50 = arith.constant 0 : index
    %c0_51 = arith.constant 0 : index
    %110 = vector.load %arg9[%c0_48, %c0_49, %c0_50, %c0_51] : memref<1x8x16x128xf32, #tpu.memory_space<vmem>>, vector<1x8x16x128xf32>
    %111 = vector.shape_cast %110 : vector<1x8x16x128xf32> to vector<8x16x128xf32>
    %112 = vector.shape_cast %109 : vector<8x16x128xf32> to vector<1x8x16x128xf32>
    tpu.vector_store %arg9[%c0_48, %c0_49, %c0_50, %c0_51], %112 {strides = array<i32>} : memref<1x8x16x128xf32, #tpu.memory_space<vmem>>, vector<1x8x16x128xf32>,
    return
  }
  func.func @transform_0(%arg0: i32, %arg1: i32) -> (i32, i32, i32, i32) {
    %c0_i32 = arith.constant 0 : i32
    %c0_i32_0 = arith.constant 0 : i32
    %c0_i32_1 = arith.constant 0 : i32
    %c0_i32_2 = arith.constant 0 : i32
    return %arg0, %c0_i32, %c0_i32_0, %c0_i32_1 : i32, i32, i32, i32
  }
  func.func @transform_1(%arg0: i32, %arg1: i32) -> (i32, i32) {
    %c0_i32 = arith.constant 0 : i32
    %c0_i32_0 = arith.constant 0 : i32
    %c0_i32_1 = arith.constant 0 : i32
    return %c0_i32, %c0_i32_0 : i32, i32
  }
  func.func @transform_2(%arg0: i32, %arg1: i32) -> (i32, i32) {
    %c0_i32 = arith.constant 0 : i32
    %c0_i32_0 = arith.constant 0 : i32
    %c0_i32_1 = arith.constant 0 : i32
    return %c0_i32, %c0_i32_0 : i32, i32
  }
  func.func @transform_3(%arg0: i32, %arg1: i32) -> (i32, i32) {
    %c0_i32 = arith.constant 0 : i32
    %c0_i32_0 = arith.constant 0 : i32
    %c0_i32_1 = arith.constant 0 : i32
    return %c0_i32, %c0_i32_0 : i32, i32
  }
  func.func @transform_4(%arg0: i32, %arg1: i32) -> (i32, i32) {
    %c0_i32 = arith.constant 0 : i32
    %c0_i32_0 = arith.constant 0 : i32
    %c0_i32_1 = arith.constant 0 : i32
    return %c0_i32, %c0_i32_0 : i32, i32
  }
  func.func @transform_5(%arg0: i32, %arg1: i32) -> (i32, i32) {
    %c0_i32 = arith.constant 0 : i32
    %c0_i32_0 = arith.constant 0 : i32
    %c0_i32_1 = arith.constant 0 : i32
    return %c0_i32, %c0_i32_0 : i32, i32
  }
  func.func @transform_6(%arg0: i32, %arg1: i32) -> (i32, i32) {
    %c0_i32 = arith.constant 0 : i32
    %c0_i32_0 = arith.constant 0 : i32
    %c0_i32_1 = arith.constant 0 : i32
    return %c0_i32, %c0_i32_0 : i32, i32
  }
  func.func @transform_7(%arg0: i32, %arg1: i32) -> (i32, i32, i32, i32) {
    %c0_i32 = arith.constant 0 : i32
    %c0_i32_0 = arith.constant 0 : i32
    %c0_i32_1 = arith.constant 0 : i32
    return %arg0, %arg1, %c0_i32, %c0_i32_0 : i32, i32, i32, i32
  }
}

</mosaic_0001>

<llo_original>
// kernel: tpu_custom_call.1
$region0: #{tpu_custom_call.1}
  #allocation0 [shape = 'u32[]', space=smem, size = 0x4, offset = 0x4, fixed_abs, tag = 'smem constant byte address 0x4 - core index']
  #allocation1 [shape = 'u32[144,128]{1,0:T(1,128)}', space=vmem, size = 0x12000, scoped, tag = 'internal scratch']
  #allocation2 [shape = 'bf16[240,27]{1,0:T(16,128)(2,1)}', space=vmem, size = 0xf000, scoped, tag = 'scratch operand']
  #allocation3 [shape = 'bf16[128,72]{1,0:T(16,128)(2,1)}', space=vmem, size = 0x8000, scoped, tag = 'scratch operand']
  %s0 = inlined_call_operand.vmem [shape: bf16[2,20,26,3], index: 0, kind: input, shape index: {}]
  %s1 = inlined_call_operand.vmem [shape: bf16[27,8], index: 1, kind: input, shape index: {}]
  %s2 = inlined_call_operand.vmem [shape: f32[1,8], index: 2, kind: input, shape index: {}]
  %s3 = inlined_call_operand.vmem [shape: bf16[72,256], index: 3, kind: input, shape index: {}]
  %s4 = inlined_call_operand.vmem [shape: f32[1,256], index: 4, kind: input, shape index: {}]
  %s5 = inlined_call_operand.vmem [shape: bf16[256,128], index: 5, kind: input, shape index: {}]
  %s6 = inlined_call_operand.vmem [shape: f32[1,128], index: 6, kind: input, shape index: {}]
  %s7 = inlined_call_operand.hbm [shape: f32[2,16,16,128], index: 7, kind: output, shape index: {}]
  %s8 = sld [smem:[#allocation0]]
  $region61: #{tpu_custom_call.1} parent=0
    _
  %s10 = ssub.s32 1, %s8
  %s11 = scalar_select 0, %s10, %s8
  $region1: #{tpu_custom_call.1} parent=0
    #allocation4 [shape = 'u8[131072]{0}', space=vmem, size = 0x20000, scoped, tag = 'output window, operand 0']
    #allocation5 [shape = 's32[2]{0}', space=sflag, size = 0x8, scoped, tag = 'scoped memory for tpu_custom_call.1']
    %12 = vsyncpa [#allocation5], 0
    %s13 = scalar_lea.sflag [#allocation5], 1
    %14 = vsyncpa %s13, 0
    loop: start=0, step=1, limit=6
    $region2: #{tpu_custom_call.1} parent=1 // loop_pre_header
      _
    $region3: #{tpu_custom_call.1} parent=1 // loop_header
      %s16 = sphi 0, %s20
      %p17 = scmp.ge.s32.totalorder %s16, 6
      %s23 = sphi 0, %s35
      %s24 = sphi 0, %s31
      %s25 = sphi 0, %s23
      %s26 = sphi 0, %s24
      %s27 = sphi 0, %s25
      %s28 = sphi 0, %s26
      %s38 = sphi 0, %s40
      %s41 = sphi 0, %s38
      %s42 = sphi 0, %s41
      %s58 = sphi 0, %s42
      %s62 = sphi 0, %s62
      %s64 = sphi 0, %s62
      %s65 = sphi 0, %s64
      %s79 = sphi 0, %s65
      %s83 = sphi 0, %s83
      %s85 = sphi 0, %s83
      %s86 = sphi 0, %s85
      %s100 = sphi 0, %s86
      %s104 = sphi 0, %s104
      %s106 = sphi 0, %s104
      %s107 = sphi 0, %s106
      %s121 = sphi 0, %s107
      %s125 = sphi 0, %s125
      %s127 = sphi 0, %s125
      %s128 = sphi 0, %s127
      %s142 = sphi 0, %s128
      %s146 = sphi 0, %s146
      %s148 = sphi 0, %s146
      %s149 = sphi 0, %s148
      %s163 = sphi 0, %s149
      %s167 = sphi 0, %s167
      %s169 = sphi 0, %s167
      %s170 = sphi 0, %s169
      %s184 = sphi 0, %s170
      %s192 = sphi 0, %s194
      %s195 = sphi 0, %s192
      %s196 = sphi 0, %s195
      %s212 = sphi 0, %s196
    $region4: #{tpu_custom_call.1} parent=1 // loop_header_branch
      %19 = sbr.rel (%p17) target = $region8
    $region5: #{tpu_custom_call.1} parent=1 // loop_body
      %s21 = ssub.s32 %s16, 1
      %s22 = ssub.s32 %s16, 2
      %s29 = sadd.s32 1, %s24
      %p30 = scmp.ge.s32.totalorder %s29, 2
      %s31 = scalar_select %p30, 0, %s29
      %s32 = sadd.s32 1, %s23
      %s33 = scalar_select %p30, %s32, %s23
      %p34 = scmp.ge.s32.totalorder %s33, 2
      %s35 = scalar_select %p34, 0, %s33
      %s36 = ssub.s32 %s23, %s35
      %p37 = scmp.eq.s32.totalorder %s36, 0
      %s39 = sadd.s32 %s38, 1
      %s40 = scalar_select %p37, %s38, %s39
      %p43 = pneg %p37
      %p44 = scmp.eq.s32.totalorder %s16, 3
      %p45 = por %p43, %p44
      %p46 = scmp.ne.s32.totalorder %s38, %s41
      %p47 = scmp.eq.s32.totalorder %s16, 0
      %p48 = por %p46, %p47
      %p49 = scmp.ne.s32.totalorder %s38, %s41
      %p50 = scmp.eq.s32.totalorder %s21, 3
      %p51 = por %p49, %p50
      %p52 = scmp.ne.s32.totalorder %s41, %s42
      %p53 = scmp.eq.s32.totalorder %s21, 0
      %p54 = por %p52, %p53
      %p55 = scmp.ne.s32.totalorder %s41, %s42
      %p56 = scmp.eq.s32.totalorder %s22, 3
      %p57 = por %p55, %p56
      %p59 = scmp.ne.s32.totalorder %s42, %s58
      %p60 = scmp.eq.s32.totalorder %s22, 0
      %p61 = por %p59, %p60
      %s63 = sadd.s32 %s62, 1
      %p66 = scmp.eq.s32.totalorder %s16, 3
      %p67 = scmp.ne.s32.totalorder %s62, %s64
      %p68 = scmp.eq.s32.totalorder %s16, 0
      %p69 = por %p67, %p68
      %p70 = scmp.ne.s32.totalorder %s62, %s64
      %p71 = scmp.eq.s32.totalorder %s21, 3
      %p72 = por %p70, %p71
      %p73 = scmp.ne.s32.totalorder %s64, %s65
      %p74 = scmp.eq.s32.totalorder %s21, 0
      %p75 = por %p73, %p74
      %p76 = scmp.ne.s32.totalorder %s64, %s65
      %p77 = scmp.eq.s32.totalorder %s22, 3
      %p78 = por %p76, %p77
      %p80 = scmp.ne.s32.totalorder %s65, %s79
      %p81 = scmp.eq.s32.totalorder %s22, 0
      %p82 = por %p80, %p81
      %s84 = sadd.s32 %s83, 1
      %p87 = scmp.eq.s32.totalorder %s16, 3
      %p88 = scmp.ne.s32.totalorder %s83, %s85
      %p89 = scmp.eq.s32.totalorder %s16, 0
      %p90 = por %p88, %p89
      %p91 = scmp.ne.s32.totalorder %s83, %s85
      %p92 = scmp.eq.s32.totalorder %s21, 3
      %p93 = por %p91, %p92
      %p94 = scmp.ne.s32.totalorder %s85, %s86
      %p95 = scmp.eq.s32.totalorder %s21, 0
      %p96 = por %p94, %p95
      %p97 = scmp.ne.s32.totalorder %s85, %s86
      %p98 = scmp.eq.s32.totalorder %s22, 3
      %p99 = por %p97, %p98
      %p101 = scmp.ne.s32.totalorder %s86, %s100
      %p102 = scmp.eq.s32.totalorder %s22, 0
      %p103 = por %p101, %p102
      %s105 = sadd.s32 %s104, 1
      %p108 = scmp.eq.s32.totalorder %s16, 3
      %p109 = scmp.ne.s32.totalorder %s104, %s106
      %p110 = scmp.eq.s32.totalorder %s16, 0
      %p111 = por %p109, %p110
      %p112 = scmp.ne.s32.totalorder %s104, %s106
      %p113 = scmp.eq.s32.totalorder %s21, 3
      %p114 = por %p112, %p113
      %p115 = scmp.ne.s32.totalorder %s106, %s107
      %p116 = scmp.eq.s32.totalorder %s21, 0
      %p117 = por %p115, %p116
      %p118 = scmp.ne.s32.totalorder %s106, %s107
      %p119 = scmp.eq.s32.totalorder %s22, 3
      %p120 = por %p118, %p119
      %p122 = scmp.ne.s32.totalorder %s107, %s121
      %p123 = scmp.eq.s32.totalorder %s22, 0
      %p124 = por %p122, %p123
      %s126 = sadd.s32 %s125, 1
      %p129 = scmp.eq.s32.totalorder %s16, 3
      %p130 = scmp.ne.s32.totalorder %s125, %s127
      %p131 = scmp.eq.s32.totalorder %s16, 0
      %p132 = por %p130, %p131
      %p133 = scmp.ne.s32.totalorder %s125, %s127
      %p134 = scmp.eq.s32.totalorder %s21, 3
      %p135 = por %p133, %p134
      %p136 = scmp.ne.s32.totalorder %s127, %s128
      %p137 = scmp.eq.s32.totalorder %s21, 0
      %p138 = por %p136, %p137
      %p139 = scmp.ne.s32.totalorder %s127, %s128
      %p140 = scmp.eq.s32.totalorder %s22, 3
      %p141 = por %p139, %p140
      %p143 = scmp.ne.s32.totalorder %s128, %s142
      %p144 = scmp.eq.s32.totalorder %s22, 0
      %p145 = por %p143, %p144
      %s147 = sadd.s32 %s146, 1
      %p150 = scmp.eq.s32.totalorder %s16, 3
      %p151 = scmp.ne.s32.totalorder %s146, %s148
      %p152 = scmp.eq.s32.totalorder %s16, 0
      %p153 = por %p151, %p152
      %p154 = scmp.ne.s32.totalorder %s146, %s148
      %p155 = scmp.eq.s32.totalorder %s21, 3
      %p156 = por %p154, %p155
      %p157 = scmp.ne.s32.totalorder %s148, %s149
      %p158 = scmp.eq.s32.totalorder %s21, 0
      %p159 = por %p157, %p158
      %p160 = scmp.ne.s32.totalorder %s148, %s149
      %p161 = scmp.eq.s32.totalorder %s22, 3
      %p162 = por %p160, %p161
      %p164 = scmp.ne.s32.totalorder %s149, %s163
      %p165 = scmp.eq.s32.totalorder %s22, 0
      %p166 = por %p164, %p165
      %s168 = sadd.s32 %s167, 1
      %p171 = scmp.eq.s32.totalorder %s16, 3
      %p172 = scmp.ne.s32.totalorder %s167, %s169
      %p173 = scmp.eq.s32.totalorder %s16, 0
      %p174 = por %p172, %p173
      %p175 = scmp.ne.s32.totalorder %s167, %s169
      %p176 = scmp.eq.s32.totalorder %s21, 3
      %p177 = por %p175, %p176
      %p178 = scmp.ne.s32.totalorder %s169, %s170
      %p179 = scmp.eq.s32.totalorder %s21, 0
      %p180 = por %p178, %p179
      %p181 = scmp.ne.s32.totalorder %s169, %s170
      %p182 = scmp.eq.s32.totalorder %s22, 3
      %p183 = por %p181, %p182
      %p185 = scmp.ne.s32.totalorder %s170, %s184
      %p186 = scmp.eq.s32.totalorder %s22, 0
      %p187 = por %p185, %p186
      %s188 = ssub.s32 %s23, %s35
      %s189 = ssub.s32 %s24, %s31
      %s190 = sor.u32 %s188, %s189
      %p191 = scmp.eq.s32.totalorder %s190, 0
      %s193 = sadd.s32 %s192, 1
      %s194 = scalar_select %p191, %s192, %s193
      %p197 = pneg %p191
      %p198 = scmp.eq.s32.totalorder %s16, 3
      %p199 = por %p197, %p198
      %p200 = scmp.ne.s32.totalorder %s192, %s195
      %p201 = scmp.eq.s32.totalorder %s16, 0
      %p202 = por %p200, %p201
      %p203 = scmp.ne.s32.totalorder %s192, %s195
      %p204 = scmp.eq.s32.totalorder %s21, 3
      %p205 = por %p203, %p204
      %p206 = scmp.ne.s32.totalorder %s195, %s196
      %p207 = scmp.eq.s32.totalorder %s21, 0
      %p208 = por %p206, %p207
      %p209 = scmp.ne.s32.totalorder %s195, %s196
      %p210 = scmp.eq.s32.totalorder %s22, 3
      %p211 = por %p209, %p210
      %p213 = scmp.ne.s32.totalorder %s196, %s212
      %p214 = scmp.eq.s32.totalorder %s22, 0
      %p215 = por %p213, %p214
      %p216 = scmp.le.s32.totalorder 1, %s16
      %p217 = scmp.lt.s32.totalorder %s16, 5
      %p218 = pnand %p216, %p217
      %p219 = pneg %p218
      // Predicated region
      $region9: #{tpu_custom_call.1} parent=5 // pred_check
        _
      $region10: #{tpu_custom_call.1} parent=5 // pred_check_branch
        %221 = sbr.rel (%p218) target = $region12
      $region11: #{tpu_custom_call.1} parent=5 // pred_region
        %s222 = ssub.s32 %s16, 1
        // Predicated region
        $region13: #{tpu_custom_call.1} parent=11 // pred_check
          %p223 = pneg %p75
        $region14: #{tpu_custom_call.1} parent=11 // pred_check_branch
          %225 = sbr.rel (%p223) target = $region16
        $region15: #{tpu_custom_call.1} parent=11 // pred_region
          _
        $region16: #{tpu_custom_call.1} parent=11 // pred_fallthru
          _
        // Predicated region
        $region17: #{tpu_custom_call.1} parent=11 // pred_check
          %p226 = pneg %p96
        $region18: #{tpu_custom_call.1} parent=11 // pred_check_branch
          %228 = sbr.rel (%p226) target = $region20
        $region19: #{tpu_custom_call.1} parent=11 // pred_region
          _
        $region20: #{tpu_custom_call.1} parent=11 // pred_fallthru
          _
        // Predicated region
        $region21: #{tpu_custom_call.1} parent=11 // pred_check
          %p229 = pneg %p117
        $region22: #{tpu_custom_call.1} parent=11 // pred_check_branch
          %231 = sbr.rel (%p229) target = $region24
        $region23: #{tpu_custom_call.1} parent=11 // pred_region
          _
        $region24: #{tpu_custom_call.1} parent=11 // pred_fallthru
          _
        // Predicated region
        $region25: #{tpu_custom_call.1} parent=11 // pred_check
          %p232 = pneg %p138
        $region26: #{tpu_custom_call.1} parent=11 // pred_check_branch
          %234 = sbr.rel (%p232) target = $region28
        $region27: #{tpu_custom_call.1} parent=11 // pred_region
          _
        $region28: #{tpu_custom_call.1} parent=11 // pred_fallthru
          _
        // Predicated region
        $region29: #{tpu_custom_call.1} parent=11 // pred_check
          %p235 = pneg %p159
        $region30: #{tpu_custom_call.1} parent=11 // pred_check_branch
          %237 = sbr.rel (%p235) target = $region32
        $region31: #{tpu_custom_call.1} parent=11 // pred_region
          _
        $region32: #{tpu_custom_call.1} parent=11 // pred_fallthru
          _
        // Predicated region
        $region33: #{tpu_custom_call.1} parent=11 // pred_check
          %p238 = pneg %p180
        $region34: #{tpu_custom_call.1} parent=11 // pred_check_branch
          %240 = sbr.rel (%p238) target = $region36
        $region35: #{tpu_custom_call.1} parent=11 // pred_region
          _
        $region36: #{tpu_custom_call.1} parent=11 // pred_fallthru
          _
      $region12: #{tpu_custom_call.1} parent=5 // pred_fallthru
        _
      %p241 = scmp.lt.s32.totalorder %s16, 4
      // Predicated region
      $region37: #{tpu_custom_call.1} parent=5 // pred_check
        %p242 = pneg %p241
      $region38: #{tpu_custom_call.1} parent=5 // pred_check_branch
        %244 = sbr.rel (%p242) target = $region40
      $region39: #{tpu_custom_call.1} parent=5 // pred_region
        // Predicated region
        $region41: #{tpu_custom_call.1} parent=39 // pred_check
          %p245 = pneg %p48
        $region42: #{tpu_custom_call.1} parent=39 // pred_check_branch
          %247 = sbr.rel (%p245) target = $region44
        $region43: #{tpu_custom_call.1} parent=39 // pred_region
          %p248 = scmp.lt.s32.totalorder %s23, 1
          %s249 = scalar_select %p248, %s23, 1
          %s250 = smul.addr %s249, 80
          %s251 = smul.addr %s250, 4
          %s252 = scalar_lea.vmem %s0, %s251
        $region44: #{tpu_custom_call.1} parent=39 // pred_fallthru
          _
      $region40: #{tpu_custom_call.1} parent=5 // pred_fallthru
        _
      %p253 = scmp.le.s32.totalorder 1, %s16
      %p254 = scmp.lt.s32.totalorder %s16, 5
      %p255 = pnand %p253, %p254
      %p256 = pneg %p255
      // Predicated region
      $region45: #{tpu_custom_call.1} parent=5 // pred_check
        _
      $region46: #{tpu_custom_call.1} parent=5 // pred_check_branch
        %258 = sbr.rel (%p255) target = $region48
      $region47: #{tpu_custom_call.1} parent=5 // pred_region
        %s259 = ssub.s32 %s16, 1
        %p260 = scmp.lt.s32.totalorder %s25, 1
        %s261 = scalar_select %p260, %s25, 1
        %s262 = smul.addr %s261, 80
        %s263 = smul.addr %s262, 4
        %s264 = scalar_lea.vmem %s0, %s263
        %p265 = pneg %p54
        %p266 = pneg %p51
        %p267 = pneg %p75
        %p268 = pneg %p72
        %p269 = pneg %p96
        %p270 = pneg %p93
        %p271 = pneg %p117
        %p272 = pneg %p114
        %p273 = pneg %p138
        %p274 = pneg %p135
        %p275 = pneg %p159
        %p276 = pneg %p156
        %p277 = pneg %p180
        %p278 = pneg %p177
        %p279 = pneg %p208
        %p280 = pneg %p205
        %s281 = sand.u32 %s195, 1
        %s282 = scalar_lea.sflag [#allocation5], %s281
        %s283 = sand.u32 %s195, 1
        %s284 = smul.addr %s283, 128
        %s285 = scalar_lea.vmem [#allocation4], %s284
        %p286 = scmp.lt.s32.totalorder %s25, 1
        %s287 = scalar_select %p286, %s25, 1
        %s288 = smul.addr %s287, 80
        %s289 = smul.addr %s288, 4
        %s290 = scalar_lea.vmem %s0, %s289
        %s291 = smul.u32 8, %s26
        %s293 = smul.u32 %s26, 8
        %s294 = smul.u32 %s293, 4
        %s295 = smul.addr %s294, 4
        %s296 = scalar_lea.vmem %s290, %s295
        %v297 = vld [vmem:[%s296] sm:$0xf]
        %v298 = vld [vmem:[%s296 + $0x4] sm:$0xf]
        %v299 = vld [vmem:[%s296 + $0x8] sm:$0xf]
        %v300 = vld [vmem:[%s296 + $0xc] sm:$0x1]
        %v301 = vld [vmem:[%s296 + $0x10] sm:$0xf]
        %v302 = vld [vmem:[%s296 + $0x14] sm:$0xf]
        %v303 = vld [vmem:[%s296 + $0x18] sm:$0xf]
        %v304 = vld [vmem:[%s296 + $0x1c] sm:$0x1]
        %v305 = vld [vmem:[%s296 + $0x20] sm:$0xf]
        %v306 = vld [vmem:[%s296 + $0x24] sm:$0xf]
        %v307 = vld [vmem:[%s296 + $0x28] sm:$0xf]
        %v308 = vld [vmem:[%s296 + $0x2c] sm:$0x1]
        %v309 = vld [vmem:[%s296 + $0x30] sm:$0xf]
        %v310 = vld [vmem:[%s296 + $0x34] sm:$0xf]
        %v311 = vld [vmem:[%s296 + $0x38] sm:$0xf]
        %v312 = vld [vmem:[%s296 + $0x3c] sm:$0x1]
        %v313 = vld [vmem:[%s296 + $0x40] sm:$0xf]
        %v314 = vld [vmem:[%s296 + $0x44] sm:$0xf]
        %v315 = vld [vmem:[%s296 + $0x48] sm:$0xf]
        %v316 = vld [vmem:[%s296 + $0x4c] sm:$0x1]
        %v317 = vld [vmem:[%s296 + $0x50] sm:$0xf]
        %v318 = vld [vmem:[%s296 + $0x54] sm:$0xf]
        %v319 = vld [vmem:[%s296 + $0x58] sm:$0xf]
        %v320 = vld [vmem:[%s296 + $0x5c] sm:$0x1]
        %v321 = vld [vmem:[%s296 + $0x60] sm:$0xf]
        %v322 = vld [vmem:[%s296 + $0x64] sm:$0xf]
        %v323 = vld [vmem:[%s296 + $0x68] sm:$0xf]
        %v324 = vld [vmem:[%s296 + $0x6c] sm:$0x1]
        %v325 = vld [vmem:[%s296 + $0x70] sm:$0xf]
        %v326 = vld [vmem:[%s296 + $0x74] sm:$0xf]
        %v327 = vld [vmem:[%s296 + $0x78] sm:$0xf]
        %v328 = vld [vmem:[%s296 + $0x7c] sm:$0x1]
        %v329 = vld [vmem:[%s296 + $0x80] sm:$0xf]
        %v330 = vld [vmem:[%s296 + $0x84] sm:$0xf]
        %v331 = vld [vmem:[%s296 + $0x88] sm:$0xf]
        %v332 = vld [vmem:[%s296 + $0x8c] sm:$0x1]
        %v333 = vld [vmem:[%s296 + $0x90] sm:$0xf]
        %v334 = vld [vmem:[%s296 + $0x94] sm:$0xf]
        %v335 = vld [vmem:[%s296 + $0x98] sm:$0xf]
        %v336 = vld [vmem:[%s296 + $0x9c] sm:$0x1]
        %v337 = vld [vmem:[%s296 + $0xa0] sm:$0xf]
        %v338 = vld [vmem:[%s296 + $0xa4] sm:$0xf]
        %v339 = vld [vmem:[%s296 + $0xa8] sm:$0xf]
        %v340 = vld [vmem:[%s296 + $0xac] sm:$0x1]
        %v341 = vld [vmem:[%s296 + $0xb0] sm:$0xf]
        %v342 = vld [vmem:[%s296 + $0xb4] sm:$0xf]
        %v343 = vld [vmem:[%s296 + $0xb8] sm:$0xf]
        %v344 = vld [vmem:[%s296 + $0xbc] sm:$0x1]
        %v375 = vunpack.c.l.b16 %v297
        %v376 = vunpack.c.l.b16 %v298
        %v377 = vunpack.c.l.b16 %v299
        %v378 = vunpack.c.l.b16 %v301
        %v379 = vunpack.c.l.b16 %v302
        %v380 = vunpack.c.l.b16 %v303
        %v381 = vunpack.c.l.b16 %v305
        %v382 = vunpack.c.l.b16 %v306
        %v383 = vunpack.c.l.b16 %v307
        %v384 = vunpack.c.l.b16 %v309
        %v385 = vunpack.c.l.b16 %v310
        %v386 = vunpack.c.l.b16 %v311
        %v387 = vunpack.c.l.b16 %v313
        %v388 = vunpack.c.l.b16 %v314
        %v389 = vunpack.c.l.b16 %v315
        %v390 = vunpack.c.l.b16 %v317
        %v391 = vunpack.c.l.b16 %v318
        %v392 = vunpack.c.l.b16 %v319
        %v393 = vunpack.c.l.b16 %v321
        %v394 = vunpack.c.l.b16 %v322
        %v395 = vunpack.c.l.b16 %v323
        %v396 = vunpack.c.l.b16 %v325
        %v397 = vunpack.c.l.b16 %v326
        %v398 = vunpack.c.l.b16 %v327
        %v399 = vunpack.c.l.b16 %v329
        %v400 = vunpack.c.l.b16 %v330
        %v401 = vunpack.c.l.b16 %v331
        %v402 = vunpack.c.l.b16 %v333
        %v403 = vunpack.c.l.b16 %v334
        %v404 = vunpack.c.l.b16 %v335
        %v405 = vpack.c.b16 %v376, %v375
        %v406 = vpack.c.b16 %v378, %v377
        %v407 = vpack.c.b16 %v380, %v379
        %v408 = vpack.c.b16 %v382, %v381
        %v409 = vpack.c.b16 %v384, %v383
        %v410 = vpack.c.b16 %v386, %v385
        %v411 = vpack.c.b16 %v388, %v387
        %v412 = vpack.c.b16 %v390, %v389
        %v413 = vpack.c.b16 %v392, %v391
        %v414 = vpack.c.b16 %v394, %v393
        %v415 = vpack.c.b16 %v396, %v395
        %v416 = vpack.c.b16 %v398, %v397
        %v417 = vpack.c.b16 %v400, %v399
        %v418 = vpack.c.b16 %v402, %v401
        %v419 = vpack.c.b16 %v404, %v403
        %vm435 = vcmask 23552
        %436 = vst.msk [vmem:[#allocation2] sm:$0xff] %vm435, %v405
        %437 = vst.msk [vmem:[#allocation2 + $0x8] sm:$0xff] %vm435, %v406
        %438 = vst.msk [vmem:[#allocation2 + $0x10] sm:$0xff] %vm435, %v407
        %439 = vst.msk [vmem:[#allocation2 + $0x18] sm:$0xff] %vm435, %v408
        %440 = vst.msk [vmem:[#allocation2 + $0x20] sm:$0xff] %vm435, %v409
        %441 = vst.msk [vmem:[#allocation2 + $0x28] sm:$0xff] %vm435, %v410
        %442 = vst.msk [vmem:[#allocation2 + $0x30] sm:$0xff] %vm435, %v411
        %443 = vst.msk [vmem:[#allocation2 + $0x38] sm:$0xff] %vm435, %v412
        %444 = vst.msk [vmem:[#allocation2 + $0x40] sm:$0xff] %vm435, %v413
        %445 = vst.msk [vmem:[#allocation2 + $0x48] sm:$0xff] %vm435, %v414
        %446 = vst.msk [vmem:[#allocation2 + $0x50] sm:$0xff] %vm435, %v415
        %447 = vst.msk [vmem:[#allocation2 + $0x58] sm:$0xff] %vm435, %v416
        %448 = vst.msk [vmem:[#allocation2 + $0x60] sm:$0xff] %vm435, %v417
        %449 = vst.msk [vmem:[#allocation2 + $0x68] sm:$0xff] %vm435, %v418
        %450 = vst.msk [vmem:[#allocation2 + $0x70] sm:$0xff] %vm435, %v419
        %vm451 = vsmask.f32 3328
        %vm452 = vsmask.f32 7440
        %vm453 = vmor %vm451, %vm452
        %v455 = vshrl.u32 %v297, 16
        %v457 = vrot.slane %v455, 4
        %v458 = vshll.u32 %v297, 16
        %v460 = vrot.slane %v458, 5
        %v461 = vor.u32 %v457, %v460
        %v462 = vrot.slane %v461, 4
        %v464 = vshll.u32 %v298, 16
        %v466 = vrot.slane %v464, 5
        %v467 = vsel %vm453, %v462, %v466
        %v468 = vshrl.u32 %v298, 16
        %v470 = vrot.slane %v468, 4
        %v471 = vor.u32 %v470, %v466
        %v472 = vrot.slane %v471, 4
        %v474 = vshll.u32 %v299, 16
        %v476 = vrot.slane %v474, 5
        %v477 = vsel %vm453, %v472, %v476
        %v478 = vshrl.u32 %v299, 16
        %v480 = vrot.slane %v478, 4
        %v481 = vor.u32 %v480, %v476
        %v482 = vrot.slane %v481, 4
        %v484 = vshll.u32 %v300, 16
        %v486 = vrot.slane %v484, 5
        %v487 = vsel %vm453, %v482, %v486
        %v489 = vshrl.u32 %v301, 16
        %v491 = vrot.slane %v489, 4
        %v492 = vshll.u32 %v301, 16
        %v494 = vrot.slane %v492, 5
        %v495 = vor.u32 %v491, %v494
        %v496 = vrot.slane %v495, 4
        %v498 = vshll.u32 %v302, 16
        %v500 = vrot.slane %v498, 5
        %v501 = vsel %vm453, %v496, %v500
        %v502 = vshrl.u32 %v302, 16
        %v504 = vrot.slane %v502, 4
        %v505 = vor.u32 %v504, %v500
        %v506 = vrot.slane %v505, 4
        %v508 = vshll.u32 %v303, 16
        %v510 = vrot.slane %v508, 5
        %v511 = vsel %vm453, %v506, %v510
        %v512 = vshrl.u32 %v303, 16
        %v514 = vrot.slane %v512, 4
        %v515 = vor.u32 %v514, %v510
        %v516 = vrot.slane %v515, 4
        %v518 = vshll.u32 %v304, 16
        %v520 = vrot.slane %v518, 5
        %v521 = vsel %vm453, %v516, %v520
        %v523 = vshrl.u32 %v305, 16
        %v525 = vrot.slane %v523, 4
        %v526 = vshll.u32 %v305, 16
        %v528 = vrot.slane %v526, 5
        %v529 = vor.u32 %v525, %v528
        %v530 = vrot.slane %v529, 4
        %v532 = vshll.u32 %v306, 16
        %v534 = vrot.slane %v532, 5
        %v535 = vsel %vm453, %v530, %v534
        %v536 = vshrl.u32 %v306, 16
        %v538 = vrot.slane %v536, 4
        %v539 = vor.u32 %v538, %v534
        %v540 = vrot.slane %v539, 4
        %v542 = vshll.u32 %v307, 16
        %v544 = vrot.slane %v542, 5
        %v545 = vsel %vm453, %v540, %v544
        %v546 = vshrl.u32 %v307, 16
        %v548 = vrot.slane %v546, 4
        %v549 = vor.u32 %v548, %v544
        %v550 = vrot.slane %v549, 4
        %v552 = vshll.u32 %v308, 16
        %v554 = vrot.slane %v552, 5
        %v555 = vsel %vm453, %v550, %v554
        %v557 = vshrl.u32 %v309, 16
        %v559 = vrot.slane %v557, 4
        %v560 = vshll.u32 %v309, 16
        %v562 = vrot.slane %v560, 5
        %v563 = vor.u32 %v559, %v562
        %v564 = vrot.slane %v563, 4
        %v566 = vshll.u32 %v310, 16
        %v568 = vrot.slane %v566, 5
        %v569 = vsel %vm453, %v564, %v568
        %v570 = vshrl.u32 %v310, 16
        %v572 = vrot.slane %v570, 4
        %v573 = vor.u32 %v572, %v568
        %v574 = vrot.slane %v573, 4
        %v576 = vshll.u32 %v311, 16
        %v578 = vrot.slane %v576, 5
        %v579 = vsel %vm453, %v574, %v578
        %v580 = vshrl.u32 %v311, 16
        %v582 = vrot.slane %v580, 4
        %v583 = vor.u32 %v582, %v578
        %v584 = vrot.slane %v583, 4
        %v586 = vshll.u32 %v312, 16
        %v588 = vrot.slane %v586, 5
        %v589 = vsel %vm453, %v584, %v588
        %v591 = vshrl.u32 %v313, 16
        %v593 = vrot.slane %v591, 4
        %v594 = vshll.u32 %v313, 16
        %v596 = vrot.slane %v594, 5
        %v597 = vor.u32 %v593, %v596
        %v598 = vrot.slane %v597, 4
        %v600 = vshll.u32 %v314, 16
        %v602 = vrot.slane %v600, 5
        %v603 = vsel %vm453, %v598, %v602
        %v604 = vshrl.u32 %v314, 16
        %v606 = vrot.slane %v604, 4
        %v607 = vor.u32 %v606, %v602
        %v608 = vrot.slane %v607, 4
        %v610 = vshll.u32 %v315, 16
        %v612 = vrot.slane %v610, 5
        %v613 = vsel %vm453, %v608, %v612
        %v614 = vshrl.u32 %v315, 16
        %v616 = vrot.slane %v614, 4
        %v617 = vor.u32 %v616, %v612
        %v618 = vrot.slane %v617, 4
        %v620 = vshll.u32 %v316, 16
        %v622 = vrot.slane %v620, 5
        %v623 = vsel %vm453, %v618, %v622
        %v625 = vshrl.u32 %v317, 16
        %v627 = vrot.slane %v625, 4
        %v628 = vshll.u32 %v317, 16
        %v630 = vrot.slane %v628, 5
        %v631 = vor.u32 %v627, %v630
        %v632 = vrot.slane %v631, 4
        %v634 = vshll.u32 %v318, 16
        %v636 = vrot.slane %v634, 5
        %v637 = vsel %vm453, %v632, %v636
        %v638 = vshrl.u32 %v318, 16
        %v640 = vrot.slane %v638, 4
        %v641 = vor.u32 %v640, %v636
        %v642 = vrot.slane %v641, 4
        %v644 = vshll.u32 %v319, 16
        %v646 = vrot.slane %v644, 5
        %v647 = vsel %vm453, %v642, %v646
        %v648 = vshrl.u32 %v319, 16
        %v650 = vrot.slane %v648, 4
        %v651 = vor.u32 %v650, %v646
        %v652 = vrot.slane %v651, 4
        %v654 = vshll.u32 %v320, 16
        %v656 = vrot.slane %v654, 5
        %v657 = vsel %vm453, %v652, %v656
        %v659 = vshrl.u32 %v321, 16
        %v661 = vrot.slane %v659, 4
        %v662 = vshll.u32 %v321, 16
        %v664 = vrot.slane %v662, 5
        %v665 = vor.u32 %v661, %v664
        %v666 = vrot.slane %v665, 4
        %v668 = vshll.u32 %v322, 16
        %v670 = vrot.slane %v668, 5
        %v671 = vsel %vm453, %v666, %v670
        %v672 = vshrl.u32 %v322, 16
        %v674 = vrot.slane %v672, 4
        %v675 = vor.u32 %v674, %v670
        %v676 = vrot.slane %v675, 4
        %v678 = vshll.u32 %v323, 16
        %v680 = vrot.slane %v678, 5
        %v681 = vsel %vm453, %v676, %v680
        %v682 = vshrl.u32 %v323, 16
        %v684 = vrot.slane %v682, 4
        %v685 = vor.u32 %v684, %v680
        %v686 = vrot.slane %v685, 4
        %v688 = vshll.u32 %v324, 16
        %v690 = vrot.slane %v688, 5
        %v691 = vsel %vm453, %v686, %v690
        %v693 = vshrl.u32 %v325, 16
        %v695 = vrot.slane %v693, 4
        %v696 = vshll.u32 %v325, 16
        %v698 = vrot.slane %v696, 5
        %v699 = vor.u32 %v695, %v698
        %v700 = vrot.slane %v699, 4
        %v702 = vshll.u32 %v326, 16
        %v704 = vrot.slane %v702, 5
        %v705 = vsel %vm453, %v700, %v704
        %v706 = vshrl.u32 %v326, 16
        %v708 = vrot.slane %v706, 4
        %v709 = vor.u32 %v708, %v704
        %v710 = vrot.slane %v709, 4
        %v712 = vshll.u32 %v327, 16
        %v714 = vrot.slane %v712, 5
        %v715 = vsel %vm453, %v710, %v714
        %v716 = vshrl.u32 %v327, 16
        %v718 = vrot.slane %v716, 4
        %v719 = vor.u32 %v718, %v714
        %v720 = vrot.slane %v719, 4
        %v722 = vshll.u32 %v328, 16
        %v724 = vrot.slane %v722, 5
        %v725 = vsel %vm453, %v720, %v724
        %v727 = vshrl.u32 %v329, 16
        %v729 = vrot.slane %v727, 4
        %v730 = vshll.u32 %v329, 16
        %v732 = vrot.slane %v730, 5
        %v733 = vor.u32 %v729, %v732
        %v734 = vrot.slane %v733, 4
        %v736 = vshll.u32 %v330, 16
        %v738 = vrot.slane %v736, 5
        %v739 = vsel %vm453, %v734, %v738
        %v740 = vshrl.u32 %v330, 16
        %v742 = vrot.slane %v740, 4
        %v743 = vor.u32 %v742, %v738
        %v744 = vrot.slane %v743, 4
        %v746 = vshll.u32 %v331, 16
        %v748 = vrot.slane %v746, 5
        %v749 = vsel %vm453, %v744, %v748
        %v750 = vshrl.u32 %v331, 16
        %v752 = vrot.slane %v750, 4
        %v753 = vor.u32 %v752, %v748
        %v754 = vrot.slane %v753, 4
        %v756 = vshll.u32 %v332, 16
        %v758 = vrot.slane %v756, 5
        %v759 = vsel %vm453, %v754, %v758
        %v761 = vshrl.u32 %v333, 16
        %v763 = vrot.slane %v761, 4
        %v764 = vshll.u32 %v333, 16
        %v766 = vrot.slane %v764, 5
        %v767 = vor.u32 %v763, %v766
        %v768 = vrot.slane %v767, 4
        %v770 = vshll.u32 %v334, 16
        %v772 = vrot.slane %v770, 5
        %v773 = vsel %vm453, %v768, %v772
        %v774 = vshrl.u32 %v334, 16
        %v776 = vrot.slane %v774, 4
        %v777 = vor.u32 %v776, %v772
        %v778 = vrot.slane %v777, 4
        %v780 = vshll.u32 %v335, 16
        %v782 = vrot.slane %v780, 5
        %v783 = vsel %vm453, %v778, %v782
        %v784 = vshrl.u32 %v335, 16
        %v786 = vrot.slane %v784, 4
        %v787 = vor.u32 %v786, %v782
        %v788 = vrot.slane %v787, 4
        %v790 = vshll.u32 %v336, 16
        %v792 = vrot.slane %v790, 5
        %v793 = vsel %vm453, %v788, %v792
        %v794 = vunpack.c.l.b16 %v467
        %v795 = vunpack.c.l.b16 %v477
        %v796 = vunpack.c.l.b16 %v487
        %v797 = vunpack.c.l.b16 %v501
        %v798 = vunpack.c.l.b16 %v511
        %v799 = vunpack.c.l.b16 %v521
        %v800 = vunpack.c.l.b16 %v535
        %v801 = vunpack.c.l.b16 %v545
        %v802 = vunpack.c.l.b16 %v555
        %v803 = vunpack.c.l.b16 %v569
        %v804 = vunpack.c.l.b16 %v579
        %v805 = vunpack.c.l.b16 %v589
        %v806 = vunpack.c.l.b16 %v603
        %v807 = vunpack.c.l.b16 %v613
        %v808 = vunpack.c.l.b16 %v623
        %v809 = vunpack.c.l.b16 %v637
        %v810 = vunpack.c.l.b16 %v647
        %v811 = vunpack.c.l.b16 %v657
        %v812 = vunpack.c.l.b16 %v671
        %v813 = vunpack.c.l.b16 %v681
        %v814 = vunpack.c.l.b16 %v691
        %v815 = vunpack.c.l.b16 %v705
        %v816 = vunpack.c.l.b16 %v715
        %v817 = vunpack.c.l.b16 %v725
        %v818 = vunpack.c.l.b16 %v739
        %v819 = vunpack.c.l.b16 %v749
        %v820 = vunpack.c.l.b16 %v759
        %v821 = vunpack.c.l.b16 %v773
        %v822 = vunpack.c.l.b16 %v783
        %v823 = vunpack.c.l.b16 %v793
        %v824 = vpack.c.b16 %v795, %v794
        %v825 = vpack.c.b16 %v797, %v796
        %v826 = vpack.c.b16 %v799, %v798
        %v827 = vpack.c.b16 %v801, %v800
        %v828 = vpack.c.b16 %v803, %v802
        %v829 = vpack.c.b16 %v805, %v804
        %v830 = vpack.c.b16 %v807, %v806
        %v831 = vpack.c.b16 %v809, %v808
        %v832 = vpack.c.b16 %v811, %v810
        %v833 = vpack.c.b16 %v813, %v812
        %v834 = vpack.c.b16 %v815, %v814
        %v835 = vpack.c.b16 %v817, %v816
        %v836 = vpack.c.b16 %v819, %v818
        %v837 = vpack.c.b16 %v821, %v820
        %v838 = vpack.c.b16 %v823, %v822
        %839 = vrot.lane.b32.xlu0 %v824, 3
        %v840 = vpop.permute.xlu0 %839
        %841 = vrot.lane.b32.xlu0 %v825, 3
        %v842 = vpop.permute.xlu0 %841
        %843 = vrot.lane.b32.xlu0 %v826, 3
        %v844 = vpop.permute.xlu0 %843
        %845 = vrot.lane.b32.xlu0 %v827, 3
        %v846 = vpop.permute.xlu0 %845
        %847 = vrot.lane.b32.xlu0 %v828, 3
        %v848 = vpop.permute.xlu0 %847
        %849 = vrot.lane.b32.xlu0 %v829, 3
        %v850 = vpop.permute.xlu0 %849
        %851 = vrot.lane.b32.xlu0 %v830, 3
        %v852 = vpop.permute.xlu0 %851
        %853 = vrot.lane.b32.xlu0 %v831, 3
        %v854 = vpop.permute.xlu0 %853
        %855 = vrot.lane.b32.xlu0 %v832, 3
        %v856 = vpop.permute.xlu0 %855
        %857 = vrot.lane.b32.xlu0 %v833, 3
        %v858 = vpop.permute.xlu0 %857
        %859 = vrot.lane.b32.xlu0 %v834, 3
        %v860 = vpop.permute.xlu0 %859
        %861 = vrot.lane.b32.xlu0 %v835, 3
        %v862 = vpop.permute.xlu0 %861
        %863 = vrot.lane.b32.xlu0 %v836, 3
        %v864 = vpop.permute.xlu0 %863
        %865 = vrot.lane.b32.xlu0 %v837, 3
        %v866 = vpop.permute.xlu0 %865
        %867 = vrot.lane.b32.xlu0 %v838, 3
        %v868 = vpop.permute.xlu0 %867
        %vm884 = vcmask 48152
        %885 = vst.msk [vmem:[#allocation2] sm:$0xff] %vm884, %v840
        %886 = vst.msk [vmem:[#allocation2 + $0x8] sm:$0xff] %vm884, %v842
        %887 = vst.msk [vmem:[#allocation2 + $0x10] sm:$0xff] %vm884, %v844
        %888 = vst.msk [vmem:[#allocation2 + $0x18] sm:$0xff] %vm884, %v846
        %889 = vst.msk [vmem:[#allocation2 + $0x20] sm:$0xff] %vm884, %v848
        %890 = vst.msk [vmem:[#allocation2 + $0x28] sm:$0xff] %vm884, %v850
        %891 = vst.msk [vmem:[#allocation2 + $0x30] sm:$0xff] %vm884, %v852
        %892 = vst.msk [vmem:[#allocation2 + $0x38] sm:$0xff] %vm884, %v854
        %893 = vst.msk [vmem:[#allocation2 + $0x40] sm:$0xff] %vm884, %v856
        %894 = vst.msk [vmem:[#allocation2 + $0x48] sm:$0xff] %vm884, %v858
        %895 = vst.msk [vmem:[#allocation2 + $0x50] sm:$0xff] %vm884, %v860
        %896 = vst.msk [vmem:[#allocation2 + $0x58] sm:$0xff] %vm884, %v862
        %897 = vst.msk [vmem:[#allocation2 + $0x60] sm:$0xff] %vm884, %v864
        %898 = vst.msk [vmem:[#allocation2 + $0x68] sm:$0xff] %vm884, %v866
        %899 = vst.msk [vmem:[#allocation2 + $0x70] sm:$0xff] %vm884, %v868
        %vm910 = vcmask 1042432
        %vm911 = vcmask 1046532
        %vm912 = vmor %vm910, %vm911
        %v913 = vrot.slane %v297, 5
        %v914 = vrot.slane %v913, 4
        %v915 = vrot.slane %v298, 5
        %v916 = vsel %vm912, %v914, %v915
        %v917 = vrot.slane %v915, 4
        %v918 = vrot.slane %v299, 5
        %v919 = vsel %vm912, %v917, %v918
        %v920 = vrot.slane %v918, 4
        %v921 = vrot.slane %v300, 5
        %v922 = vsel %vm912, %v920, %v921
        %v923 = vrot.slane %v301, 5
        %v924 = vrot.slane %v923, 4
        %v925 = vrot.slane %v302, 5
        %v926 = vsel %vm912, %v924, %v925
        %v927 = vrot.slane %v925, 4
        %v928 = vrot.slane %v303, 5
        %v929 = vsel %vm912, %v927, %v928
        %v930 = vrot.slane %v928, 4
        %v931 = vrot.slane %v304, 5
        %v932 = vsel %vm912, %v930, %v931
        %v933 = vrot.slane %v305, 5
        %v934 = vrot.slane %v933, 4
        %v935 = vrot.slane %v306, 5
        %v936 = vsel %vm912, %v934, %v935
        %v937 = vrot.slane %v935, 4
        %v938 = vrot.slane %v307, 5
        %v939 = vsel %vm912, %v937, %v938
        %v940 = vrot.slane %v938, 4
        %v941 = vrot.slane %v308, 5
        %v942 = vsel %vm912, %v940, %v941
        %v943 = vrot.slane %v309, 5
        %v944 = vrot.slane %v943, 4
        %v945 = vrot.slane %v310, 5
        %v946 = vsel %vm912, %v944, %v945
        %v947 = vrot.slane %v945, 4
        %v948 = vrot.slane %v311, 5
        %v949 = vsel %vm912, %v947, %v948
        %v950 = vrot.slane %v948, 4
        %v951 = vrot.slane %v312, 5
        %v952 = vsel %vm912, %v950, %v951
        %v953 = vrot.slane %v313, 5
        %v954 = vrot.slane %v953, 4
        %v955 = vrot.slane %v314, 5
        %v956 = vsel %vm912, %v954, %v955
        %v957 = vrot.slane %v955, 4
        %v958 = vrot.slane %v315, 5
        %v959 = vsel %vm912, %v957, %v958
        %v960 = vrot.slane %v958, 4
        %v961 = vrot.slane %v316, 5
        %v962 = vsel %vm912, %v960, %v961
        %v963 = vrot.slane %v317, 5
        %v964 = vrot.slane %v963, 4
        %v965 = vrot.slane %v318, 5
        %v966 = vsel %vm912, %v964, %v965
        %v967 = vrot.slane %v965, 4
        %v968 = vrot.slane %v319, 5
        %v969 = vsel %vm912, %v967, %v968
        %v970 = vrot.slane %v968, 4
        %v971 = vrot.slane %v320, 5
        %v972 = vsel %vm912, %v970, %v971
        %v973 = vrot.slane %v321, 5
        %v974 = vrot.slane %v973, 4
        %v975 = vrot.slane %v322, 5
        %v976 = vsel %vm912, %v974, %v975
        %v977 = vrot.slane %v975, 4
        %v978 = vrot.slane %v323, 5
        %v979 = vsel %vm912, %v977, %v978
        %v980 = vrot.slane %v978, 4
        %v981 = vrot.slane %v324, 5
        %v982 = vsel %vm912, %v980, %v981
        %v983 = vrot.slane %v325, 5
        %v984 = vrot.slane %v983, 4
        %v985 = vrot.slane %v326, 5
        %v986 = vsel %vm912, %v984, %v985
        %v987 = vrot.slane %v985, 4
        %v988 = vrot.slane %v327, 5
        %v989 = vsel %vm912, %v987, %v988
        %v990 = vrot.slane %v988, 4
        %v991 = vrot.slane %v328, 5
        %v992 = vsel %vm912, %v990, %v991
        %v993 = vrot.slane %v329, 5
        %v994 = vrot.slane %v993, 4
        %v995 = vrot.slane %v330, 5
        %v996 = vsel %vm912, %v994, %v995
        %v997 = vrot.slane %v995, 4
        %v998 = vrot.slane %v331, 5
        %v999 = vsel %vm912, %v997, %v998
        %v1000 = vrot.slane %v998, 4
        %v1001 = vrot.slane %v332, 5
        %v1002 = vsel %vm912, %v1000, %v1001
        %v1003 = vrot.slane %v333, 5
        %v1004 = vrot.slane %v1003, 4
        %v1005 = vrot.slane %v334, 5
        %v1006 = vsel %vm912, %v1004, %v1005
        %v1007 = vrot.slane %v1005, 4
        %v1008 = vrot.slane %v335, 5
        %v1009 = vsel %vm912, %v1007, %v1008
        %v1010 = vrot.slane %v1008, 4
        %v1011 = vrot.slane %v336, 5
        %v1012 = vsel %vm912, %v1010, %v1011
        %v1013 = vunpack.c.l.b16 %v916
        %v1014 = vunpack.c.l.b16 %v919
        %v1015 = vunpack.c.l.b16 %v922
        %v1016 = vunpack.c.l.b16 %v926
        %v1017 = vunpack.c.l.b16 %v929
        %v1018 = vunpack.c.l.b16 %v932
        %v1019 = vunpack.c.l.b16 %v936
        %v1020 = vunpack.c.l.b16 %v939
        %v1021 = vunpack.c.l.b16 %v942
        %v1022 = vunpack.c.l.b16 %v946
        %v1023 = vunpack.c.l.b16 %v949
        %v1024 = vunpack.c.l.b16 %v952
        %v1025 = vunpack.c.l.b16 %v956
        %v1026 = vunpack.c.l.b16 %v959
        %v1027 = vunpack.c.l.b16 %v962
        %v1028 = vunpack.c.l.b16 %v966
        %v1029 = vunpack.c.l.b16 %v969
        %v1030 = vunpack.c.l.b16 %v972
        %v1031 = vunpack.c.l.b16 %v976
        %v1032 = vunpack.c.l.b16 %v979
        %v1033 = vunpack.c.l.b16 %v982
        %v1034 = vunpack.c.l.b16 %v986
        %v1035 = vunpack.c.l.b16 %v989
        %v1036 = vunpack.c.l.b16 %v992
        %v1037 = vunpack.c.l.b16 %v996
        %v1038 = vunpack.c.l.b16 %v999
        %v1039 = vunpack.c.l.b16 %v1002
        %v1040 = vunpack.c.l.b16 %v1006
        %v1041 = vunpack.c.l.b16 %v1009
        %v1042 = vunpack.c.l.b16 %v1012
        %v1043 = vpack.c.b16 %v1014, %v1013
        %v1044 = vpack.c.b16 %v1016, %v1015
        %v1045 = vpack.c.b16 %v1018, %v1017
        %v1046 = vpack.c.b16 %v1020, %v1019
        %v1047 = vpack.c.b16 %v1022, %v1021
        %v1048 = vpack.c.b16 %v1024, %v1023
        %v1049 = vpack.c.b16 %v1026, %v1025
        %v1050 = vpack.c.b16 %v1028, %v1027
        %v1051 = vpack.c.b16 %v1030, %v1029
        %v1052 = vpack.c.b16 %v1032, %v1031
        %v1053 = vpack.c.b16 %v1034, %v1033
        %v1054 = vpack.c.b16 %v1036, %v1035
        %v1055 = vpack.c.b16 %v1038, %v1037
        %v1056 = vpack.c.b16 %v1040, %v1039
        %v1057 = vpack.c.b16 %v1042, %v1041
        %1058 = vrot.lane.b32.xlu0 %v1043, 6
        %v1059 = vpop.permute.xlu0 %1058
        %1060 = vrot.lane.b32.xlu0 %v1044, 6
        %v1061 = vpop.permute.xlu0 %1060
        %1062 = vrot.lane.b32.xlu0 %v1045, 6
        %v1063 = vpop.permute.xlu0 %1062
        %1064 = vrot.lane.b32.xlu0 %v1046, 6
        %v1065 = vpop.permute.xlu0 %1064
        %1066 = vrot.lane.b32.xlu0 %v1047, 6
        %v1067 = vpop.permute.xlu0 %1066
        %1068 = vrot.lane.b32.xlu0 %v1048, 6
        %v1069 = vpop.permute.xlu0 %1068
        %1070 = vrot.lane.b32.xlu0 %v1049, 6
        %v1071 = vpop.permute.xlu0 %1070
        %1072 = vrot.lane.b32.xlu0 %v1050, 6
        %v1073 = vpop.permute.xlu0 %1072
        %1074 = vrot.lane.b32.xlu0 %v1051, 6
        %v1075 = vpop.permute.xlu0 %1074
        %1076 = vrot.lane.b32.xlu0 %v1052, 6
        %v1077 = vpop.permute.xlu0 %1076
        %1078 = vrot.lane.b32.xlu0 %v1053, 6
        %v1079 = vpop.permute.xlu0 %1078
        %1080 = vrot.lane.b32.xlu0 %v1054, 6
        %v1081 = vpop.permute.xlu0 %1080
        %1082 = vrot.lane.b32.xlu0 %v1055, 6
        %v1083 = vpop.permute.xlu0 %1082
        %1084 = vrot.lane.b32.xlu0 %v1056, 6
        %v1085 = vpop.permute.xlu0 %1084
        %1086 = vrot.lane.b32.xlu0 %v1057, 6
        %v1087 = vpop.permute.xlu0 %1086
        %vm1103 = vcmask 72752
        %1104 = vst.msk [vmem:[#allocation2] sm:$0xff] %vm1103, %v1059
        %1105 = vst.msk [vmem:[#allocation2 + $0x8] sm:$0xff] %vm1103, %v1061
        %1106 = vst.msk [vmem:[#allocation2 + $0x10] sm:$0xff] %vm1103, %v1063
        %1107 = vst.msk [vmem:[#allocation2 + $0x18] sm:$0xff] %vm1103, %v1065
        %1108 = vst.msk [vmem:[#allocation2 + $0x20] sm:$0xff] %vm1103, %v1067
        %1109 = vst.msk [vmem:[#allocation2 + $0x28] sm:$0xff] %vm1103, %v1069
        %1110 = vst.msk [vmem:[#allocation2 + $0x30] sm:$0xff] %vm1103, %v1071
        %1111 = vst.msk [vmem:[#allocation2 + $0x38] sm:$0xff] %vm1103, %v1073
        %1112 = vst.msk [vmem:[#allocation2 + $0x40] sm:$0xff] %vm1103, %v1075
        %1113 = vst.msk [vmem:[#allocation2 + $0x48] sm:$0xff] %vm1103, %v1077
        %1114 = vst.msk [vmem:[#allocation2 + $0x50] sm:$0xff] %vm1103, %v1079
        %1115 = vst.msk [vmem:[#allocation2 + $0x58] sm:$0xff] %vm1103, %v1081
        %1116 = vst.msk [vmem:[#allocation2 + $0x60] sm:$0xff] %vm1103, %v1083
        %1117 = vst.msk [vmem:[#allocation2 + $0x68] sm:$0xff] %vm1103, %v1085
        %1118 = vst.msk [vmem:[#allocation2 + $0x70] sm:$0xff] %vm1103, %v1087
        %v1122 = vunpack.c.l.b16 %v337
        %v1123 = vunpack.c.l.b16 %v338
        %v1124 = vunpack.c.l.b16 %v339
        %v1125 = vpack.c.b16 %v379, %v378
        %v1126 = vpack.c.b16 %v381, %v380
        %v1127 = vpack.c.b16 %v383, %v382
        %v1128 = vpack.c.b16 %v385, %v384
        %v1129 = vpack.c.b16 %v387, %v386
        %v1130 = vpack.c.b16 %v389, %v388
        %v1131 = vpack.c.b16 %v391, %v390
        %v1132 = vpack.c.b16 %v393, %v392
        %v1133 = vpack.c.b16 %v395, %v394
        %v1134 = vpack.c.b16 %v397, %v396
        %v1135 = vpack.c.b16 %v399, %v398
        %v1136 = vpack.c.b16 %v401, %v400
        %v1137 = vpack.c.b16 %v403, %v402
        %v1138 = vpack.c.b16 %v1122, %v404
        %v1139 = vpack.c.b16 %v1124, %v1123
        %1140 = vrot.lane.b32.xlu0 %v1125, 9
        %v1141 = vpop.permute.xlu0 %1140
        %1142 = vrot.lane.b32.xlu0 %v1126, 9
        %v1143 = vpop.permute.xlu0 %1142
        %1144 = vrot.lane.b32.xlu0 %v1127, 9
        %v1145 = vpop.permute.xlu0 %1144
        %1146 = vrot.lane.b32.xlu0 %v1128, 9
        %v1147 = vpop.permute.xlu0 %1146
        %1148 = vrot.lane.b32.xlu0 %v1129, 9
        %v1149 = vpop.permute.xlu0 %1148
        %1150 = vrot.lane.b32.xlu0 %v1130, 9
        %v1151 = vpop.permute.xlu0 %1150
        %1152 = vrot.lane.b32.xlu0 %v1131, 9
        %v1153 = vpop.permute.xlu0 %1152
        %1154 = vrot.lane.b32.xlu0 %v1132, 9
        %v1155 = vpop.permute.xlu0 %1154
        %1156 = vrot.lane.b32.xlu0 %v1133, 9
        %v1157 = vpop.permute.xlu0 %1156
        %1158 = vrot.lane.b32.xlu0 %v1134, 9
        %v1159 = vpop.permute.xlu0 %1158
        %1160 = vrot.lane.b32.xlu0 %v1135, 9
        %v1161 = vpop.permute.xlu0 %1160
        %1162 = vrot.lane.b32.xlu0 %v1136, 9
        %v1163 = vpop.permute.xlu0 %1162
        %1164 = vrot.lane.b32.xlu0 %v1137, 9
        %v1165 = vpop.permute.xlu0 %1164
        %1166 = vrot.lane.b32.xlu0 %v1138, 9
        %v1167 = vpop.permute.xlu0 %1166
        %1168 = vrot.lane.b32.xlu0 %v1139, 9
        %v1169 = vpop.permute.xlu0 %1168
        %vm1185 = vcmask 97352
        %1186 = vst.msk [vmem:[#allocation2] sm:$0xff] %vm1185, %v1141
        %1187 = vst.msk [vmem:[#allocation2 + $0x8] sm:$0xff] %vm1185, %v1143
        %1188 = vst.msk [vmem:[#allocation2 + $0x10] sm:$0xff] %vm1185, %v1145
        %1189 = vst.msk [vmem:[#allocation2 + $0x18] sm:$0xff] %vm1185, %v1147
        %1190 = vst.msk [vmem:[#allocation2 + $0x20] sm:$0xff] %vm1185, %v1149
        %1191 = vst.msk [vmem:[#allocation2 + $0x28] sm:$0xff] %vm1185, %v1151
        %1192 = vst.msk [vmem:[#allocation2 + $0x30] sm:$0xff] %vm1185, %v1153
        %1193 = vst.msk [vmem:[#allocation2 + $0x38] sm:$0xff] %vm1185, %v1155
        %1194 = vst.msk [vmem:[#allocation2 + $0x40] sm:$0xff] %vm1185, %v1157
        %1195 = vst.msk [vmem:[#allocation2 + $0x48] sm:$0xff] %vm1185, %v1159
        %1196 = vst.msk [vmem:[#allocation2 + $0x50] sm:$0xff] %vm1185, %v1161
        %1197 = vst.msk [vmem:[#allocation2 + $0x58] sm:$0xff] %vm1185, %v1163
        %1198 = vst.msk [vmem:[#allocation2 + $0x60] sm:$0xff] %vm1185, %v1165
        %1199 = vst.msk [vmem:[#allocation2 + $0x68] sm:$0xff] %vm1185, %v1167
        %1200 = vst.msk [vmem:[#allocation2 + $0x70] sm:$0xff] %vm1185, %v1169
        %v1202 = vshrl.u32 %v337, 16
        %v1204 = vrot.slane %v1202, 4
        %v1205 = vshll.u32 %v337, 16
        %v1207 = vrot.slane %v1205, 5
        %v1208 = vor.u32 %v1204, %v1207
        %v1209 = vrot.slane %v1208, 4
        %v1211 = vshll.u32 %v338, 16
        %v1213 = vrot.slane %v1211, 5
        %v1214 = vsel %vm453, %v1209, %v1213
        %v1215 = vshrl.u32 %v338, 16
        %v1217 = vrot.slane %v1215, 4
        %v1218 = vor.u32 %v1217, %v1213
        %v1219 = vrot.slane %v1218, 4
        %v1221 = vshll.u32 %v339, 16
        %v1223 = vrot.slane %v1221, 5
        %v1224 = vsel %vm453, %v1219, %v1223
        %v1225 = vshrl.u32 %v339, 16
        %v1227 = vrot.slane %v1225, 4
        %v1228 = vor.u32 %v1227, %v1223
        %v1229 = vrot.slane %v1228, 4
        %v1231 = vshll.u32 %v340, 16
        %v1233 = vrot.slane %v1231, 5
        %v1234 = vsel %vm453, %v1229, %v1233
        %v1235 = vunpack.c.l.b16 %v1214
        %v1236 = vunpack.c.l.b16 %v1224
        %v1237 = vunpack.c.l.b16 %v1234
        %v1238 = vpack.c.b16 %v798, %v797
        %v1239 = vpack.c.b16 %v800, %v799
        %v1240 = vpack.c.b16 %v802, %v801
        %v1241 = vpack.c.b16 %v804, %v803
        %v1242 = vpack.c.b16 %v806, %v805
        %v1243 = vpack.c.b16 %v808, %v807
        %v1244 = vpack.c.b16 %v810, %v809
        %v1245 = vpack.c.b16 %v812, %v811
        %v1246 = vpack.c.b16 %v814, %v813
        %v1247 = vpack.c.b16 %v816, %v815
        %v1248 = vpack.c.b16 %v818, %v817
        %v1249 = vpack.c.b16 %v820, %v819
        %v1250 = vpack.c.b16 %v822, %v821
        %v1251 = vpack.c.b16 %v1235, %v823
        %v1252 = vpack.c.b16 %v1237, %v1236
        %1253 = vrot.lane.b32.xlu0 %v1238, 12
        %v1254 = vpop.permute.xlu0 %1253
        %1255 = vrot.lane.b32.xlu0 %v1239, 12
        %v1256 = vpop.permute.xlu0 %1255
        %1257 = vrot.lane.b32.xlu0 %v1240, 12
        %v1258 = vpop.permute.xlu0 %1257
        %1259 = vrot.lane.b32.xlu0 %v1241, 12
        %v1260 = vpop.permute.xlu0 %1259
        %1261 = vrot.lane.b32.xlu0 %v1242, 12
        %v1262 = vpop.permute.xlu0 %1261
        %1263 = vrot.lane.b32.xlu0 %v1243, 12
        %v1264 = vpop.permute.xlu0 %1263
        %1265 = vrot.lane.b32.xlu0 %v1244, 12
        %v1266 = vpop.permute.xlu0 %1265
        %1267 = vrot.lane.b32.xlu0 %v1245, 12
        %v1268 = vpop.permute.xlu0 %1267
        %1269 = vrot.lane.b32.xlu0 %v1246, 12
        %v1270 = vpop.permute.xlu0 %1269
        %1271 = vrot.lane.b32.xlu0 %v1247, 12
        %v1272 = vpop.permute.xlu0 %1271
        %1273 = vrot.lane.b32.xlu0 %v1248, 12
        %v1274 = vpop.permute.xlu0 %1273
        %1275 = vrot.lane.b32.xlu0 %v1249, 12
        %v1276 = vpop.permute.xlu0 %1275
        %1277 = vrot.lane.b32.xlu0 %v1250, 12
        %v1278 = vpop.permute.xlu0 %1277
        %1279 = vrot.lane.b32.xlu0 %v1251, 12
        %v1280 = vpop.permute.xlu0 %1279
        %1281 = vrot.lane.b32.xlu0 %v1252, 12
        %v1282 = vpop.permute.xlu0 %1281
        %vm1298 = vcmask 121952
        %1299 = vst.msk [vmem:[#allocation2] sm:$0xff] %vm1298, %v1254
        %1300 = vst.msk [vmem:[#allocation2 + $0x8] sm:$0xff] %vm1298, %v1256
        %1301 = vst.msk [vmem:[#allocation2 + $0x10] sm:$0xff] %vm1298, %v1258
        %1302 = vst.msk [vmem:[#allocation2 + $0x18] sm:$0xff] %vm1298, %v1260
        %1303 = vst.msk [vmem:[#allocation2 + $0x20] sm:$0xff] %vm1298, %v1262
        %1304 = vst.msk [vmem:[#allocation2 + $0x28] sm:$0xff] %vm1298, %v1264
        %1305 = vst.msk [vmem:[#allocation2 + $0x30] sm:$0xff] %vm1298, %v1266
        %1306 = vst.msk [vmem:[#allocation2 + $0x38] sm:$0xff] %vm1298, %v1268
        %1307 = vst.msk [vmem:[#allocation2 + $0x40] sm:$0xff] %vm1298, %v1270
        %1308 = vst.msk [vmem:[#allocation2 + $0x48] sm:$0xff] %vm1298, %v1272
        %1309 = vst.msk [vmem:[#allocation2 + $0x50] sm:$0xff] %vm1298, %v1274
        %1310 = vst.msk [vmem:[#allocation2 + $0x58] sm:$0xff] %vm1298, %v1276
        %1311 = vst.msk [vmem:[#allocation2 + $0x60] sm:$0xff] %vm1298, %v1278
        %1312 = vst.msk [vmem:[#allocation2 + $0x68] sm:$0xff] %vm1298, %v1280
        %1313 = vst.msk [vmem:[#allocation2 + $0x70] sm:$0xff] %vm1298, %v1282
        %v1315 = vrot.slane %v337, 5
        %v1316 = vrot.slane %v1315, 4
        %v1317 = vrot.slane %v338, 5
        %v1318 = vsel %vm912, %v1316, %v1317
        %v1319 = vrot.slane %v1317, 4
        %v1320 = vrot.slane %v339, 5
        %v1321 = vsel %vm912, %v1319, %v1320
        %v1322 = vrot.slane %v1320, 4
        %v1323 = vrot.slane %v340, 5
        %v1324 = vsel %vm912, %v1322, %v1323
        %v1325 = vunpack.c.l.b16 %v1318
        %v1326 = vunpack.c.l.b16 %v1321
        %v1327 = vunpack.c.l.b16 %v1324
        %v1328 = vpack.c.b16 %v1017, %v1016
        %v1329 = vpack.c.b16 %v1019, %v1018
        %v1330 = vpack.c.b16 %v1021, %v1020
        %v1331 = vpack.c.b16 %v1023, %v1022
        %v1332 = vpack.c.b16 %v1025, %v1024
        %v1333 = vpack.c.b16 %v1027, %v1026
        %v1334 = vpack.c.b16 %v1029, %v1028
        %v1335 = vpack.c.b16 %v1031, %v1030
        %v1336 = vpack.c.b16 %v1033, %v1032
        %v1337 = vpack.c.b16 %v1035, %v1034
        %v1338 = vpack.c.b16 %v1037, %v1036
        %v1339 = vpack.c.b16 %v1039, %v1038
        %v1340 = vpack.c.b16 %v1041, %v1040
        %v1341 = vpack.c.b16 %v1325, %v1042
        %v1342 = vpack.c.b16 %v1327, %v1326
        %1343 = vrot.lane.b32.xlu0 %v1328, 15
        %v1344 = vpop.permute.xlu0 %1343
        %1345 = vrot.lane.b32.xlu0 %v1329, 15
        %v1346 = vpop.permute.xlu0 %1345
        %1347 = vrot.lane.b32.xlu0 %v1330, 15
        %v1348 = vpop.permute.xlu0 %1347
        %1349 = vrot.lane.b32.xlu0 %v1331, 15
        %v1350 = vpop.permute.xlu0 %1349
        %1351 = vrot.lane.b32.xlu0 %v1332, 15
        %v1352 = vpop.permute.xlu0 %1351
        %1353 = vrot.lane.b32.xlu0 %v1333, 15
        %v1354 = vpop.permute.xlu0 %1353
        %1355 = vrot.lane.b32.xlu0 %v1334, 15
        %v1356 = vpop.permute.xlu0 %1355
        %1357 = vrot.lane.b32.xlu0 %v1335, 15
        %v1358 = vpop.permute.xlu0 %1357
        %1359 = vrot.lane.b32.xlu0 %v1336, 15
        %v1360 = vpop.permute.xlu0 %1359
        %1361 = vrot.lane.b32.xlu0 %v1337, 15
        %v1362 = vpop.permute.xlu0 %1361
        %1363 = vrot.lane.b32.xlu0 %v1338, 15
        %v1364 = vpop.permute.xlu0 %1363
        %1365 = vrot.lane.b32.xlu0 %v1339, 15
        %v1366 = vpop.permute.xlu0 %1365
        %1367 = vrot.lane.b32.xlu0 %v1340, 15
        %v1368 = vpop.permute.xlu0 %1367
        %1369 = vrot.lane.b32.xlu0 %v1341, 15
        %v1370 = vpop.permute.xlu0 %1369
        %1371 = vrot.lane.b32.xlu0 %v1342, 15
        %v1372 = vpop.permute.xlu0 %1371
        %vm1388 = vcmask 146552
        %1389 = vst.msk [vmem:[#allocation2] sm:$0xff] %vm1388, %v1344
        %1390 = vst.msk [vmem:[#allocation2 + $0x8] sm:$0xff] %vm1388, %v1346
        %1391 = vst.msk [vmem:[#allocation2 + $0x10] sm:$0xff] %vm1388, %v1348
        %1392 = vst.msk [vmem:[#allocation2 + $0x18] sm:$0xff] %vm1388, %v1350
        %1393 = vst.msk [vmem:[#allocation2 + $0x20] sm:$0xff] %vm1388, %v1352
        %1394 = vst.msk [vmem:[#allocation2 + $0x28] sm:$0xff] %vm1388, %v1354
        %1395 = vst.msk [vmem:[#allocation2 + $0x30] sm:$0xff] %vm1388, %v1356
        %1396 = vst.msk [vmem:[#allocation2 + $0x38] sm:$0xff] %vm1388, %v1358
        %1397 = vst.msk [vmem:[#allocation2 + $0x40] sm:$0xff] %vm1388, %v1360
        %1398 = vst.msk [vmem:[#allocation2 + $0x48] sm:$0xff] %vm1388, %v1362
        %1399 = vst.msk [vmem:[#allocation2 + $0x50] sm:$0xff] %vm1388, %v1364
        %1400 = vst.msk [vmem:[#allocation2 + $0x58] sm:$0xff] %vm1388, %v1366
        %1401 = vst.msk [vmem:[#allocation2 + $0x60] sm:$0xff] %vm1388, %v1368
        %1402 = vst.msk [vmem:[#allocation2 + $0x68] sm:$0xff] %vm1388, %v1370
        %1403 = vst.msk [vmem:[#allocation2 + $0x70] sm:$0xff] %vm1388, %v1372
        %v1407 = vunpack.c.l.b16 %v341
        %v1408 = vunpack.c.l.b16 %v342
        %v1409 = vunpack.c.l.b16 %v343
        %v1410 = vpack.c.b16 %v1123, %v1122
        %v1411 = vpack.c.b16 %v1407, %v1124
        %v1412 = vpack.c.b16 %v1409, %v1408
        %1413 = vrot.lane.b32.xlu0 %v408, 18
        %v1414 = vpop.permute.xlu0 %1413
        %1415 = vrot.lane.b32.xlu0 %v409, 18
        %v1416 = vpop.permute.xlu0 %1415
        %1417 = vrot.lane.b32.xlu0 %v410, 18
        %v1418 = vpop.permute.xlu0 %1417
        %1419 = vrot.lane.b32.xlu0 %v411, 18
        %v1420 = vpop.permute.xlu0 %1419
        %1421 = vrot.lane.b32.xlu0 %v412, 18
        %v1422 = vpop.permute.xlu0 %1421
        %1423 = vrot.lane.b32.xlu0 %v413, 18
        %v1424 = vpop.permute.xlu0 %1423
        %1425 = vrot.lane.b32.xlu0 %v414, 18
        %v1426 = vpop.permute.xlu0 %1425
        %1427 = vrot.lane.b32.xlu0 %v415, 18
        %v1428 = vpop.permute.xlu0 %1427
        %1429 = vrot.lane.b32.xlu0 %v416, 18
        %v1430 = vpop.permute.xlu0 %1429
        %1431 = vrot.lane.b32.xlu0 %v417, 18
        %v1432 = vpop.permute.xlu0 %1431
        %1433 = vrot.lane.b32.xlu0 %v418, 18
        %v1434 = vpop.permute.xlu0 %1433
        %1435 = vrot.lane.b32.xlu0 %v419, 18
        %v1436 = vpop.permute.xlu0 %1435
        %1437 = vrot.lane.b32.xlu0 %v1410, 18
        %v1438 = vpop.permute.xlu0 %1437
        %1439 = vrot.lane.b32.xlu0 %v1411, 18
        %v1440 = vpop.permute.xlu0 %1439
        %1441 = vrot.lane.b32.xlu0 %v1412, 18
        %v1442 = vpop.permute.xlu0 %1441
        %vm1458 = vcmask 171152
        %1459 = vst.msk [vmem:[#allocation2] sm:$0xff] %vm1458, %v1414
        %1460 = vst.msk [vmem:[#allocation2 + $0x8] sm:$0xff] %vm1458, %v1416
        %1461 = vst.msk [vmem:[#allocation2 + $0x10] sm:$0xff] %vm1458, %v1418
        %1462 = vst.msk [vmem:[#allocation2 + $0x18] sm:$0xff] %vm1458, %v1420
        %1463 = vst.msk [vmem:[#allocation2 + $0x20] sm:$0xff] %vm1458, %v1422
        %1464 = vst.msk [vmem:[#allocation2 + $0x28] sm:$0xff] %vm1458, %v1424
        %1465 = vst.msk [vmem:[#allocation2 + $0x30] sm:$0xff] %vm1458, %v1426
        %1466 = vst.msk [vmem:[#allocation2 + $0x38] sm:$0xff] %vm1458, %v1428
        %1467 = vst.msk [vmem:[#allocation2 + $0x40] sm:$0xff] %vm1458, %v1430
        %1468 = vst.msk [vmem:[#allocation2 + $0x48] sm:$0xff] %vm1458, %v1432
        %1469 = vst.msk [vmem:[#allocation2 + $0x50] sm:$0xff] %vm1458, %v1434
        %1470 = vst.msk [vmem:[#allocation2 + $0x58] sm:$0xff] %vm1458, %v1436
        %1471 = vst.msk [vmem:[#allocation2 + $0x60] sm:$0xff] %vm1458, %v1438
        %1472 = vst.msk [vmem:[#allocation2 + $0x68] sm:$0xff] %vm1458, %v1440
        %1473 = vst.msk [vmem:[#allocation2 + $0x70] sm:$0xff] %vm1458, %v1442
        %v1475 = vshrl.u32 %v341, 16
        %v1477 = vrot.slane %v1475, 4
        %v1478 = vshll.u32 %v341, 16
        %v1480 = vrot.slane %v1478, 5
        %v1481 = vor.u32 %v1477, %v1480
        %v1482 = vrot.slane %v1481, 4
        %v1484 = vshll.u32 %v342, 16
        %v1486 = vrot.slane %v1484, 5
        %v1487 = vsel %vm453, %v1482, %v1486
        %v1488 = vshrl.u32 %v342, 16
        %v1490 = vrot.slane %v1488, 4
        %v1491 = vor.u32 %v1490, %v1486
        %v1492 = vrot.slane %v1491, 4
        %v1494 = vshll.u32 %v343, 16
        %v1496 = vrot.slane %v1494, 5
        %v1497 = vsel %vm453, %v1492, %v1496
        %v1498 = vshrl.u32 %v343, 16
        %v1500 = vrot.slane %v1498, 4
        %v1501 = vor.u32 %v1500, %v1496
        %v1502 = vrot.slane %v1501, 4
        %v1504 = vshll.u32 %v344, 16
        %v1506 = vrot.slane %v1504, 5
        %v1507 = vsel %vm453, %v1502, %v1506
        %v1508 = vunpack.c.l.b16 %v1487
        %v1509 = vunpack.c.l.b16 %v1497
        %v1510 = vunpack.c.l.b16 %v1507
        %v1511 = vpack.c.b16 %v1236, %v1235
        %v1512 = vpack.c.b16 %v1508, %v1237
        %v1513 = vpack.c.b16 %v1510, %v1509
        %1514 = vrot.lane.b32.xlu0 %v827, 21
        %v1515 = vpop.permute.xlu0 %1514
        %1516 = vrot.lane.b32.xlu0 %v828, 21
        %v1517 = vpop.permute.xlu0 %1516
        %1518 = vrot.lane.b32.xlu0 %v829, 21
        %v1519 = vpop.permute.xlu0 %1518
        %1520 = vrot.lane.b32.xlu0 %v830, 21
        %v1521 = vpop.permute.xlu0 %1520
        %1522 = vrot.lane.b32.xlu0 %v831, 21
        %v1523 = vpop.permute.xlu0 %1522
        %1524 = vrot.lane.b32.xlu0 %v832, 21
        %v1525 = vpop.permute.xlu0 %1524
        %1526 = vrot.lane.b32.xlu0 %v833, 21
        %v1527 = vpop.permute.xlu0 %1526
        %1528 = vrot.lane.b32.xlu0 %v834, 21
        %v1529 = vpop.permute.xlu0 %1528
        %1530 = vrot.lane.b32.xlu0 %v835, 21
        %v1531 = vpop.permute.xlu0 %1530
        %1532 = vrot.lane.b32.xlu0 %v836, 21
        %v1533 = vpop.permute.xlu0 %1532
        %1534 = vrot.lane.b32.xlu0 %v837, 21
        %v1535 = vpop.permute.xlu0 %1534
        %1536 = vrot.lane.b32.xlu0 %v838, 21
        %v1537 = vpop.permute.xlu0 %1536
        %1538 = vrot.lane.b32.xlu0 %v1511, 21
        %v1539 = vpop.permute.xlu0 %1538
        %1540 = vrot.lane.b32.xlu0 %v1512, 21
        %v1541 = vpop.permute.xlu0 %1540
        %1542 = vrot.lane.b32.xlu0 %v1513, 21
        %v1543 = vpop.permute.xlu0 %1542
        %vm1559 = vcmask 195752
        %1560 = vst.msk [vmem:[#allocation2] sm:$0xff] %vm1559, %v1515
        %1561 = vst.msk [vmem:[#allocation2 + $0x8] sm:$0xff] %vm1559, %v1517
        %1562 = vst.msk [vmem:[#allocation2 + $0x10] sm:$0xff] %vm1559, %v1519
        %1563 = vst.msk [vmem:[#allocation2 + $0x18] sm:$0xff] %vm1559, %v1521
        %1564 = vst.msk [vmem:[#allocation2 + $0x20] sm:$0xff] %vm1559, %v1523
        %1565 = vst.msk [vmem:[#allocation2 + $0x28] sm:$0xff] %vm1559, %v1525
        %1566 = vst.msk [vmem:[#allocation2 + $0x30] sm:$0xff] %vm1559, %v1527
        %1567 = vst.msk [vmem:[#allocation2 + $0x38] sm:$0xff] %vm1559, %v1529
        %1568 = vst.msk [vmem:[#allocation2 + $0x40] sm:$0xff] %vm1559, %v1531
        %1569 = vst.msk [vmem:[#allocation2 + $0x48] sm:$0xff] %vm1559, %v1533
        %1570 = vst.msk [vmem:[#allocation2 + $0x50] sm:$0xff] %vm1559, %v1535
        %1571 = vst.msk [vmem:[#allocation2 + $0x58] sm:$0xff] %vm1559, %v1537
        %1572 = vst.msk [vmem:[#allocation2 + $0x60] sm:$0xff] %vm1559, %v1539
        %1573 = vst.msk [vmem:[#allocation2 + $0x68] sm:$0xff] %vm1559, %v1541
        %1574 = vst.msk [vmem:[#allocation2 + $0x70] sm:$0xff] %vm1559, %v1543
        %v1576 = vrot.slane %v341, 5
        %v1577 = vrot.slane %v1576, 4
        %v1578 = vrot.slane %v342, 5
        %v1579 = vsel %vm912, %v1577, %v1578
        %v1580 = vrot.slane %v1578, 4
        %v1581 = vrot.slane %v343, 5
        %v1582 = vsel %vm912, %v1580, %v1581
        %v1583 = vrot.slane %v1581, 4
        %v1584 = vrot.slane %v344, 5
        %v1585 = vsel %vm912, %v1583, %v1584
        %v1586 = vunpack.c.l.b16 %v1579
        %v1587 = vunpack.c.l.b16 %v1582
        %v1588 = vunpack.c.l.b16 %v1585
        %v1589 = vpack.c.b16 %v1326, %v1325
        %v1590 = vpack.c.b16 %v1586, %v1327
        %v1591 = vpack.c.b16 %v1588, %v1587
        %1592 = vrot.lane.b32.xlu0 %v1046, 24
        %v1593 = vpop.permute.xlu0 %1592
        %1594 = vrot.lane.b32.xlu0 %v1047, 24
        %v1595 = vpop.permute.xlu0 %1594
        %1596 = vrot.lane.b32.xlu0 %v1048, 24
        %v1597 = vpop.permute.xlu0 %1596
        %1598 = vrot.lane.b32.xlu0 %v1049, 24
        %v1599 = vpop.permute.xlu0 %1598
        %1600 = vrot.lane.b32.xlu0 %v1050, 24
        %v1601 = vpop.permute.xlu0 %1600
        %1602 = vrot.lane.b32.xlu0 %v1051, 24
        %v1603 = vpop.permute.xlu0 %1602
        %1604 = vrot.lane.b32.xlu0 %v1052, 24
        %v1605 = vpop.permute.xlu0 %1604
        %1606 = vrot.lane.b32.xlu0 %v1053, 24
        %v1607 = vpop.permute.xlu0 %1606
        %1608 = vrot.lane.b32.xlu0 %v1054, 24
        %v1609 = vpop.permute.xlu0 %1608
        %1610 = vrot.lane.b32.xlu0 %v1055, 24
        %v1611 = vpop.permute.xlu0 %1610
        %1612 = vrot.lane.b32.xlu0 %v1056, 24
        %v1613 = vpop.permute.xlu0 %1612
        %1614 = vrot.lane.b32.xlu0 %v1057, 24
        %v1615 = vpop.permute.xlu0 %1614
        %1616 = vrot.lane.b32.xlu0 %v1589, 24
        %v1617 = vpop.permute.xlu0 %1616
        %1618 = vrot.lane.b32.xlu0 %v1590, 24
        %v1619 = vpop.permute.xlu0 %1618
        %1620 = vrot.lane.b32.xlu0 %v1591, 24
        %v1621 = vpop.permute.xlu0 %1620
        %vm1637 = vcmask 220352
        %1638 = vst.msk [vmem:[#allocation2] sm:$0xff] %vm1637, %v1593
        %1639 = vst.msk [vmem:[#allocation2 + $0x8] sm:$0xff] %vm1637, %v1595
        %1640 = vst.msk [vmem:[#allocation2 + $0x10] sm:$0xff] %vm1637, %v1597
        %1641 = vst.msk [vmem:[#allocation2 + $0x18] sm:$0xff] %vm1637, %v1599
        %1642 = vst.msk [vmem:[#allocation2 + $0x20] sm:$0xff] %vm1637, %v1601
        %1643 = vst.msk [vmem:[#allocation2 + $0x28] sm:$0xff] %vm1637, %v1603
        %1644 = vst.msk [vmem:[#allocation2 + $0x30] sm:$0xff] %vm1637, %v1605
        %1645 = vst.msk [vmem:[#allocation2 + $0x38] sm:$0xff] %vm1637, %v1607
        %1646 = vst.msk [vmem:[#allocation2 + $0x40] sm:$0xff] %vm1637, %v1609
        %1647 = vst.msk [vmem:[#allocation2 + $0x48] sm:$0xff] %vm1637, %v1611
        %1648 = vst.msk [vmem:[#allocation2 + $0x50] sm:$0xff] %vm1637, %v1613
        %1649 = vst.msk [vmem:[#allocation2 + $0x58] sm:$0xff] %vm1637, %v1615
        %1650 = vst.msk [vmem:[#allocation2 + $0x60] sm:$0xff] %vm1637, %v1617
        %1651 = vst.msk [vmem:[#allocation2 + $0x68] sm:$0xff] %vm1637, %v1619
        %1652 = vst.msk [vmem:[#allocation2 + $0x70] sm:$0xff] %vm1637, %v1621
        %v1653 = vld [vmem:[#allocation2] sm:$0xff]
        %v1654 = vld [vmem:[#allocation2 + $0x8] sm:$0xff]
        %v1655 = vld [vmem:[#allocation2 + $0x10] sm:$0xff]
        %v1656 = vld [vmem:[#allocation2 + $0x18] sm:$0xff]
        %v1657 = vld [vmem:[#allocation2 + $0x20] sm:$0xff]
        %v1658 = vld [vmem:[#allocation2 + $0x28] sm:$0xff]
        %v1659 = vld [vmem:[#allocation2 + $0x30] sm:$0xff]
        %v1660 = vld [vmem:[#allocation2 + $0x38] sm:$0xff]
        %v1661 = vld [vmem:[#allocation2 + $0x40] sm:$0xff]
        %v1662 = vld [vmem:[#allocation2 + $0x48] sm:$0xff]
        %v1663 = vld [vmem:[#allocation2 + $0x50] sm:$0xff]
        %v1664 = vld [vmem:[#allocation2 + $0x58] sm:$0xff]
        %v1665 = vld [vmem:[#allocation2 + $0x60] sm:$0xff]
        %v1666 = vld [vmem:[#allocation2 + $0x68] sm:$0xff]
        %v1667 = vld [vmem:[#allocation2 + $0x70] sm:$0xff]
        %v1668 = vld [vmem:[%s1] sm:$0xf]
        %v1669 = vld [vmem:[%s1 + $0x4] sm:$0xf]
        %v1670 = vld [vmem:[%s1 + $0x8] sm:$0xf]
        %v1671 = vld [vmem:[%s1 + $0xc] sm:$0x3]
        %v1672 = vld [vmem:[%s2] sm:$0x1]
        %v1674 = vlaneseq
        %v1675 = vshrl.u32 %v1674, 7
        %v1676 = vsub.s32 0, %v1675
        %v1677 = vrot.slane %v1672, %v1676
        %v1683 = vunpack.c.l.b16 %v1668
        %v1684 = vunpack.c.l.b16 %v1669
        %v1685 = vunpack.c.l.b16 %v1670
        %v1686 = vunpack.c.l.b16 %v1671
        %v1687 = vpack.c.b16 %v1684, %v1683
        %v1688 = vpack.c.b16 %v1686, %v1685
        %vm1690 = vcmask 220160
        %v1692 = vsel %vm1690, %v1653, 0
        %v1695 = vsel %vm1690, %v1654, 0
        %v1698 = vsel %vm1690, %v1655, 0
        %v1701 = vsel %vm1690, %v1656, 0
        %v1704 = vsel %vm1690, %v1657, 0
        %v1707 = vsel %vm1690, %v1658, 0
        %v1710 = vsel %vm1690, %v1659, 0
        %v1713 = vsel %vm1690, %v1660, 0
        %v1716 = vsel %vm1690, %v1661, 0
        %v1719 = vsel %vm1690, %v1662, 0
        %v1722 = vsel %vm1690, %v1663, 0
        %v1725 = vsel %vm1690, %v1664, 0
        %v1728 = vsel %vm1690, %v1665, 0
        %v1731 = vsel %vm1690, %v1666, 0
        %v1734 = vsel %vm1690, %v1667, 0
        %vm1736 = vcmask 1044480
        %vm1737 = vcmask 1045504
        %v1738 = vsel %vm1736, 4294967295, 65535
        %v1739 = vsel %vm1737, %v1738, 0
        %v1741 = vand.u32 %v1688, %v1739
        %1743 = vmatprep.subr.bf16.mxu0 0
        %1744 = vmatpush1.bf16.msra.mxu0 %v1687
        %1745 = vmatprep.subr.bf16.mxu0 0
        %1746 = vmatpush1.bf16.msra.mxu0 %v1741
        %1747 = vmatprep.subr.bf16.mxu0 0
        %1748 = vmatpush1.bf16.msra.mxu0 0
        %1749 = vmatprep.subr.bf16.mxu0 0
        %1750 = vmatpush1.bf16.msra.mxu0 0
        %1751 = vmatprep.subr.bf16.mxu0 0
        %1752 = vmatpush1.bf16.msra.mxu0 0
        %1753 = vmatprep.subr.bf16.mxu0 0
        %1754 = vmatpush1.bf16.msra.mxu0 0
        %1755 = vmatprep.subr.bf16.mxu0 0
        %1756 = vmatpush1.bf16.msra.mxu0 0
        %1757 = vmatprep.subr.bf16.mxu0 0
        %1758 = vmatpush1.bf16.msra.mxu0 0
        %1759 = vmatprep.subr.bf16.mxu0 0
        %1760 = vmatpush1.bf16.msra.mxu0 0
        %1761 = vmatprep.subr.bf16.mxu0 0
        %1762 = vmatpush1.bf16.msra.mxu0 0
        %1763 = vmatprep.subr.bf16.mxu0 0
        %1764 = vmatpush1.bf16.msra.mxu0 0
        %1765 = vmatprep.subr.bf16.mxu0 0
        %1766 = vmatpush1.bf16.msra.mxu0 0
        %1767 = vmatprep.subr.bf16.mxu0 0
        %1768 = vmatpush1.bf16.msra.mxu0 0
        %1769 = vmatprep.subr.bf16.mxu0 0
        %1770 = vmatpush1.bf16.msra.mxu0 0
        %1771 = vmatprep.subr.bf16.mxu0 0
        %1772 = vmatpush1.bf16.msra.mxu0 0
        %1773 = vmatprep.subr.bf16.mxu0 0
        %1774 = vmatpush1.bf16.msra.mxu0 0
        %1775 = vmatprep.mubr.bf16.mxu0 0
        %1776 = vmatmul.mubr.bf16.gmra.mrb[0].mxu0 %v1692
        %v1777 = vpop.f32.mrb[0].mxu0
        %v1778 = vadd.f32 %v1677, %v1777
        %v1779 = vpop.f32.mrb[0].mxu0
        %v1780 = vpop.f32.mrb[0].mxu0
        %v1781 = vadd.f32 %v1677, %v1780
        %v1782 = vpop.f32.mrb[0].mxu0
        %1783 = vmatprep.mubr.bf16.mxu0 0
        %1784 = vmatmul.mubr.bf16.gmra.mrb[0].mxu0 %v1695
        %v1785 = vpop.f32.mrb[0].mxu0
        %v1786 = vadd.f32 %v1677, %v1785
        %v1787 = vpop.f32.mrb[0].mxu0
        %v1788 = vpop.f32.mrb[0].mxu0
        %v1789 = vadd.f32 %v1677, %v1788
        %v1790 = vpop.f32.mrb[0].mxu0
        %1791 = vmatprep.mubr.bf16.mxu0 0
        %1792 = vmatmul.mubr.bf16.gmra.mrb[0].mxu0 %v1698
        %v1793 = vpop.f32.mrb[0].mxu0
        %v1794 = vadd.f32 %v1677, %v1793
        %v1795 = vpop.f32.mrb[0].mxu0
        %v1796 = vpop.f32.mrb[0].mxu0
        %v1797 = vadd.f32 %v1677, %v1796
        %v1798 = vpop.f32.mrb[0].mxu0
        %1799 = vmatprep.mubr.bf16.mxu0 0
        %1800 = vmatmul.mubr.bf16.gmra.mrb[0].mxu0 %v1701
        %v1801 = vpop.f32.mrb[0].mxu0
        %v1802 = vadd.f32 %v1677, %v1801
        %v1803 = vpop.f32.mrb[0].mxu0
        %v1804 = vpop.f32.mrb[0].mxu0
        %v1805 = vadd.f32 %v1677, %v1804
        %v1806 = vpop.f32.mrb[0].mxu0
        %1807 = vmatprep.mubr.bf16.mxu0 0
        %1808 = vmatmul.mubr.bf16.gmra.mrb[0].mxu0 %v1704
        %v1809 = vpop.f32.mrb[0].mxu0
        %v1810 = vadd.f32 %v1677, %v1809
        %v1811 = vpop.f32.mrb[0].mxu0
        %v1812 = vpop.f32.mrb[0].mxu0
        %v1813 = vadd.f32 %v1677, %v1812
        %v1814 = vpop.f32.mrb[0].mxu0
        %1815 = vmatprep.mubr.bf16.mxu0 0
        %1816 = vmatmul.mubr.bf16.gmra.mrb[0].mxu0 %v1707
        %v1817 = vpop.f32.mrb[0].mxu0
        %v1818 = vadd.f32 %v1677, %v1817
        %v1819 = vpop.f32.mrb[0].mxu0
        %v1820 = vpop.f32.mrb[0].mxu0
        %v1821 = vadd.f32 %v1677, %v1820
        %v1822 = vpop.f32.mrb[0].mxu0
        %1823 = vmatprep.mubr.bf16.mxu0 0
        %1824 = vmatmul.mubr.bf16.gmra.mrb[0].mxu0 %v1710
        %v1825 = vpop.f32.mrb[0].mxu0
        %v1826 = vadd.f32 %v1677, %v1825
        %v1827 = vpop.f32.mrb[0].mxu0
        %v1828 = vpop.f32.mrb[0].mxu0
        %v1829 = vadd.f32 %v1677, %v1828
        %v1830 = vpop.f32.mrb[0].mxu0
        %1831 = vmatprep.mubr.bf16.mxu0 0
        %1832 = vmatmul.mubr.bf16.gmra.mrb[0].mxu0 %v1713
        %v1833 = vpop.f32.mrb[0].mxu0
        %v1834 = vadd.f32 %v1677, %v1833
        %v1835 = vpop.f32.mrb[0].mxu0
        %v1836 = vpop.f32.mrb[0].mxu0
        %v1837 = vadd.f32 %v1677, %v1836
        %v1838 = vpop.f32.mrb[0].mxu0
        %1839 = vmatprep.mubr.bf16.mxu0 0
        %1840 = vmatmul.mubr.bf16.gmra.mrb[0].mxu0 %v1716
        %v1841 = vpop.f32.mrb[0].mxu0
        %v1842 = vadd.f32 %v1677, %v1841
        %v1843 = vpop.f32.mrb[0].mxu0
        %v1844 = vpop.f32.mrb[0].mxu0
        %v1845 = vadd.f32 %v1677, %v1844
        %v1846 = vpop.f32.mrb[0].mxu0
        %1847 = vmatprep.mubr.bf16.mxu0 0
        %1848 = vmatmul.mubr.bf16.gmra.mrb[0].mxu0 %v1719
        %v1849 = vpop.f32.mrb[0].mxu0
        %v1850 = vadd.f32 %v1677, %v1849
        %v1851 = vpop.f32.mrb[0].mxu0
        %v1852 = vpop.f32.mrb[0].mxu0
        %v1853 = vadd.f32 %v1677, %v1852
        %v1854 = vpop.f32.mrb[0].mxu0
        %1855 = vmatprep.mubr.bf16.mxu0 0
        %1856 = vmatmul.mubr.bf16.gmra.mrb[0].mxu0 %v1722
        %v1857 = vpop.f32.mrb[0].mxu0
        %v1858 = vadd.f32 %v1677, %v1857
        %v1859 = vpop.f32.mrb[0].mxu0
        %v1860 = vpop.f32.mrb[0].mxu0
        %v1861 = vadd.f32 %v1677, %v1860
        %v1862 = vpop.f32.mrb[0].mxu0
        %1863 = vmatprep.mubr.bf16.mxu0 0
        %1864 = vmatmul.mubr.bf16.gmra.mrb[0].mxu0 %v1725
        %v1865 = vpop.f32.mrb[0].mxu0
        %v1866 = vadd.f32 %v1677, %v1865
        %v1867 = vpop.f32.mrb[0].mxu0
        %v1868 = vpop.f32.mrb[0].mxu0
        %v1869 = vadd.f32 %v1677, %v1868
        %v1870 = vpop.f32.mrb[0].mxu0
        %1871 = vmatprep.mubr.bf16.mxu0 0
        %1872 = vmatmul.mubr.bf16.gmra.mrb[0].mxu0 %v1728
        %v1873 = vpop.f32.mrb[0].mxu0
        %v1874 = vadd.f32 %v1677, %v1873
        %v1875 = vpop.f32.mrb[0].mxu0
        %v1876 = vpop.f32.mrb[0].mxu0
        %v1877 = vadd.f32 %v1677, %v1876
        %v1878 = vpop.f32.mrb[0].mxu0
        %1879 = vmatprep.mubr.bf16.mxu0 0
        %1880 = vmatmul.mubr.bf16.gmra.mrb[0].mxu0 %v1731
        %v1881 = vpop.f32.mrb[0].mxu0
        %v1882 = vadd.f32 %v1677, %v1881
        %v1883 = vpop.f32.mrb[0].mxu0
        %v1884 = vpop.f32.mrb[0].mxu0
        %v1885 = vadd.f32 %v1677, %v1884
        %v1886 = vpop.f32.mrb[0].mxu0
        %1887 = vmatprep.mubr.bf16.mxu0 0
        %1888 = vmatmul.mubr.bf16.gmra.mrb[0].mxu0 %v1734
        %v1889 = vpop.f32.mrb[0].mxu0
        %v1890 = vadd.f32 %v1677, %v1889
        %v1891 = vpop.f32.mrb[0].mxu0
        %v1892 = vpop.f32.mrb[0].mxu0
        %v1893 = vadd.f32 %v1677, %v1892
        %v1894 = vpop.f32.mrb[0].mxu0
        %1895 = vdwg.mxu0
        %vm1896 = vcmp.gt.f32.partialorder %v1778, 0.0
        %vm1897 = vcmp.gt.f32.partialorder %v1781, 0.0
        %vm1898 = vcmp.gt.f32.partialorder %v1786, 0.0
        %vm1899 = vcmp.gt.f32.partialorder %v1789, 0.0
        %vm1900 = vcmp.gt.f32.partialorder %v1794, 0.0
        %vm1901 = vcmp.gt.f32.partialorder %v1797, 0.0
        %vm1902 = vcmp.gt.f32.partialorder %v1802, 0.0
        %vm1903 = vcmp.gt.f32.partialorder %v1805, 0.0
        %vm1904 = vcmp.gt.f32.partialorder %v1810, 0.0
        %vm1905 = vcmp.gt.f32.partialorder %v1813, 0.0
        %vm1906 = vcmp.gt.f32.partialorder %v1818, 0.0
        %vm1907 = vcmp.gt.f32.partialorder %v1821, 0.0
        %vm1908 = vcmp.gt.f32.partialorder %v1826, 0.0
        %vm1909 = vcmp.gt.f32.partialorder %v1829, 0.0
        %vm1910 = vcmp.gt.f32.partialorder %v1834, 0.0
        %vm1911 = vcmp.gt.f32.partialorder %v1837, 0.0
        %vm1912 = vcmp.gt.f32.partialorder %v1842, 0.0
        %vm1913 = vcmp.gt.f32.partialorder %v1845, 0.0
        %vm1914 = vcmp.gt.f32.partialorder %v1850, 0.0
        %vm1915 = vcmp.gt.f32.partialorder %v1853, 0.0
        %vm1916 = vcmp.gt.f32.partialorder %v1858, 0.0
        %vm1917 = vcmp.gt.f32.partialorder %v1861, 0.0
        %vm1918 = vcmp.gt.f32.partialorder %v1866, 0.0
        %vm1919 = vcmp.gt.f32.partialorder %v1869, 0.0
        %vm1920 = vcmp.gt.f32.partialorder %v1874, 0.0
        %vm1921 = vcmp.gt.f32.partialorder %v1877, 0.0
        %vm1922 = vcmp.gt.f32.partialorder %v1882, 0.0
        %vm1923 = vcmp.gt.f32.partialorder %v1885, 0.0
        %vm1924 = vcmp.gt.f32.partialorder %v1890, 0.0
        %vm1925 = vcmp.gt.f32.partialorder %v1893, 0.0
        %v1926 = vmul.f32 %v1778, 0.01
        %v1927 = vmul.f32 %v1781, 0.01
        %v1928 = vmul.f32 %v1786, 0.01
        %v1929 = vmul.f32 %v1789, 0.01
        %v1930 = vmul.f32 %v1794, 0.01
        %v1931 = vmul.f32 %v1797, 0.01
        %v1932 = vmul.f32 %v1802, 0.01
        %v1933 = vmul.f32 %v1805, 0.01
        %v1934 = vmul.f32 %v1810, 0.01
        %v1935 = vmul.f32 %v1813, 0.01
        %v1936 = vmul.f32 %v1818, 0.01
        %v1937 = vmul.f32 %v1821, 0.01
        %v1938 = vmul.f32 %v1826, 0.01
        %v1939 = vmul.f32 %v1829, 0.01
        %v1940 = vmul.f32 %v1834, 0.01
        %v1941 = vmul.f32 %v1837, 0.01
        %v1942 = vmul.f32 %v1842, 0.01
        %v1943 = vmul.f32 %v1845, 0.01
        %v1944 = vmul.f32 %v1850, 0.01
        %v1945 = vmul.f32 %v1853, 0.01
        %v1946 = vmul.f32 %v1858, 0.01
        %v1947 = vmul.f32 %v1861, 0.01
        %v1948 = vmul.f32 %v1866, 0.01
        %v1949 = vmul.f32 %v1869, 0.01
        %v1950 = vmul.f32 %v1874, 0.01
        %v1951 = vmul.f32 %v1877, 0.01
        %v1952 = vmul.f32 %v1882, 0.01
        %v1953 = vmul.f32 %v1885, 0.01
        %v1954 = vmul.f32 %v1890, 0.01
        %v1955 = vmul.f32 %v1893, 0.01
        %v1956 = vsel %vm1896, %v1778, %v1926
        %v1957 = vsel %vm1897, %v1781, %v1927
        %v1958 = vsel %vm1898, %v1786, %v1928
        %v1959 = vsel %vm1899, %v1789, %v1929
        %v1960 = vsel %vm1900, %v1794, %v1930
        %v1961 = vsel %vm1901, %v1797, %v1931
        %v1962 = vsel %vm1902, %v1802, %v1932
        %v1963 = vsel %vm1903, %v1805, %v1933
        %v1964 = vsel %vm1904, %v1810, %v1934
        %v1965 = vsel %vm1905, %v1813, %v1935
        %v1966 = vsel %vm1906, %v1818, %v1936
        %v1967 = vsel %vm1907, %v1821, %v1937
        %v1968 = vsel %vm1908, %v1826, %v1938
        %v1969 = vsel %vm1909, %v1829, %v1939
        %v1970 = vsel %vm1910, %v1834, %v1940
        %v1971 = vsel %vm1911, %v1837, %v1941
        %v1972 = vsel %vm1912, %v1842, %v1942
        %v1973 = vsel %vm1913, %v1845, %v1943
        %v1974 = vsel %vm1914, %v1850, %v1944
        %v1975 = vsel %vm1915, %v1853, %v1945
        %v1976 = vsel %vm1916, %v1858, %v1946
        %v1977 = vsel %vm1917, %v1861, %v1947
        %v1978 = vsel %vm1918, %v1866, %v1948
        %v1979 = vsel %vm1919, %v1869, %v1949
        %v1980 = vsel %vm1920, %v1874, %v1950
        %v1981 = vsel %vm1921, %v1877, %v1951
        %v1982 = vsel %vm1922, %v1882, %v1952
        %v1983 = vsel %vm1923, %v1885, %v1953
        %v1984 = vsel %vm1924, %v1890, %v1954
        %v1985 = vsel %vm1925, %v1893, %v1955
        %s1986 = ssub.s32 %s293, 1
        %v1987 = vstv %s1986
        %v1988 = vadd.s32 %v1987, 1
        %v1989 = vadd.s32 %v1987, 2
        %v1990 = vadd.s32 %v1987, 3
        %v1991 = vadd.s32 %v1987, 4
        %v1992 = vadd.s32 %v1987, 5
        %v1993 = vadd.s32 %v1987, 6
        %v1994 = vadd.s32 %v1987, 7
        %v1995 = vadd.s32 %v1987, 8
        %v1996 = vadd.s32 %v1987, 9
        %v1997 = vlaneseq
        %v1998 = vshrl.u32 %v1997, 7
        %v1999 = vadd.s32 %v1998, 8
        %v2000 = vadd.s32 %v1998, 16
        %vm2001 = vcmp.ge.s32.totalorder %v1987, 0
        %vm2002 = vcmp.ge.s32.totalorder %v1988, 0
        %vm2003 = vcmp.ge.s32.totalorder %v1989, 0
        %vm2004 = vcmp.ge.s32.totalorder %v1990, 0
        %vm2005 = vcmp.ge.s32.totalorder %v1991, 0
        %vm2006 = vcmp.ge.s32.totalorder %v1992, 0
        %vm2007 = vcmp.ge.s32.totalorder %v1993, 0
        %vm2008 = vcmp.ge.s32.totalorder %v1994, 0
        %vm2009 = vcmp.ge.s32.totalorder %v1995, 0
        %vm2010 = vcmp.ge.s32.totalorder %v1996, 0
        %vm2011 = vcmp.lt.s32.totalorder %v1987, 16
        %vm2012 = vcmp.lt.s32.totalorder %v1988, 16
        %vm2013 = vcmp.lt.s32.totalorder %v1989, 16
        %vm2014 = vcmp.lt.s32.totalorder %v1990, 16
        %vm2015 = vcmp.lt.s32.totalorder %v1991, 16
        %vm2016 = vcmp.lt.s32.totalorder %v1992, 16
        %vm2017 = vcmp.lt.s32.totalorder %v1993, 16
        %vm2018 = vcmp.lt.s32.totalorder %v1994, 16
        %vm2019 = vcmp.lt.s32.totalorder %v1995, 16
        %vm2020 = vcmp.lt.s32.totalorder %v1996, 16
        %vm2021 = vmand %vm2001, %vm2011
        %vm2022 = vmand %vm2002, %vm2012
        %vm2023 = vmand %vm2003, %vm2013
        %vm2024 = vmand %vm2004, %vm2014
        %vm2025 = vmand %vm2005, %vm2015
        %vm2026 = vmand %vm2006, %vm2016
        %vm2027 = vmand %vm2007, %vm2017
        %vm2028 = vmand %vm2008, %vm2018
        %vm2029 = vmand %vm2009, %vm2019
        %vm2030 = vmand %vm2010, %vm2020
        %vm2031 = vcmp.ge.s32.totalorder %v1998, 1
        %vm2032 = vcmp.ge.s32.totalorder %v1999, 1
        %vm2033 = vcmp.ge.s32.totalorder %v2000, 1
        %vm2034 = vmand %vm2021, %vm2031
        %vm2035 = vmand %vm2021, %vm2032
        %vm2036 = vmand %vm2021, %vm2033
        %vm2037 = vmand %vm2022, %vm2031
        %vm2038 = vmand %vm2022, %vm2032
        %vm2039 = vmand %vm2022, %vm2033
        %vm2040 = vmand %vm2023, %vm2031
        %vm2041 = vmand %vm2023, %vm2032
        %vm2042 = vmand %vm2023, %vm2033
        %vm2043 = vmand %vm2024, %vm2031
        %vm2044 = vmand %vm2024, %vm2032
        %vm2045 = vmand %vm2024, %vm2033
        %vm2046 = vmand %vm2025, %vm2031
        %vm2047 = vmand %vm2025, %vm2032
        %vm2048 = vmand %vm2025, %vm2033
        %vm2049 = vmand %vm2026, %vm2031
        %vm2050 = vmand %vm2026, %vm2032
        %vm2051 = vmand %vm2026, %vm2033
        %vm2052 = vmand %vm2027, %vm2031
        %vm2053 = vmand %vm2027, %vm2032
        %vm2054 = vmand %vm2027, %vm2033
        %vm2055 = vmand %vm2028, %vm2031
        %vm2056 = vmand %vm2028, %vm2032
        %vm2057 = vmand %vm2028, %vm2033
        %vm2058 = vmand %vm2029, %vm2031
        %vm2059 = vmand %vm2029, %vm2032
        %vm2060 = vmand %vm2029, %vm2033
        %vm2061 = vmand %vm2030, %vm2031
        %vm2062 = vmand %vm2030, %vm2032
        %vm2063 = vmand %vm2030, %vm2033
        %vm2064 = vcmp.le.s32.totalorder %v1998, 16
        %vm2065 = vcmp.le.s32.totalorder %v1999, 16
        %vm2066 = vcmp.le.s32.totalorder %v2000, 16
        %vm2067 = vmand %vm2034, %vm2064
        %vm2068 = vmand %vm2035, %vm2065
        %vm2069 = vmand %vm2036, %vm2066
        %vm2070 = vmand %vm2037, %vm2064
        %vm2071 = vmand %vm2038, %vm2065
        %vm2072 = vmand %vm2039, %vm2066
        %vm2073 = vmand %vm2040, %vm2064
        %vm2074 = vmand %vm2041, %vm2065
        %vm2075 = vmand %vm2042, %vm2066
        %vm2076 = vmand %vm2043, %vm2064
        %vm2077 = vmand %vm2044, %vm2065
        %vm2078 = vmand %vm2045, %vm2066
        %vm2079 = vmand %vm2046, %vm2064
        %vm2080 = vmand %vm2047, %vm2065
        %vm2081 = vmand %vm2048, %vm2066
        %vm2082 = vmand %vm2049, %vm2064
        %vm2083 = vmand %vm2050, %vm2065
        %vm2084 = vmand %vm2051, %vm2066
        %vm2085 = vmand %vm2052, %vm2064
        %vm2086 = vmand %vm2053, %vm2065
        %vm2087 = vmand %vm2054, %vm2066
        %vm2088 = vmand %vm2055, %vm2064
        %vm2089 = vmand %vm2056, %vm2065
        %vm2090 = vmand %vm2057, %vm2066
        %vm2091 = vmand %vm2058, %vm2064
        %vm2092 = vmand %vm2059, %vm2065
        %vm2093 = vmand %vm2060, %vm2066
        %vm2094 = vmand %vm2061, %vm2064
        %vm2095 = vmand %vm2062, %vm2065
        %vm2096 = vmand %vm2063, %vm2066
        %v2097 = vsel %vm2067, 1, 0
        %v2098 = vsel %vm2068, 1, 0
        %v2099 = vsel %vm2069, 1, 0
        %v2100 = vsel %vm2070, 1, 0
        %v2101 = vsel %vm2071, 1, 0
        %v2102 = vsel %vm2072, 1, 0
        %v2103 = vsel %vm2073, 1, 0
        %v2104 = vsel %vm2074, 1, 0
        %v2105 = vsel %vm2075, 1, 0
        %v2106 = vsel %vm2076, 1, 0
        %v2107 = vsel %vm2077, 1, 0
        %v2108 = vsel %vm2078, 1, 0
        %v2109 = vsel %vm2079, 1, 0
        %v2110 = vsel %vm2080, 1, 0
        %v2111 = vsel %vm2081, 1, 0
        %v2112 = vsel %vm2082, 1, 0
        %v2113 = vsel %vm2083, 1, 0
        %v2114 = vsel %vm2084, 1, 0
        %v2115 = vsel %vm2085, 1, 0
        %v2116 = vsel %vm2086, 1, 0
        %v2117 = vsel %vm2087, 1, 0
        %v2118 = vsel %vm2088, 1, 0
        %v2119 = vsel %vm2089, 1, 0
        %v2120 = vsel %vm2090, 1, 0
        %v2121 = vsel %vm2091, 1, 0
        %v2122 = vsel %vm2092, 1, 0
        %v2123 = vsel %vm2093, 1, 0
        %v2124 = vsel %vm2094, 1, 0
        %v2125 = vsel %vm2095, 1, 0
        %v2126 = vsel %vm2096, 1, 0
        %vm2127 = vcmp.eq.s32.totalorder %v2097, 1
        %vm2128 = vcmp.eq.s32.totalorder %v2098, 1
        %vm2129 = vcmp.eq.s32.totalorder %v2099, 1
        %vm2130 = vcmp.eq.s32.totalorder %v2100, 1
        %vm2131 = vcmp.eq.s32.totalorder %v2101, 1
        %vm2132 = vcmp.eq.s32.totalorder %v2102, 1
        %vm2133 = vcmp.eq.s32.totalorder %v2103, 1
        %vm2134 = vcmp.eq.s32.totalorder %v2104, 1
        %vm2135 = vcmp.eq.s32.totalorder %v2105, 1
        %vm2136 = vcmp.eq.s32.totalorder %v2106, 1
        %vm2137 = vcmp.eq.s32.totalorder %v2107, 1
        %vm2138 = vcmp.eq.s32.totalorder %v2108, 1
        %vm2139 = vcmp.eq.s32.totalorder %v2109, 1
        %vm2140 = vcmp.eq.s32.totalorder %v2110, 1
        %vm2141 = vcmp.eq.s32.totalorder %v2111, 1
        %vm2142 = vcmp.eq.s32.totalorder %v2112, 1
        %vm2143 = vcmp.eq.s32.totalorder %v2113, 1
        %vm2144 = vcmp.eq.s32.totalorder %v2114, 1
        %vm2145 = vcmp.eq.s32.totalorder %v2115, 1
        %vm2146 = vcmp.eq.s32.totalorder %v2116, 1
        %vm2147 = vcmp.eq.s32.totalorder %v2117, 1
        %vm2148 = vcmp.eq.s32.totalorder %v2118, 1
        %vm2149 = vcmp.eq.s32.totalorder %v2119, 1
        %vm2150 = vcmp.eq.s32.totalorder %v2120, 1
        %vm2151 = vcmp.eq.s32.totalorder %v2121, 1
        %vm2152 = vcmp.eq.s32.totalorder %v2122, 1
        %vm2153 = vcmp.eq.s32.totalorder %v2123, 1
        %vm2154 = vcmp.eq.s32.totalorder %v2124, 1
        %vm2155 = vcmp.eq.s32.totalorder %v2125, 1
        %vm2156 = vcmp.eq.s32.totalorder %v2126, 1
        %v2157 = vsel %vm2127, %v1956, 0.0
        %v2158 = vsel %vm2128, %v1957, 0.0
        %v2159 = vsel %vm2129, %v1958, 0.0
        %v2160 = vsel %vm2130, %v1959, 0.0
        %v2161 = vsel %vm2131, %v1960, 0.0
        %v2162 = vsel %vm2132, %v1961, 0.0
        %v2163 = vsel %vm2133, %v1962, 0.0
        %v2164 = vsel %vm2134, %v1963, 0.0
        %v2165 = vsel %vm2135, %v1964, 0.0
        %v2166 = vsel %vm2136, %v1965, 0.0
        %v2167 = vsel %vm2137, %v1966, 0.0
        %v2168 = vsel %vm2138, %v1967, 0.0
        %v2169 = vsel %vm2139, %v1968, 0.0
        %v2170 = vsel %vm2140, %v1969, 0.0
        %v2171 = vsel %vm2141, %v1970, 0.0
        %v2172 = vsel %vm2142, %v1971, 0.0
        %v2173 = vsel %vm2143, %v1972, 0.0
        %v2174 = vsel %vm2144, %v1973, 0.0
        %v2175 = vsel %vm2145, %v1974, 0.0
        %v2176 = vsel %vm2146, %v1975, 0.0
        %v2177 = vsel %vm2147, %v1976, 0.0
        %v2178 = vsel %vm2148, %v1977, 0.0
        %v2179 = vsel %vm2149, %v1978, 0.0
        %v2180 = vsel %vm2150, %v1979, 0.0
        %v2181 = vsel %vm2151, %v1980, 0.0
        %v2182 = vsel %vm2152, %v1981, 0.0
        %v2183 = vsel %vm2153, %v1982, 0.0
        %v2184 = vsel %vm2154, %v1983, 0.0
        %v2185 = vsel %vm2155, %v1984, 0.0
        %v2186 = vsel %vm2156, %v1985, 0.0
        %v2187 = vpack.c.bf16 %v2158, %v2157
        %v2188 = vpack.c.bf16 %v2159, %v2159
        %v2189 = vpack.c.bf16 %v2161, %v2160
        %v2190 = vpack.c.bf16 %v2162, %v2162
        %v2191 = vpack.c.bf16 %v2164, %v2163
        %v2192 = vpack.c.bf16 %v2165, %v2165
        %v2193 = vpack.c.bf16 %v2167, %v2166
        %v2194 = vpack.c.bf16 %v2168, %v2168
        %v2195 = vpack.c.bf16 %v2170, %v2169
        %v2196 = vpack.c.bf16 %v2171, %v2171
        %v2197 = vpack.c.bf16 %v2173, %v2172
        %v2198 = vpack.c.bf16 %v2174, %v2174
        %v2199 = vpack.c.bf16 %v2176, %v2175
        %v2200 = vpack.c.bf16 %v2177, %v2177
        %v2201 = vpack.c.bf16 %v2179, %v2178
        %v2202 = vpack.c.bf16 %v2180, %v2180
        %v2203 = vpack.c.bf16 %v2182, %v2181
        %v2204 = vpack.c.bf16 %v2183, %v2183
        %v2205 = vpack.c.bf16 %v2185, %v2184
        %v2206 = vpack.c.bf16 %v2186, %v2186
        %vm2207 = vcmask 64512
        %2208 = vst.msk [vmem:[#allocation3] sm:$0xff] %vm2207, %v2187
        %2209 = vst.msk [vmem:[#allocation3 + $0x8] sm:$0xff] %vm2207, %v2189
        %2210 = vst.msk [vmem:[#allocation3 + $0x10] sm:$0xff] %vm2207, %v2191
        %2211 = vst.msk [vmem:[#allocation3 + $0x18] sm:$0xff] %vm2207, %v2193
        %2212 = vst.msk [vmem:[#allocation3 + $0x20] sm:$0xff] %vm2207, %v2195
        %2213 = vst.msk [vmem:[#allocation3 + $0x28] sm:$0xff] %vm2207, %v2197
        %2214 = vst.msk [vmem:[#allocation3 + $0x30] sm:$0xff] %vm2207, %v2199
        %2215 = vst.msk [vmem:[#allocation3 + $0x38] sm:$0xff] %vm2207, %v2201
        %vm2216 = vsmask.f32 7424
        %v2218 = vshrl.u32 %v2187, 16
        %v2220 = vshll.u32 %v2187, 16
        %v2222 = vrot.slane %v2220, 1
        %v2223 = vor.u32 %v2218, %v2222
        %v2225 = vshll.u32 %v2188, 16
        %v2227 = vrot.slane %v2225, 1
        %v2228 = vsel %vm2216, %v2223, %v2227
        %v2230 = vshrl.u32 %v2189, 16
        %v2232 = vshll.u32 %v2189, 16
        %v2234 = vrot.slane %v2232, 1
        %v2235 = vor.u32 %v2230, %v2234
        %v2237 = vshll.u32 %v2190, 16
        %v2239 = vrot.slane %v2237, 1
        %v2240 = vsel %vm2216, %v2235, %v2239
        %v2242 = vshrl.u32 %v2191, 16
        %v2244 = vshll.u32 %v2191, 16
        %v2246 = vrot.slane %v2244, 1
        %v2247 = vor.u32 %v2242, %v2246
        %v2249 = vshll.u32 %v2192, 16
        %v2251 = vrot.slane %v2249, 1
        %v2252 = vsel %vm2216, %v2247, %v2251
        %v2254 = vshrl.u32 %v2193, 16
        %v2256 = vshll.u32 %v2193, 16
        %v2258 = vrot.slane %v2256, 1
        %v2259 = vor.u32 %v2254, %v2258
        %v2261 = vshll.u32 %v2194, 16
        %v2263 = vrot.slane %v2261, 1
        %v2264 = vsel %vm2216, %v2259, %v2263
        %v2266 = vshrl.u32 %v2195, 16
        %v2268 = vshll.u32 %v2195, 16
        %v2270 = vrot.slane %v2268, 1
        %v2271 = vor.u32 %v2266, %v2270
        %v2273 = vshll.u32 %v2196, 16
        %v2275 = vrot.slane %v2273, 1
        %v2276 = vsel %vm2216, %v2271, %v2275
        %v2278 = vshrl.u32 %v2197, 16
        %v2280 = vshll.u32 %v2197, 16
        %v2282 = vrot.slane %v2280, 1
        %v2283 = vor.u32 %v2278, %v2282
        %v2285 = vshll.u32 %v2198, 16
        %v2287 = vrot.slane %v2285, 1
        %v2288 = vsel %vm2216, %v2283, %v2287
        %v2290 = vshrl.u32 %v2199, 16
        %v2292 = vshll.u32 %v2199, 16
        %v2294 = vrot.slane %v2292, 1
        %v2295 = vor.u32 %v2290, %v2294
        %v2297 = vshll.u32 %v2200, 16
        %v2299 = vrot.slane %v2297, 1
        %v2300 = vsel %vm2216, %v2295, %v2299
        %v2302 = vshrl.u32 %v2201, 16
        %v2304 = vshll.u32 %v2201, 16
        %v2306 = vrot.slane %v2304, 1
        %v2307 = vor.u32 %v2302, %v2306
        %v2309 = vshll.u32 %v2202, 16
        %v2311 = vrot.slane %v2309, 1
        %v2312 = vsel %vm2216, %v2307, %v2311
        %2313 = vrot.lane.b32.xlu0 %v2228, 8
        %v2314 = vpop.permute.xlu0 %2313
        %2315 = vrot.lane.b32.xlu0 %v2240, 8
        %v2316 = vpop.permute.xlu0 %2315
        %2317 = vrot.lane.b32.xlu0 %v2252, 8
        %v2318 = vpop.permute.xlu0 %2317
        %2319 = vrot.lane.b32.xlu0 %v2264, 8
        %v2320 = vpop.permute.xlu0 %2319
        %2321 = vrot.lane.b32.xlu0 %v2276, 8
        %v2322 = vpop.permute.xlu0 %2321
        %2323 = vrot.lane.b32.xlu0 %v2288, 8
        %v2324 = vpop.permute.xlu0 %2323
        %2325 = vrot.lane.b32.xlu0 %v2300, 8
        %v2326 = vpop.permute.xlu0 %2325
        %2327 = vrot.lane.b32.xlu0 %v2312, 8
        %v2328 = vpop.permute.xlu0 %2327
        %vm2337 = vcmask 130112
        %2338 = vst.msk [vmem:[#allocation3] sm:$0xff] %vm2337, %v2314
        %2339 = vst.msk [vmem:[#allocation3 + $0x8] sm:$0xff] %vm2337, %v2316
        %2340 = vst.msk [vmem:[#allocation3 + $0x10] sm:$0xff] %vm2337, %v2318
        %2341 = vst.msk [vmem:[#allocation3 + $0x18] sm:$0xff] %vm2337, %v2320
        %2342 = vst.msk [vmem:[#allocation3 + $0x20] sm:$0xff] %vm2337, %v2322
        %2343 = vst.msk [vmem:[#allocation3 + $0x28] sm:$0xff] %vm2337, %v2324
        %2344 = vst.msk [vmem:[#allocation3 + $0x30] sm:$0xff] %vm2337, %v2326
        %2345 = vst.msk [vmem:[#allocation3 + $0x38] sm:$0xff] %vm2337, %v2328
        %vm2362 = vcmask 1046528
        %v2363 = vrot.slane %v2187, 1
        %v2364 = vrot.slane %v2188, 1
        %v2365 = vsel %vm2362, %v2363, %v2364
        %v2366 = vrot.slane %v2189, 1
        %v2367 = vrot.slane %v2190, 1
        %v2368 = vsel %vm2362, %v2366, %v2367
        %v2369 = vrot.slane %v2191, 1
        %v2370 = vrot.slane %v2192, 1
        %v2371 = vsel %vm2362, %v2369, %v2370
        %v2372 = vrot.slane %v2193, 1
        %v2373 = vrot.slane %v2194, 1
        %v2374 = vsel %vm2362, %v2372, %v2373
        %v2375 = vrot.slane %v2195, 1
        %v2376 = vrot.slane %v2196, 1
        %v2377 = vsel %vm2362, %v2375, %v2376
        %v2378 = vrot.slane %v2197, 1
        %v2379 = vrot.slane %v2198, 1
        %v2380 = vsel %vm2362, %v2378, %v2379
        %v2381 = vrot.slane %v2199, 1
        %v2382 = vrot.slane %v2200, 1
        %v2383 = vsel %vm2362, %v2381, %v2382
        %v2384 = vrot.slane %v2201, 1
        %v2385 = vrot.slane %v2202, 1
        %v2386 = vsel %vm2362, %v2384, %v2385
        %2387 = vrot.lane.b32.xlu0 %v2365, 16
        %v2388 = vpop.permute.xlu0 %2387
        %2389 = vrot.lane.b32.xlu0 %v2368, 16
        %v2390 = vpop.permute.xlu0 %2389
        %2391 = vrot.lane.b32.xlu0 %v2371, 16
        %v2392 = vpop.permute.xlu0 %2391
        %2393 = vrot.lane.b32.xlu0 %v2374, 16
        %v2394 = vpop.permute.xlu0 %2393
        %2395 = vrot.lane.b32.xlu0 %v2377, 16
        %v2396 = vpop.permute.xlu0 %2395
        %2397 = vrot.lane.b32.xlu0 %v2380, 16
        %v2398 = vpop.permute.xlu0 %2397
        %2399 = vrot.lane.b32.xlu0 %v2383, 16
        %v2400 = vpop.permute.xlu0 %2399
        %2401 = vrot.lane.b32.xlu0 %v2386, 16
        %v2402 = vpop.permute.xlu0 %2401
        %vm2411 = vcmask 195712
        %2412 = vst.msk [vmem:[#allocation3] sm:$0xff] %vm2411, %v2388
        %2413 = vst.msk [vmem:[#allocation3 + $0x8] sm:$0xff] %vm2411, %v2390
        %2414 = vst.msk [vmem:[#allocation3 + $0x10] sm:$0xff] %vm2411, %v2392
        %2415 = vst.msk [vmem:[#allocation3 + $0x18] sm:$0xff] %vm2411, %v2394
        %2416 = vst.msk [vmem:[#allocation3 + $0x20] sm:$0xff] %vm2411, %v2396
        %2417 = vst.msk [vmem:[#allocation3 + $0x28] sm:$0xff] %vm2411, %v2398
        %2418 = vst.msk [vmem:[#allocation3 + $0x30] sm:$0xff] %vm2411, %v2400
        %2419 = vst.msk [vmem:[#allocation3 + $0x38] sm:$0xff] %vm2411, %v2402
        %2421 = vrot.lane.b32.xlu0 %v2189, 24
        %v2422 = vpop.permute.xlu0 %2421
        %2423 = vrot.lane.b32.xlu0 %v2191, 24
        %v2424 = vpop.permute.xlu0 %2423
        %2425 = vrot.lane.b32.xlu0 %v2193, 24
        %v2426 = vpop.permute.xlu0 %2425
        %2427 = vrot.lane.b32.xlu0 %v2195, 24
        %v2428 = vpop.permute.xlu0 %2427
        %2429 = vrot.lane.b32.xlu0 %v2197, 24
        %v2430 = vpop.permute.xlu0 %2429
        %2431 = vrot.lane.b32.xlu0 %v2199, 24
        %v2432 = vpop.permute.xlu0 %2431
        %2433 = vrot.lane.b32.xlu0 %v2201, 24
        %v2434 = vpop.permute.xlu0 %2433
        %2435 = vrot.lane.b32.xlu0 %v2203, 24
        %v2436 = vpop.permute.xlu0 %2435
        %vm2445 = vcmask 261312
        %2446 = vst.msk [vmem:[#allocation3] sm:$0xff] %vm2445, %v2422
        %2447 = vst.msk [vmem:[#allocation3 + $0x8] sm:$0xff] %vm2445, %v2424
        %2448 = vst.msk [vmem:[#allocation3 + $0x10] sm:$0xff] %vm2445, %v2426
        %2449 = vst.msk [vmem:[#allocation3 + $0x18] sm:$0xff] %vm2445, %v2428
        %2450 = vst.msk [vmem:[#allocation3 + $0x20] sm:$0xff] %vm2445, %v2430
        %2451 = vst.msk [vmem:[#allocation3 + $0x28] sm:$0xff] %vm2445, %v2432
        %2452 = vst.msk [vmem:[#allocation3 + $0x30] sm:$0xff] %vm2445, %v2434
        %2453 = vst.msk [vmem:[#allocation3 + $0x38] sm:$0xff] %vm2445, %v2436
        %v2455 = vshrl.u32 %v2203, 16
        %v2457 = vshll.u32 %v2203, 16
        %v2459 = vrot.slane %v2457, 1
        %v2460 = vor.u32 %v2455, %v2459
        %v2462 = vshll.u32 %v2204, 16
        %v2464 = vrot.slane %v2462, 1
        %v2465 = vsel %vm2216, %v2460, %v2464
        %2466 = vrot.lane.b32.xlu0 %v2240, 32
        %v2467 = vpop.permute.xlu0 %2466
        %2468 = vrot.lane.b32.xlu0 %v2252, 32
        %v2469 = vpop.permute.xlu0 %2468
        %2470 = vrot.lane.b32.xlu0 %v2264, 32
        %v2471 = vpop.permute.xlu0 %2470
        %2472 = vrot.lane.b32.xlu0 %v2276, 32
        %v2473 = vpop.permute.xlu0 %2472
        %2474 = vrot.lane.b32.xlu0 %v2288, 32
        %v2475 = vpop.permute.xlu0 %2474
        %2476 = vrot.lane.b32.xlu0 %v2300, 32
        %v2477 = vpop.permute.xlu0 %2476
        %2478 = vrot.lane.b32.xlu0 %v2312, 32
        %v2479 = vpop.permute.xlu0 %2478
        %2480 = vrot.lane.b32.xlu0 %v2465, 32
        %v2481 = vpop.permute.xlu0 %2480
        %vm2490 = vcmask 326912
        %2491 = vst.msk [vmem:[#allocation3] sm:$0xff] %vm2490, %v2467
        %2492 = vst.msk [vmem:[#allocation3 + $0x8] sm:$0xff] %vm2490, %v2469
        %2493 = vst.msk [vmem:[#allocation3 + $0x10] sm:$0xff] %vm2490, %v2471
        %2494 = vst.msk [vmem:[#allocation3 + $0x18] sm:$0xff] %vm2490, %v2473
        %2495 = vst.msk [vmem:[#allocation3 + $0x20] sm:$0xff] %vm2490, %v2475
        %2496 = vst.msk [vmem:[#allocation3 + $0x28] sm:$0xff] %vm2490, %v2477
        %2497 = vst.msk [vmem:[#allocation3 + $0x30] sm:$0xff] %vm2490, %v2479
        %2498 = vst.msk [vmem:[#allocation3 + $0x38] sm:$0xff] %vm2490, %v2481
        %v2500 = vrot.slane %v2203, 1
        %v2501 = vrot.slane %v2204, 1
        %v2502 = vsel %vm2362, %v2500, %v2501
        %2503 = vrot.lane.b32.xlu0 %v2368, 40
        %v2504 = vpop.permute.xlu0 %2503
        %2505 = vrot.lane.b32.xlu0 %v2371, 40
        %v2506 = vpop.permute.xlu0 %2505
        %2507 = vrot.lane.b32.xlu0 %v2374, 40
        %v2508 = vpop.permute.xlu0 %2507
        %2509 = vrot.lane.b32.xlu0 %v2377, 40
        %v2510 = vpop.permute.xlu0 %2509
        %2511 = vrot.lane.b32.xlu0 %v2380, 40
        %v2512 = vpop.permute.xlu0 %2511
        %2513 = vrot.lane.b32.xlu0 %v2383, 40
        %v2514 = vpop.permute.xlu0 %2513
        %2515 = vrot.lane.b32.xlu0 %v2386, 40
        %v2516 = vpop.permute.xlu0 %2515
        %2517 = vrot.lane.b32.xlu0 %v2502, 40
        %v2518 = vpop.permute.xlu0 %2517
        %vm2527 = vcmask 392512
        %2528 = vst.msk [vmem:[#allocation3] sm:$0xff] %vm2527, %v2504
        %2529 = vst.msk [vmem:[#allocation3 + $0x8] sm:$0xff] %vm2527, %v2506
        %2530 = vst.msk [vmem:[#allocation3 + $0x10] sm:$0xff] %vm2527, %v2508
        %2531 = vst.msk [vmem:[#allocation3 + $0x18] sm:$0xff] %vm2527, %v2510
        %2532 = vst.msk [vmem:[#allocation3 + $0x20] sm:$0xff] %vm2527, %v2512
        %2533 = vst.msk [vmem:[#allocation3 + $0x28] sm:$0xff] %vm2527, %v2514
        %2534 = vst.msk [vmem:[#allocation3 + $0x30] sm:$0xff] %vm2527, %v2516
        %2535 = vst.msk [vmem:[#allocation3 + $0x38] sm:$0xff] %vm2527, %v2518
        %2537 = vrot.lane.b32.xlu0 %v2191, 48
        %v2538 = vpop.permute.xlu0 %2537
        %2539 = vrot.lane.b32.xlu0 %v2193, 48
        %v2540 = vpop.permute.xlu0 %2539
        %2541 = vrot.lane.b32.xlu0 %v2195, 48
        %v2542 = vpop.permute.xlu0 %2541
        %2543 = vrot.lane.b32.xlu0 %v2197, 48
        %v2544 = vpop.permute.xlu0 %2543
        %2545 = vrot.lane.b32.xlu0 %v2199, 48
        %v2546 = vpop.permute.xlu0 %2545
        %2547 = vrot.lane.b32.xlu0 %v2201, 48
        %v2548 = vpop.permute.xlu0 %2547
        %2549 = vrot.lane.b32.xlu0 %v2203, 48
        %v2550 = vpop.permute.xlu0 %2549
        %2551 = vrot.lane.b32.xlu0 %v2205, 48
        %v2552 = vpop.permute.xlu0 %2551
        %vm2561 = vcmask 458112
        %2562 = vst.msk [vmem:[#allocation3] sm:$0xff] %vm2561, %v2538
        %2563 = vst.msk [vmem:[#allocation3 + $0x8] sm:$0xff] %vm2561, %v2540
        %2564 = vst.msk [vmem:[#allocation3 + $0x10] sm:$0xff] %vm2561, %v2542
        %2565 = vst.msk [vmem:[#allocation3 + $0x18] sm:$0xff] %vm2561, %v2544
        %2566 = vst.msk [vmem:[#allocation3 + $0x20] sm:$0xff] %vm2561, %v2546
        %2567 = vst.msk [vmem:[#allocation3 + $0x28] sm:$0xff] %vm2561, %v2548
        %2568 = vst.msk [vmem:[#allocation3 + $0x30] sm:$0xff] %vm2561, %v2550
        %2569 = vst.msk [vmem:[#allocation3 + $0x38] sm:$0xff] %vm2561, %v2552
        %v2571 = vshrl.u32 %v2205, 16
        %v2573 = vshll.u32 %v2205, 16
        %v2575 = vrot.slane %v2573, 1
        %v2576 = vor.u32 %v2571, %v2575
        %v2578 = vshll.u32 %v2206, 16
        %v2580 = vrot.slane %v2578, 1
        %v2581 = vsel %vm2216, %v2576, %v2580
        %2582 = vrot.lane.b32.xlu0 %v2252, 56
        %v2583 = vpop.permute.xlu0 %2582
        %2584 = vrot.lane.b32.xlu0 %v2264, 56
        %v2585 = vpop.permute.xlu0 %2584
        %2586 = vrot.lane.b32.xlu0 %v2276, 56
        %v2587 = vpop.permute.xlu0 %2586
        %2588 = vrot.lane.b32.xlu0 %v2288, 56
        %v2589 = vpop.permute.xlu0 %2588
        %2590 = vrot.lane.b32.xlu0 %v2300, 56
        %v2591 = vpop.permute.xlu0 %2590
        %2592 = vrot.lane.b32.xlu0 %v2312, 56
        %v2593 = vpop.permute.xlu0 %2592
        %2594 = vrot.lane.b32.xlu0 %v2465, 56
        %v2595 = vpop.permute.xlu0 %2594
        %2596 = vrot.lane.b32.xlu0 %v2581, 56
        %v2597 = vpop.permute.xlu0 %2596
        %vm2606 = vcmask 523712
        %2607 = vst.msk [vmem:[#allocation3] sm:$0xff] %vm2606, %v2583
        %2608 = vst.msk [vmem:[#allocation3 + $0x8] sm:$0xff] %vm2606, %v2585
        %2609 = vst.msk [vmem:[#allocation3 + $0x10] sm:$0xff] %vm2606, %v2587
        %2610 = vst.msk [vmem:[#allocation3 + $0x18] sm:$0xff] %vm2606, %v2589
        %2611 = vst.msk [vmem:[#allocation3 + $0x20] sm:$0xff] %vm2606, %v2591
        %2612 = vst.msk [vmem:[#allocation3 + $0x28] sm:$0xff] %vm2606, %v2593
        %2613 = vst.msk [vmem:[#allocation3 + $0x30] sm:$0xff] %vm2606, %v2595
        %2614 = vst.msk [vmem:[#allocation3 + $0x38] sm:$0xff] %vm2606, %v2597
        %v2616 = vrot.slane %v2205, 1
        %v2617 = vrot.slane %v2206, 1
        %v2618 = vsel %vm2362, %v2616, %v2617
        %2619 = vrot.lane.b32.xlu0 %v2371, 64
        %v2620 = vpop.permute.xlu0 %2619
        %2621 = vrot.lane.b32.xlu0 %v2374, 64
        %v2622 = vpop.permute.xlu0 %2621
        %2623 = vrot.lane.b32.xlu0 %v2377, 64
        %v2624 = vpop.permute.xlu0 %2623
        %2625 = vrot.lane.b32.xlu0 %v2380, 64
        %v2626 = vpop.permute.xlu0 %2625
        %2627 = vrot.lane.b32.xlu0 %v2383, 64
        %v2628 = vpop.permute.xlu0 %2627
        %2629 = vrot.lane.b32.xlu0 %v2386, 64
        %v2630 = vpop.permute.xlu0 %2629
        %2631 = vrot.lane.b32.xlu0 %v2502, 64
        %v2632 = vpop.permute.xlu0 %2631
        %2633 = vrot.lane.b32.xlu0 %v2618, 64
        %v2634 = vpop.permute.xlu0 %2633
        %vm2643 = vcmask 589312
        %2644 = vst.msk [vmem:[#allocation3] sm:$0xff] %vm2643, %v2620
        %2645 = vst.msk [vmem:[#allocation3 + $0x8] sm:$0xff] %vm2643, %v2622
        %2646 = vst.msk [vmem:[#allocation3 + $0x10] sm:$0xff] %vm2643, %v2624
        %2647 = vst.msk [vmem:[#allocation3 + $0x18] sm:$0xff] %vm2643, %v2626
        %2648 = vst.msk [vmem:[#allocation3 + $0x20] sm:$0xff] %vm2643, %v2628
        %2649 = vst.msk [vmem:[#allocation3 + $0x28] sm:$0xff] %vm2643, %v2630
        %2650 = vst.msk [vmem:[#allocation3 + $0x30] sm:$0xff] %vm2643, %v2632
        %2651 = vst.msk [vmem:[#allocation3 + $0x38] sm:$0xff] %vm2643, %v2634
        %v2652 = vld [vmem:[#allocation3] sm:$0xff]
        %v2653 = vld [vmem:[#allocation3 + $0x8] sm:$0xff]
        %v2654 = vld [vmem:[#allocation3 + $0x10] sm:$0xff]
        %v2655 = vld [vmem:[#allocation3 + $0x18] sm:$0xff]
        %v2656 = vld [vmem:[#allocation3 + $0x20] sm:$0xff]
        %v2657 = vld [vmem:[#allocation3 + $0x28] sm:$0xff]
        %v2658 = vld [vmem:[#allocation3 + $0x30] sm:$0xff]
        %v2659 = vld [vmem:[#allocation3 + $0x38] sm:$0xff]
        %v2660 = vld [vmem:[%s3] sm:$0xff]
        %v2661 = vld [vmem:[%s3 + $0x8] sm:$0xff]
        %v2662 = vld [vmem:[%s3 + $0x10] sm:$0xff]
        %v2663 = vld [vmem:[%s3 + $0x18] sm:$0xff]
        %v2664 = vld [vmem:[%s3 + $0x20] sm:$0xff]
        %v2665 = vld [vmem:[%s3 + $0x28] sm:$0xff]
        %v2666 = vld [vmem:[%s3 + $0x30] sm:$0xff]
        %v2667 = vld [vmem:[%s3 + $0x38] sm:$0xff]
        %v2668 = vld [vmem:[%s3 + $0x40] sm:$0xff]
        %v2669 = vld [vmem:[%s4] sm:$0x3]
        %v2671 = vlaneseq
        %v2672 = vshrl.u32 %v2671, 7
        %v2673 = vsub.s32 0, %v2672
        %v2674 = vrot.slane %v2669, %v2673
        %v2675 = vlaneseq
        %v2676 = vshrl.u32 %v2675, 7
        %v2677 = vsub.s32 1, %v2676
        %v2678 = vrot.slane %v2669, %v2677
        %v2690 = vunpack.c.l.b16 %v2660
        %v2691 = vunpack.c.h.b16 %v2660
        %v2692 = vunpack.c.l.b16 %v2661
        %v2693 = vunpack.c.h.b16 %v2661
        %v2694 = vunpack.c.l.b16 %v2662
        %v2695 = vunpack.c.h.b16 %v2662
        %v2696 = vunpack.c.l.b16 %v2663
        %v2697 = vunpack.c.h.b16 %v2663
        %v2698 = vunpack.c.l.b16 %v2664
        %v2699 = vunpack.c.h.b16 %v2664
        %v2700 = vunpack.c.l.b16 %v2665
        %v2701 = vunpack.c.h.b16 %v2665
        %v2702 = vunpack.c.l.b16 %v2666
        %v2703 = vunpack.c.h.b16 %v2666
        %v2704 = vunpack.c.l.b16 %v2667
        %v2705 = vunpack.c.h.b16 %v2667
        %v2706 = vunpack.c.l.b16 %v2668
        %v2707 = vunpack.c.h.b16 %v2668
        %v2708 = vpack.c.b16 %v2692, %v2690
        %v2709 = vpack.c.b16 %v2693, %v2691
        %v2710 = vpack.c.b16 %v2696, %v2694
        %v2711 = vpack.c.b16 %v2697, %v2695
        %v2712 = vpack.c.b16 %v2700, %v2698
        %v2713 = vpack.c.b16 %v2701, %v2699
        %v2714 = vpack.c.b16 %v2704, %v2702
        %v2715 = vpack.c.b16 %v2705, %v2703
        %v2716 = vpack.c.b16 %v2706, %v2706
        %v2717 = vpack.c.b16 %v2707, %v2707
        %vm2726 = vcmask 588800
        %v2728 = vsel %vm2726, %v2652, 0
        %v2731 = vsel %vm2726, %v2653, 0
        %v2734 = vsel %vm2726, %v2654, 0
        %v2737 = vsel %vm2726, %v2655, 0
        %v2740 = vsel %vm2726, %v2656, 0
        %v2743 = vsel %vm2726, %v2657, 0
        %v2746 = vsel %vm2726, %v2658, 0
        %v2749 = vsel %vm2726, %v2659, 0
        %vm2751 = vcmask 1043456
        %v2753 = vsel %vm2751, %v2716, 0
        %v2756 = vsel %vm2751, %v2717, 0
        %2758 = vmatprep.subr.bf16.mxu0 %v2709
        %2759 = vmatpush1.bf16.msra.mxu0 %v2708
        %2760 = vmatprep.subr.bf16.mxu0 %v2711
        %2761 = vmatpush1.bf16.msra.mxu0 %v2710
        %2762 = vmatprep.subr.bf16.mxu0 %v2713
        %2763 = vmatpush1.bf16.msra.mxu0 %v2712
        %2764 = vmatprep.subr.bf16.mxu0 %v2715
        %2765 = vmatpush1.bf16.msra.mxu0 %v2714
        %2766 = vmatprep.subr.bf16.mxu0 %v2756
        %2767 = vmatpush1.bf16.msra.mxu0 %v2753
        %2768 = vmatprep.subr.bf16.mxu0 0
        %2769 = vmatpush1.bf16.msra.mxu0 0
        %2770 = vmatprep.subr.bf16.mxu0 0
        %2771 = vmatpush1.bf16.msra.mxu0 0
        %2772 = vmatprep.subr.bf16.mxu0 0
        %2773 = vmatpush1.bf16.msra.mxu0 0
        %2774 = vmatprep.subr.bf16.mxu0 0
        %2775 = vmatpush1.bf16.msra.mxu0 0
        %2776 = vmatprep.subr.bf16.mxu0 0
        %2777 = vmatpush1.bf16.msra.mxu0 0
        %2778 = vmatprep.subr.bf16.mxu0 0
        %2779 = vmatpush1.bf16.msra.mxu0 0
        %2780 = vmatprep.subr.bf16.mxu0 0
        %2781 = vmatpush1.bf16.msra.mxu0 0
        %2782 = vmatprep.subr.bf16.mxu0 0
        %2783 = vmatpush1.bf16.msra.mxu0 0
        %2784 = vmatprep.subr.bf16.mxu0 0
        %2785 = vmatpush1.bf16.msra.mxu0 0
        %2786 = vmatprep.subr.bf16.mxu0 0
        %2787 = vmatpush1.bf16.msra.mxu0 0
        %2788 = vmatprep.subr.bf16.mxu0 0
        %2789 = vmatpush1.bf16.msra.mxu0 0
        %2790 = vmatprep.mubr.bf16.mxu0 0
        %2791 = vmatmul.mubr.bf16.gmra.mrb[0].mxu0 %v2728
        %v2792 = vpop.f32.mrb[0].mxu0
        %v2793 = vadd.f32 %v2674, %v2792
        %v2794 = vpop.f32.mrb[0].mxu0
        %v2795 = vadd.f32 %v2678, %v2794
        %v2796 = vpop.f32.mrb[0].mxu0
        %v2797 = vadd.f32 %v2674, %v2796
        %v2798 = vpop.f32.mrb[0].mxu0
        %v2799 = vadd.f32 %v2678, %v2798
        %2800 = vmatprep.mubr.bf16.mxu0 0
        %2801 = vmatmul.mubr.bf16.gmra.mrb[0].mxu0 %v2731
        %v2802 = vpop.f32.mrb[0].mxu0
        %v2803 = vadd.f32 %v2674, %v2802
        %v2804 = vpop.f32.mrb[0].mxu0
        %v2805 = vadd.f32 %v2678, %v2804
        %v2806 = vpop.f32.mrb[0].mxu0
        %v2807 = vadd.f32 %v2674, %v2806
        %v2808 = vpop.f32.mrb[0].mxu0
        %v2809 = vadd.f32 %v2678, %v2808
        %2810 = vmatprep.mubr.bf16.mxu0 0
        %2811 = vmatmul.mubr.bf16.gmra.mrb[0].mxu0 %v2734
        %v2812 = vpop.f32.mrb[0].mxu0
        %v2813 = vadd.f32 %v2674, %v2812
        %v2814 = vpop.f32.mrb[0].mxu0
        %v2815 = vadd.f32 %v2678, %v2814
        %v2816 = vpop.f32.mrb[0].mxu0
        %v2817 = vadd.f32 %v2674, %v2816
        %v2818 = vpop.f32.mrb[0].mxu0
        %v2819 = vadd.f32 %v2678, %v2818
        %2820 = vmatprep.mubr.bf16.mxu0 0
        %2821 = vmatmul.mubr.bf16.gmra.mrb[0].mxu0 %v2737
        %v2822 = vpop.f32.mrb[0].mxu0
        %v2823 = vadd.f32 %v2674, %v2822
        %v2824 = vpop.f32.mrb[0].mxu0
        %v2825 = vadd.f32 %v2678, %v2824
        %v2826 = vpop.f32.mrb[0].mxu0
        %v2827 = vadd.f32 %v2674, %v2826
        %v2828 = vpop.f32.mrb[0].mxu0
        %v2829 = vadd.f32 %v2678, %v2828
        %2830 = vmatprep.mubr.bf16.mxu0 0
        %2831 = vmatmul.mubr.bf16.gmra.mrb[0].mxu0 %v2740
        %v2832 = vpop.f32.mrb[0].mxu0
        %v2833 = vadd.f32 %v2674, %v2832
        %v2834 = vpop.f32.mrb[0].mxu0
        %v2835 = vadd.f32 %v2678, %v2834
        %v2836 = vpop.f32.mrb[0].mxu0
        %v2837 = vadd.f32 %v2674, %v2836
        %v2838 = vpop.f32.mrb[0].mxu0
        %v2839 = vadd.f32 %v2678, %v2838
        %2840 = vmatprep.mubr.bf16.mxu0 0
        %2841 = vmatmul.mubr.bf16.gmra.mrb[0].mxu0 %v2743
        %v2842 = vpop.f32.mrb[0].mxu0
        %v2843 = vadd.f32 %v2674, %v2842
        %v2844 = vpop.f32.mrb[0].mxu0
        %v2845 = vadd.f32 %v2678, %v2844
        %v2846 = vpop.f32.mrb[0].mxu0
        %v2847 = vadd.f32 %v2674, %v2846
        %v2848 = vpop.f32.mrb[0].mxu0
        %v2849 = vadd.f32 %v2678, %v2848
        %2850 = vmatprep.mubr.bf16.mxu0 0
        %2851 = vmatmul.mubr.bf16.gmra.mrb[0].mxu0 %v2746
        %v2852 = vpop.f32.mrb[0].mxu0
        %v2853 = vadd.f32 %v2674, %v2852
        %v2854 = vpop.f32.mrb[0].mxu0
        %v2855 = vadd.f32 %v2678, %v2854
        %v2856 = vpop.f32.mrb[0].mxu0
        %v2857 = vadd.f32 %v2674, %v2856
        %v2858 = vpop.f32.mrb[0].mxu0
        %v2859 = vadd.f32 %v2678, %v2858
        %2860 = vmatprep.mubr.bf16.mxu0 0
        %2861 = vmatmul.mubr.bf16.gmra.mrb[0].mxu0 %v2749
        %v2862 = vpop.f32.mrb[0].mxu0
        %v2863 = vadd.f32 %v2674, %v2862
        %v2864 = vpop.f32.mrb[0].mxu0
        %v2865 = vadd.f32 %v2678, %v2864
        %v2866 = vpop.f32.mrb[0].mxu0
        %v2867 = vadd.f32 %v2674, %v2866
        %v2868 = vpop.f32.mrb[0].mxu0
        %v2869 = vadd.f32 %v2678, %v2868
        %2870 = vdwg.mxu0
        %vm2871 = vcmp.gt.f32.partialorder %v2793, 0.0
        %vm2872 = vcmp.gt.f32.partialorder %v2795, 0.0
        %vm2873 = vcmp.gt.f32.partialorder %v2797, 0.0
        %vm2874 = vcmp.gt.f32.partialorder %v2799, 0.0
        %vm2875 = vcmp.gt.f32.partialorder %v2803, 0.0
        %vm2876 = vcmp.gt.f32.partialorder %v2805, 0.0
        %vm2877 = vcmp.gt.f32.partialorder %v2807, 0.0
        %vm2878 = vcmp.gt.f32.partialorder %v2809, 0.0
        %vm2879 = vcmp.gt.f32.partialorder %v2813, 0.0
        %vm2880 = vcmp.gt.f32.partialorder %v2815, 0.0
        %vm2881 = vcmp.gt.f32.partialorder %v2817, 0.0
        %vm2882 = vcmp.gt.f32.partialorder %v2819, 0.0
        %vm2883 = vcmp.gt.f32.partialorder %v2823, 0.0
        %vm2884 = vcmp.gt.f32.partialorder %v2825, 0.0
        %vm2885 = vcmp.gt.f32.partialorder %v2827, 0.0
        %vm2886 = vcmp.gt.f32.partialorder %v2829, 0.0
        %vm2887 = vcmp.gt.f32.partialorder %v2833, 0.0
        %vm2888 = vcmp.gt.f32.partialorder %v2835, 0.0
        %vm2889 = vcmp.gt.f32.partialorder %v2837, 0.0
        %vm2890 = vcmp.gt.f32.partialorder %v2839, 0.0
        %vm2891 = vcmp.gt.f32.partialorder %v2843, 0.0
        %vm2892 = vcmp.gt.f32.partialorder %v2845, 0.0
        %vm2893 = vcmp.gt.f32.partialorder %v2847, 0.0
        %vm2894 = vcmp.gt.f32.partialorder %v2849, 0.0
        %vm2895 = vcmp.gt.f32.partialorder %v2853, 0.0
        %vm2896 = vcmp.gt.f32.partialorder %v2855, 0.0
        %vm2897 = vcmp.gt.f32.partialorder %v2857, 0.0
        %vm2898 = vcmp.gt.f32.partialorder %v2859, 0.0
        %vm2899 = vcmp.gt.f32.partialorder %v2863, 0.0
        %vm2900 = vcmp.gt.f32.partialorder %v2865, 0.0
        %vm2901 = vcmp.gt.f32.partialorder %v2867, 0.0
        %vm2902 = vcmp.gt.f32.partialorder %v2869, 0.0
        %v2903 = vmul.f32 %v2793, 0.01
        %v2904 = vmul.f32 %v2795, 0.01
        %v2905 = vmul.f32 %v2797, 0.01
        %v2906 = vmul.f32 %v2799, 0.01
        %v2907 = vmul.f32 %v2803, 0.01
        %v2908 = vmul.f32 %v2805, 0.01
        %v2909 = vmul.f32 %v2807, 0.01
        %v2910 = vmul.f32 %v2809, 0.01
        %v2911 = vmul.f32 %v2813, 0.01
        %v2912 = vmul.f32 %v2815, 0.01
        %v2913 = vmul.f32 %v2817, 0.01
        %v2914 = vmul.f32 %v2819, 0.01
        %v2915 = vmul.f32 %v2823, 0.01
        %v2916 = vmul.f32 %v2825, 0.01
        %v2917 = vmul.f32 %v2827, 0.01
        %v2918 = vmul.f32 %v2829, 0.01
        %v2919 = vmul.f32 %v2833, 0.01
        %v2920 = vmul.f32 %v2835, 0.01
        %v2921 = vmul.f32 %v2837, 0.01
        %v2922 = vmul.f32 %v2839, 0.01
        %v2923 = vmul.f32 %v2843, 0.01
        %v2924 = vmul.f32 %v2845, 0.01
        %v2925 = vmul.f32 %v2847, 0.01
        %v2926 = vmul.f32 %v2849, 0.01
        %v2927 = vmul.f32 %v2853, 0.01
        %v2928 = vmul.f32 %v2855, 0.01
        %v2929 = vmul.f32 %v2857, 0.01
        %v2930 = vmul.f32 %v2859, 0.01
        %v2931 = vmul.f32 %v2863, 0.01
        %v2932 = vmul.f32 %v2865, 0.01
        %v2933 = vmul.f32 %v2867, 0.01
        %v2934 = vmul.f32 %v2869, 0.01
        %v2935 = vsel %vm2871, %v2793, %v2903
        %v2936 = vsel %vm2872, %v2795, %v2904
        %v2937 = vsel %vm2873, %v2797, %v2905
        %v2938 = vsel %vm2874, %v2799, %v2906
        %v2939 = vsel %vm2875, %v2803, %v2907
        %v2940 = vsel %vm2876, %v2805, %v2908
        %v2941 = vsel %vm2877, %v2807, %v2909
        %v2942 = vsel %vm2878, %v2809, %v2910
        %v2943 = vsel %vm2879, %v2813, %v2911
        %v2944 = vsel %vm2880, %v2815, %v2912
        %v2945 = vsel %vm2881, %v2817, %v2913
        %v2946 = vsel %vm2882, %v2819, %v2914
        %v2947 = vsel %vm2883, %v2823, %v2915
        %v2948 = vsel %vm2884, %v2825, %v2916
        %v2949 = vsel %vm2885, %v2827, %v2917
        %v2950 = vsel %vm2886, %v2829, %v2918
        %v2951 = vsel %vm2887, %v2833, %v2919
        %v2952 = vsel %vm2888, %v2835, %v2920
        %v2953 = vsel %vm2889, %v2837, %v2921
        %v2954 = vsel %vm2890, %v2839, %v2922
        %v2955 = vsel %vm2891, %v2843, %v2923
        %v2956 = vsel %vm2892, %v2845, %v2924
        %v2957 = vsel %vm2893, %v2847, %v2925
        %v2958 = vsel %vm2894, %v2849, %v2926
        %v2959 = vsel %vm2895, %v2853, %v2927
        %v2960 = vsel %vm2896, %v2855, %v2928
        %v2961 = vsel %vm2897, %v2857, %v2929
        %v2962 = vsel %vm2898, %v2859, %v2930
        %v2963 = vsel %vm2899, %v2863, %v2931
        %v2964 = vsel %vm2900, %v2865, %v2932
        %v2965 = vsel %vm2901, %v2867, %v2933
        %v2966 = vsel %vm2902, %v2869, %v2934
        %v2967 = vpack.c.bf16 %v2937, %v2935
        %v2968 = vpack.c.bf16 %v2938, %v2936
        %v2969 = vpack.c.bf16 %v2941, %v2939
        %v2970 = vpack.c.bf16 %v2942, %v2940
        %v2971 = vpack.c.bf16 %v2945, %v2943
        %v2972 = vpack.c.bf16 %v2946, %v2944
        %v2973 = vpack.c.bf16 %v2949, %v2947
        %v2974 = vpack.c.bf16 %v2950, %v2948
        %v2975 = vpack.c.bf16 %v2953, %v2951
        %v2976 = vpack.c.bf16 %v2954, %v2952
        %v2977 = vpack.c.bf16 %v2957, %v2955
        %v2978 = vpack.c.bf16 %v2958, %v2956
        %v2979 = vpack.c.bf16 %v2961, %v2959
        %v2980 = vpack.c.bf16 %v2962, %v2960
        %v2981 = vpack.c.bf16 %v2965, %v2963
        %v2982 = vpack.c.bf16 %v2966, %v2964
        %v2983 = vld [vmem:[%s5] sm:$0xf]
        %v2984 = vld [vmem:[%s5 + $0x4] sm:$0xf]
        %v2985 = vld [vmem:[%s5 + $0x8] sm:$0xf]
        %v2986 = vld [vmem:[%s5 + $0xc] sm:$0xf]
        %v2987 = vld [vmem:[%s5 + $0x10] sm:$0xf]
        %v2988 = vld [vmem:[%s5 + $0x14] sm:$0xf]
        %v2989 = vld [vmem:[%s5 + $0x18] sm:$0xf]
        %v2990 = vld [vmem:[%s5 + $0x1c] sm:$0xf]
        %v2991 = vld [vmem:[%s5 + $0x20] sm:$0xf]
        %v2992 = vld [vmem:[%s5 + $0x24] sm:$0xf]
        %v2993 = vld [vmem:[%s5 + $0x28] sm:$0xf]
        %v2994 = vld [vmem:[%s5 + $0x2c] sm:$0xf]
        %v2995 = vld [vmem:[%s5 + $0x30] sm:$0xf]
        %v2996 = vld [vmem:[%s5 + $0x34] sm:$0xf]
        %v2997 = vld [vmem:[%s5 + $0x38] sm:$0xf]
        %v2998 = vld [vmem:[%s5 + $0x3c] sm:$0xf]
        %v2999 = vld [vmem:[%s5 + $0x40] sm:$0xf]
        %v3000 = vld [vmem:[%s5 + $0x44] sm:$0xf]
        %v3001 = vld [vmem:[%s5 + $0x48] sm:$0xf]
        %v3002 = vld [vmem:[%s5 + $0x4c] sm:$0xf]
        %v3003 = vld [vmem:[%s5 + $0x50] sm:$0xf]
        %v3004 = vld [vmem:[%s5 + $0x54] sm:$0xf]
        %v3005 = vld [vmem:[%s5 + $0x58] sm:$0xf]
        %v3006 = vld [vmem:[%s5 + $0x5c] sm:$0xf]
        %v3007 = vld [vmem:[%s5 + $0x60] sm:$0xf]
        %v3008 = vld [vmem:[%s5 + $0x64] sm:$0xf]
        %v3009 = vld [vmem:[%s5 + $0x68] sm:$0xf]
        %v3010 = vld [vmem:[%s5 + $0x6c] sm:$0xf]
        %v3011 = vld [vmem:[%s5 + $0x70] sm:$0xf]
        %v3012 = vld [vmem:[%s5 + $0x74] sm:$0xf]
        %v3013 = vld [vmem:[%s5 + $0x78] sm:$0xf]
        %v3014 = vld [vmem:[%s5 + $0x7c] sm:$0xf]
        %v3015 = vld [vmem:[%s6] sm:$0x1]
        %v3017 = vlaneseq
        %v3018 = vshrl.u32 %v3017, 7
        %v3019 = vsub.s32 0, %v3018
        %v3020 = vrot.slane %v3015, %v3019
        %v3054 = vunpack.c.l.b16 %v2983
        %v3055 = vunpack.c.l.b16 %v2984
        %v3056 = vunpack.c.l.b16 %v2985
        %v3057 = vunpack.c.l.b16 %v2986
        %v3058 = vunpack.c.l.b16 %v2987
        %v3059 = vunpack.c.l.b16 %v2988
        %v3060 = vunpack.c.l.b16 %v2989
        %v3061 = vunpack.c.l.b16 %v2990
        %v3062 = vunpack.c.l.b16 %v2991
        %v3063 = vunpack.c.l.b16 %v2992
        %v3064 = vunpack.c.l.b16 %v2993
        %v3065 = vunpack.c.l.b16 %v2994
        %v3066 = vunpack.c.l.b16 %v2995
        %v3067 = vunpack.c.l.b16 %v2996
        %v3068 = vunpack.c.l.b16 %v2997
        %v3069 = vunpack.c.l.b16 %v2998
        %v3070 = vunpack.c.l.b16 %v2999
        %v3071 = vunpack.c.l.b16 %v3000
        %v3072 = vunpack.c.l.b16 %v3001
        %v3073 = vunpack.c.l.b16 %v3002
        %v3074 = vunpack.c.l.b16 %v3003
        %v3075 = vunpack.c.l.b16 %v3004
        %v3076 = vunpack.c.l.b16 %v3005
        %v3077 = vunpack.c.l.b16 %v3006
        %v3078 = vunpack.c.l.b16 %v3007
        %v3079 = vunpack.c.l.b16 %v3008
        %v3080 = vunpack.c.l.b16 %v3009
        %v3081 = vunpack.c.l.b16 %v3010
        %v3082 = vunpack.c.l.b16 %v3011
        %v3083 = vunpack.c.l.b16 %v3012
        %v3084 = vunpack.c.l.b16 %v3013
        %v3085 = vunpack.c.l.b16 %v3014
        %v3086 = vpack.c.b16 %v3055, %v3054
        %v3087 = vpack.c.b16 %v3057, %v3056
        %v3088 = vpack.c.b16 %v3059, %v3058
        %v3089 = vpack.c.b16 %v3061, %v3060
        %v3090 = vpack.c.b16 %v3063, %v3062
        %v3091 = vpack.c.b16 %v3065, %v3064
        %v3092 = vpack.c.b16 %v3067, %v3066
        %v3093 = vpack.c.b16 %v3069, %v3068
        %v3094 = vpack.c.b16 %v3071, %v3070
        %v3095 = vpack.c.b16 %v3073, %v3072
        %v3096 = vpack.c.b16 %v3075, %v3074
        %v3097 = vpack.c.b16 %v3077, %v3076
        %v3098 = vpack.c.b16 %v3079, %v3078
        %v3099 = vpack.c.b16 %v3081, %v3080
        %v3100 = vpack.c.b16 %v3083, %v3082
        %v3101 = vpack.c.b16 %v3085, %v3084
        %3118 = vmatprep.subr.bf16.mxu0 0
        %3119 = vmatpush1.bf16.msra.mxu0 %v3086
        %3120 = vmatprep.subr.bf16.mxu0 0
        %3121 = vmatpush1.bf16.msra.mxu0 %v3087
        %3122 = vmatprep.subr.bf16.mxu0 0
        %3123 = vmatpush1.bf16.msra.mxu0 %v3088
        %3124 = vmatprep.subr.bf16.mxu0 0
        %3125 = vmatpush1.bf16.msra.mxu0 %v3089
        %3126 = vmatprep.subr.bf16.mxu0 0
        %3127 = vmatpush1.bf16.msra.mxu0 %v3090
        %3128 = vmatprep.subr.bf16.mxu0 0
        %3129 = vmatpush1.bf16.msra.mxu0 %v3091
        %3130 = vmatprep.subr.bf16.mxu0 0
        %3131 = vmatpush1.bf16.msra.mxu0 %v3092
        %3132 = vmatprep.subr.bf16.mxu0 0
        %3133 = vmatpush1.bf16.msra.mxu0 %v3093
        %3134 = vmatprep.subr.bf16.mxu0 0
        %3135 = vmatpush1.bf16.msra.mxu0 %v3094
        %3136 = vmatprep.subr.bf16.mxu0 0
        %3137 = vmatpush1.bf16.msra.mxu0 %v3095
        %3138 = vmatprep.subr.bf16.mxu0 0
        %3139 = vmatpush1.bf16.msra.mxu0 %v3096
        %3140 = vmatprep.subr.bf16.mxu0 0
        %3141 = vmatpush1.bf16.msra.mxu0 %v3097
        %3142 = vmatprep.subr.bf16.mxu0 0
        %3143 = vmatpush1.bf16.msra.mxu0 %v3098
        %3144 = vmatprep.subr.bf16.mxu0 0
        %3145 = vmatpush1.bf16.msra.mxu0 %v3099
        %3146 = vmatprep.subr.bf16.mxu0 0
        %3147 = vmatpush1.bf16.msra.mxu0 %v3100
        %3148 = vmatprep.subr.bf16.mxu0 0
        %3149 = vmatpush1.bf16.msra.mxu0 %v3101
        %3150 = vmatprep.mubr.bf16.mxu0 %v2968
        %3151 = vmatmul.mubr.bf16.gmra.mrb[0].mxu0 %v2967
        %v3152 = vpop.f32.mrb[0].mxu0
        %v3153 = vadd.f32 %v3020, %v3152
        %v3154 = vpop.f32.mrb[0].mxu0
        %v3155 = vpop.f32.mrb[0].mxu0
        %v3156 = vadd.f32 %v3020, %v3155
        %v3157 = vpop.f32.mrb[0].mxu0
        %3158 = vmatprep.mubr.bf16.mxu0 %v2970
        %3159 = vmatmul.mubr.bf16.gmra.mrb[0].mxu0 %v2969
        %v3160 = vpop.f32.mrb[0].mxu0
        %v3161 = vadd.f32 %v3020, %v3160
        %v3162 = vpop.f32.mrb[0].mxu0
        %v3163 = vpop.f32.mrb[0].mxu0
        %v3164 = vadd.f32 %v3020, %v3163
        %v3165 = vpop.f32.mrb[0].mxu0
        %3166 = vmatprep.mubr.bf16.mxu0 %v2972
        %3167 = vmatmul.mubr.bf16.gmra.mrb[0].mxu0 %v2971
        %v3168 = vpop.f32.mrb[0].mxu0
        %v3169 = vadd.f32 %v3020, %v3168
        %v3170 = vpop.f32.mrb[0].mxu0
        %v3171 = vpop.f32.mrb[0].mxu0
        %v3172 = vadd.f32 %v3020, %v3171
        %v3173 = vpop.f32.mrb[0].mxu0
        %3174 = vmatprep.mubr.bf16.mxu0 %v2974
        %3175 = vmatmul.mubr.bf16.gmra.mrb[0].mxu0 %v2973
        %v3176 = vpop.f32.mrb[0].mxu0
        %v3177 = vadd.f32 %v3020, %v3176
        %v3178 = vpop.f32.mrb[0].mxu0
        %v3179 = vpop.f32.mrb[0].mxu0
        %v3180 = vadd.f32 %v3020, %v3179
        %v3181 = vpop.f32.mrb[0].mxu0
        %3182 = vmatprep.mubr.bf16.mxu0 %v2976
        %3183 = vmatmul.mubr.bf16.gmra.mrb[0].mxu0 %v2975
        %v3184 = vpop.f32.mrb[0].mxu0
        %v3185 = vadd.f32 %v3020, %v3184
        %v3186 = vpop.f32.mrb[0].mxu0
        %v3187 = vpop.f32.mrb[0].mxu0
        %v3188 = vadd.f32 %v3020, %v3187
        %v3189 = vpop.f32.mrb[0].mxu0
        %3190 = vmatprep.mubr.bf16.mxu0 %v2978
        %3191 = vmatmul.mubr.bf16.gmra.mrb[0].mxu0 %v2977
        %v3192 = vpop.f32.mrb[0].mxu0
        %v3193 = vadd.f32 %v3020, %v3192
        %v3194 = vpop.f32.mrb[0].mxu0
        %v3195 = vpop.f32.mrb[0].mxu0
        %v3196 = vadd.f32 %v3020, %v3195
        %v3197 = vpop.f32.mrb[0].mxu0
        %3198 = vmatprep.mubr.bf16.mxu0 %v2980
        %3199 = vmatmul.mubr.bf16.gmra.mrb[0].mxu0 %v2979
        %v3200 = vpop.f32.mrb[0].mxu0
        %v3201 = vadd.f32 %v3020, %v3200
        %v3202 = vpop.f32.mrb[0].mxu0
        %v3203 = vpop.f32.mrb[0].mxu0
        %v3204 = vadd.f32 %v3020, %v3203
        %v3205 = vpop.f32.mrb[0].mxu0
        %3206 = vmatprep.mubr.bf16.mxu0 %v2982
        %3207 = vmatmul.mubr.bf16.gmra.mrb[0].mxu0 %v2981
        %v3208 = vpop.f32.mrb[0].mxu0
        %v3209 = vadd.f32 %v3020, %v3208
        %v3210 = vpop.f32.mrb[0].mxu0
        %v3211 = vpop.f32.mrb[0].mxu0
        %v3212 = vadd.f32 %v3020, %v3211
        %v3213 = vpop.f32.mrb[0].mxu0
        %3214 = vdwg.mxu0
        %3215 = vst [vmem:[%s285] sm:$0xff] %v3153
        %3216 = vst [vmem:[%s285 + $0x8] sm:$0xff] %v3156
        %3217 = vst [vmem:[%s285 + $0x10] sm:$0xff] %v3161
        %3218 = vst [vmem:[%s285 + $0x18] sm:$0xff] %v3164
        %3219 = vst [vmem:[%s285 + $0x20] sm:$0xff] %v3169
        %3220 = vst [vmem:[%s285 + $0x28] sm:$0xff] %v3172
        %3221 = vst [vmem:[%s285 + $0x30] sm:$0xff] %v3177
        %3222 = vst [vmem:[%s285 + $0x38] sm:$0xff] %v3180
        %3223 = vst [vmem:[%s285 + $0x40] sm:$0xff] %v3185
        %3224 = vst [vmem:[%s285 + $0x48] sm:$0xff] %v3188
        %3225 = vst [vmem:[%s285 + $0x50] sm:$0xff] %v3193
        %3226 = vst [vmem:[%s285 + $0x58] sm:$0xff] %v3196
        %3227 = vst [vmem:[%s285 + $0x60] sm:$0xff] %v3201
        %3228 = vst [vmem:[%s285 + $0x68] sm:$0xff] %v3204
        %3229 = vst [vmem:[%s285 + $0x70] sm:$0xff] %v3209
        %3230 = vst [vmem:[%s285 + $0x78] sm:$0xff] %v3212
        %s3231 = sand.u32 %s195, 1
        %s3232 = scalar_lea.sflag [#allocation5], %s3231
        %s3233 = sand.u32 %s195, 1
        %s3234 = smul.addr %s3233, 128
        %s3235 = scalar_lea.vmem [#allocation4], %s3234
        // Predicated region
        $region49: #{tpu_custom_call.1} parent=47 // pred_check
          %p3236 = pneg %p205
        $region50: #{tpu_custom_call.1} parent=47 // pred_check_branch
          %3238 = sbr.rel (%p3236) target = $region52
        $region51: #{tpu_custom_call.1} parent=47 // pred_region
          %s3239 = smul.u32 8, %s26
          %s3241 = ssub.s32 2048, 2048
          %3242 = vsyncadd %s3232, %s3241
          %s3243 = smul.addr %s3239, 2
          %s3244 = smul.addr %s25, 32
          %s3245 = sadd.s32 %s3243, %s3244
          %s3246 = smul.addr %s3245, 128
          %s3247 = scalar_lea.hbm %s7, %s3246
          %s3248 = sshll.u32 %s3235, 4
          %s3249 = int_to_ptr.vmem [resolvable:$true] %s3248
          %3254 = dma.vmem_to_hbm [thread:$0]  %s3249, 2048, %s3247, %s3232, 128, 128, 8
        $region52: #{tpu_custom_call.1} parent=47 // pred_fallthru
          _
      $region48: #{tpu_custom_call.1} parent=5 // pred_fallthru
        _
      %p3255 = scmp.le.s32.totalorder 2, %s16
      // Predicated region
      $region53: #{tpu_custom_call.1} parent=5 // pred_check
        %p3256 = pneg %p3255
      $region54: #{tpu_custom_call.1} parent=5 // pred_check_branch
        %3258 = sbr.rel (%p3256) target = $region56
      $region55: #{tpu_custom_call.1} parent=5 // pred_region
        %s3259 = ssub.s32 %s16, 2
        // Predicated region
        $region57: #{tpu_custom_call.1} parent=55 // pred_check
          %p3260 = pneg %p211
        $region58: #{tpu_custom_call.1} parent=55 // pred_check_branch
          %3262 = sbr.rel (%p3260) target = $region60
        $region59: #{tpu_custom_call.1} parent=55 // pred_region
          %s3263 = sand.u32 %s196, 1
          %s3264 = scalar_lea.sflag [#allocation5], %s3263
          %s3265 = sand.u32 %s196, 1
          %s3266 = smul.addr %s3265, 128
          %s3267 = scalar_lea.vmem [#allocation4], %s3266
          %3268 = dma.done %s3264, 2048
        $region60: #{tpu_custom_call.1} parent=55 // pred_fallthru
          _
      $region56: #{tpu_custom_call.1} parent=5 // pred_fallthru
        _
    $region6: #{tpu_custom_call.1} parent=1 // loop_footer
      %s20 = sadd.s32 1, %s16
    $region7: #{tpu_custom_call.1} parent=1 // loop_footer_branch
      %15 = sbr.rel target = $region3
    $region8: #{tpu_custom_call.1} parent=1 // loop_exit
      _
    %3269 = vsyncpa [#allocation5], 1
    %s3270 = scalar_lea.sflag [#allocation5], 1
    %3271 = vsyncpa %s3270, 1

</llo_original>
